<compile_context>
chip_gen: v5e
topology: v5e:2x2
jax: 0.10.0
libtpu: 0.0.40
codegen_flags: <defaults>
</compile_context>

<pallas_src>
import math
from functools import partial

import jax
import jax.numpy as jnp
from jax import lax
from jax.experimental import pallas as pl
from jax.experimental.pallas import tpu as pltpu


def _round_up(x, m):
    return (x + m - 1) // m * m


def _gelu_tanh(x):
    c = math.sqrt(2.0 / math.pi)
    return 0.5 * x * (1.0 + jnp.tanh(c * (x + 0.044715 * x * x * x)))


# -----------------------------------------------------------------------------
# Tiled matmul kernel:  o = [residual +] act( LN?(x) @ w + b )
# grid = (M tiles, N tiles, K tiles); f32 VMEM accumulator; bf16 MXU operands.
# -----------------------------------------------------------------------------
def _matmul_kernel(x_ref, w_ref, b_ref, *rest, ln_in, ln_eps, activation,
                   has_residual):
    if has_residual:
        res_ref, o_ref, acc_ref = rest
    else:
        res_ref = None
        o_ref, acc_ref = rest

    @pl.when(pl.program_id(2) == 0)
    def _():
        acc_ref[...] = jnp.zeros_like(acc_ref)

    x = x_ref[...]
    if ln_in:
        # LayerNorm (no affine) fused over the full K row (single K tile).
        # Single-pass stats: var = E[x^2] - E[x]^2 (one reduction pair).
        xf = x.astype(jnp.float32)
        mean = jnp.mean(xf, axis=-1, keepdims=True)
        meansq = jnp.mean(xf * xf, axis=-1, keepdims=True)
        var = jnp.maximum(meansq - mean * mean, 0.0)
        x = (xf - mean) * lax.rsqrt(var + ln_eps)
    xb = x.astype(jnp.bfloat16)                       # bf16 into the MXU
    acc_ref[...] += jnp.dot(xb, w_ref[...], preferred_element_type=jnp.float32)

    @pl.when(pl.program_id(2) == pl.num_programs(2) - 1)
    def _():
        y = acc_ref[...] + b_ref[...].astype(jnp.float32)
        if activation == "gelu_tanh":
            y = _gelu_tanh(y)
        if has_residual:
            y = y + res_ref[...].astype(jnp.float32)
        o_ref[...] = y.astype(o_ref.dtype)


def matmul_bias(x, w, b, *, activation=None, ln_in=False, residual=None,
                ln_eps=1e-6, out_dtype=jnp.bfloat16):
    """y = [residual +] act( LN?(x) @ w + b ).  x:[M,K]  w:[K,N]  b:[N]."""
    M, K = x.shape
    K2, N = w.shape
    assert K == K2 and b.shape[-1] == N

    # Tile sizes: lane-dense N (multiple of 128), big K tiles.  No forced
    # M split: N tiles already provide megacore parallelism when present.
    tm = min(256, _round_up(M, 8))
    tn = min(512, _round_up(N, 128))
    if ln_in:
        tk = K                               # LN fusion needs a single K tile
    else:
        tk = min(1024, _round_up(K, 128))

    Mp, Np, Kp = _round_up(M, tm), _round_up(N, tn), _round_up(K, tk)
    if ln_in:
        assert Kp == K and Kp == tk, "LN fusion needs a single unpadded K tile"

    # Pad / cast only when actually needed (weights are pre-cast bf16 at init,
    # so for aligned shapes this whole block is a no-op in the jit graph).
    x_in = x if x.dtype == jnp.bfloat16 else x.astype(jnp.bfloat16)
    if Mp != M or Kp != K:
        x_in = jnp.pad(x_in, ((0, Mp - M), (0, Kp - K)))
    w_in = w if w.dtype == jnp.bfloat16 else w.astype(jnp.bfloat16)
    if Kp != K or Np != N:
        w_in = jnp.pad(w_in, ((0, Kp - K), (0, Np - N)))
    b_in = b.reshape(1, N).astype(jnp.float32)
    if Np != N:
        b_in = jnp.pad(b_in, ((0, 0), (0, Np - N)))

    inputs = [x_in, w_in, b_in]
    in_specs = [
        pl.BlockSpec((tm, tk), lambda i, j, k: (i, k)),
        # TODO(synk): pipeline_mode=pl.Buffered(3) on the weight spec could
        # further hide weight-DMA latency at tiny M; left at the default here.
        pl.BlockSpec((tk, tn), lambda i, j, k: (k, j)),
        pl.BlockSpec((1, tn), lambda i, j, k: (0, j)),
    ]
    has_residual = residual is not None
    if has_residual:
        r_in = residual if residual.dtype == jnp.bfloat16 else residual.astype(jnp.bfloat16)
        if Mp != M or Np != N:
            r_in = jnp.pad(r_in, ((0, Mp - M), (0, Np - N)))
        inputs.append(r_in)
        in_specs.append(pl.BlockSpec((tm, tn), lambda i, j, k: (i, j)))

    out = pl.pallas_call(
        partial(_matmul_kernel, ln_in=ln_in, ln_eps=ln_eps,
                activation=activation, has_residual=has_residual),
        out_shape=jax.ShapeDtypeStruct((Mp, Np), out_dtype),
        grid=(Mp // tm, Np // tn, Kp // tk),
        in_specs=in_specs,
        out_specs=pl.BlockSpec((tm, tn), lambda i, j, k: (i, j)),
        scratch_shapes=[pltpu.VMEM((tm, tn), jnp.float32)],
        compiler_params=pltpu.CompilerParams(
            dimension_semantics=("parallel", "parallel", "arbitrary"),
            vmem_limit_bytes=48 * 1024 * 1024,
        ),
    )(*inputs)
    if Mp != M or Np != N:
        out = out[:M, :N]
    return out


# -----------------------------------------------------------------------------
# Standalone LayerNorm (fallback when LN cannot be fused into the matmul)
# -----------------------------------------------------------------------------
def _layer_norm_kernel(x_ref, o_ref, *, eps):
    x = x_ref[...].astype(jnp.float32)
    mean = jnp.mean(x, axis=-1, keepdims=True)
    meansq = jnp.mean(x * x, axis=-1, keepdims=True)
    var = jnp.maximum(meansq - mean * mean, 0.0)
    o_ref[...] = ((x - mean) * lax.rsqrt(var + eps)).astype(o_ref.dtype)


def layer_norm(x, *, eps=1e-6):
    M, D = x.shape
    tm = min(256, _round_up(M, 8))
    Mp = _round_up(M, tm)
    xp = jnp.pad(x, ((0, Mp - M), (0, 0))) if Mp != M else x
    out = pl.pallas_call(
        partial(_layer_norm_kernel, eps=eps),
        out_shape=jax.ShapeDtypeStruct((Mp, D), jnp.bfloat16),
        grid=(Mp // tm,),
        in_specs=[pl.BlockSpec((tm, D), lambda i: (i, 0))],
        out_specs=pl.BlockSpec((tm, D), lambda i: (i, 0)),
        compiler_params=pltpu.CompilerParams(
            dimension_semantics=("parallel",)),
    )(xp)
    return out[:M] if Mp != M else out


def ln_matmul_bias(x, w, b, **kw):
    K = x.shape[1]
    if K % 128 == 0 and K <= 2048:
        return matmul_bias(x, w, b, ln_in=True, **kw)
    # TODO(synk): LN fusion only when D fits one 128-aligned K tile (<=2048).
    return matmul_bias(layer_norm(x), w, b, **kw)


# -----------------------------------------------------------------------------
# Attention kernel: one grid step per batch element, ALL heads per step.
# Input is the flat [B*T, 3D] qkv matmul output (no HBM transposes); output
# is written lane-dense into a [B*T, D] buffer.
# -----------------------------------------------------------------------------
def _attn_kernel(qkv_ref, o_ref, *, num_heads, head_dim, scale):
    qkv = qkv_ref[...]                                 # [T, 3D] bf16
    D = num_heads * head_dim
    outs = []
    for h in range(num_heads):
        sl = slice(h * head_dim, (h + 1) * head_dim)
        # Fold the softmax scale into q before the MXU (saves a [T,T] VPU mul).
        q = (qkv[:, sl].astype(jnp.float32) * scale).astype(jnp.bfloat16)
        k = qkv[:, D + h * head_dim:D + (h + 1) * head_dim]
        v = qkv[:, 2 * D + h * head_dim:2 * D + (h + 1) * head_dim]
        s = lax.dot_general(q, k, (((1,), (1,)), ((), ())),
                            preferred_element_type=jnp.float32)
        s = s - jnp.max(s, axis=-1, keepdims=True)
        p = jnp.exp(s)
        p = p * pl.reciprocal(jnp.sum(p, axis=-1, keepdims=True), approx=True)
        outs.append(jnp.dot(p.astype(v.dtype), v,
                            preferred_element_type=jnp.float32))
    o_ref[...] = jnp.concatenate(outs, axis=-1).astype(o_ref.dtype)


def attention(qkv2d, *, batch, seq, dim, num_heads):
    """qkv2d: [B*T, 3D] bf16 -> [B*T, D] bf16 (per-head softmax attention)."""
    hd = dim // num_heads
    assert seq % 8 == 0 or batch == 1, "sequence length must be a multiple of 8"
    return pl.pallas_call(
        partial(_attn_kernel, num_heads=num_heads, head_dim=hd,
                scale=float(hd) ** -0.5),
        out_shape=jax.ShapeDtypeStruct((batch * seq, dim), jnp.bfloat16),
        grid=(batch,),
        in_specs=[pl.BlockSpec((seq, 3 * dim), lambda b: (b, 0))],
        out_specs=pl.BlockSpec((seq, dim), lambda b: (b, 0)),
        compiler_params=pltpu.CompilerParams(
            dimension_semantics=("parallel",)),
    )(qkv2d)


# -----------------------------------------------------------------------------
# Transformer blocks / decoder forward
# -----------------------------------------------------------------------------
def transformer_block(p, x2d, B, T, D, num_heads):
    # --- attention branch: x = x + proj(attn(LN(x))) ---
    qkv = ln_matmul_bias(x2d, p["qkv_w"], p["qkv_b"])           # [B*T, 3D] bf16
    o = attention(qkv, batch=B, seq=T, dim=D, num_heads=num_heads)
    x2d = matmul_bias(o, p["proj_w"], p["proj_b"], residual=x2d)
    # --- MLP branch: x = x + fc2(gelu(fc1(LN(x)))) ---
    h = ln_matmul_bias(x2d, p["fc1_w"], p["fc1_b"], activation="gelu_tanh")
    x2d = matmul_bias(h, p["fc2_w"], p["fc2_b"], residual=x2d)
    return x2d


def decoder_forward(params, x, *, patch_size, grid_size, out_dim, num_heads):
    B, T, D = x.shape
    assert T == grid_size * grid_size
    # bf16 residual stream (accumulation / LN stats / residual add stay f32
    # inside the kernels).
    x2d = x.reshape(B * T, D).astype(jnp.bfloat16)
    for blk in params["blocks"]:
        x2d = transformer_block(blk, x2d, B, T, D, num_heads)
    y = matmul_bias(x2d, params["out_w"], params["out_b"],
                    out_dtype=jnp.float32)                      # [B*T, c*p*p]

    # unpatchfy: (N, T, p*p*c) -> (N, c, g*p, g*p)   (einsum 'npqchw->nchpwq')
    c, p, g = out_dim, patch_size, grid_size
    y = y.reshape(B, g, g, c, p, p)
    y = jnp.transpose(y, (0, 3, 4, 1, 5, 2))
    return y.reshape(B, c, g * p, g * p)


# -----------------------------------------------------------------------------
# Deterministic parameter init (weights stored as bf16 [in, out], cast ONCE
# here so no per-forward recast/repad of weights is needed).
# -----------------------------------------------------------------------------
class KeyGen:
    def __init__(self, key):
        self.key = key
        self.i = 0

    def __call__(self):
        self.i += 1
        return jax.random.fold_in(self.key, self.i)


def _w(kg, cin, cout, scale=0.02):
    return (scale * jax.random.normal(kg(), (cin, cout), jnp.float32)
            ).astype(jnp.bfloat16)


def _b(kg, cout, scale=0.01):
    return scale * jax.random.normal(kg(), (cout,), jnp.float32)


def init_params(key, *, num_layers, dim, mlp_ratio=4.0, patch_size, out_dim):
    kg = KeyGen(key)
    hidden = int(dim * mlp_ratio)
    blocks = []
    for _ in range(num_layers):
        blocks.append({
            "qkv_w": _w(kg, dim, 3 * dim), "qkv_b": _b(kg, 3 * dim),
            "proj_w": _w(kg, dim, dim), "proj_b": _b(kg, dim),
            "fc1_w": _w(kg, dim, hidden), "fc1_b": _b(kg, hidden),
            "fc2_w": _w(kg, hidden, dim), "fc2_b": _b(kg, dim),
            # adaLN_modulation params exist in the PyTorch module but are
            # never used in forward(); intentionally omitted.
        })
    return {
        "blocks": blocks,
        "out_w": _w(kg, dim, out_dim * patch_size * patch_size),
        "out_b": _b(kg, out_dim * patch_size * patch_size),
    }


# -----------------------------------------------------------------------------
if __name__ == "__main__":
    # Small config consistent with TransformerDecoder(patch_size, grid_size,
    # num_layers, dim, num_heads, out_dim):
    patch_size, grid_size = 4, 4
    num_layers, dim, num_heads, out_dim = 2, 128, 4, 3
    B = 2
    T = grid_size * grid_size                   # 16 tokens

    key = jax.random.PRNGKey(0)
    kp, kx = jax.random.split(key)
    params = init_params(kp, num_layers=num_layers, dim=dim,
                         patch_size=patch_size, out_dim=out_dim)
    x = jax.random.normal(kx, (B, T, dim), jnp.float32)

    fwd = jax.jit(partial(decoder_forward, patch_size=patch_size,
                          grid_size=grid_size, out_dim=out_dim,
                          num_heads=num_heads))
    out = fwd(params, x)
    jax.block_until_ready(out)

    assert out.shape == (B, out_dim, grid_size * patch_size,
                         grid_size * patch_size), out.shape
    assert bool(jnp.all(jnp.isfinite(out)))
    print("KERNEL_OK")
</pallas_src>

<mosaic_0001>
module attributes {stable_mosaic.version = 11 : i64} {
  func.func @_matmul_kernel(%arg0: i32, %arg1: i32, %arg2: i32, %arg3: memref<32x128xbf16, #tpu.memory_space<vmem>>, %arg4: memref<128x384xbf16, #tpu.memory_space<vmem>>, %arg5: memref<1x384xf32, #tpu.memory_space<vmem>>, %arg6: memref<32x384xbf16, #tpu.memory_space<vmem>>, %arg7: memref<32x384xf32, #tpu.memory_space<vmem>>) attributes {dimension_semantics = [#tpu.dimension_semantics<parallel>, #tpu.dimension_semantics<parallel>, #tpu.dimension_semantics<arbitrary>], iteration_bounds = array<i64: 1, 1, 1>, scalar_prefetch = 0 : i64, scratch_operands = 1 : i64, tpu.core_type = #tpu.core_type<tc>, window_params = [{transform_indices = @transform_0, window_bounds = array<i64: 32, 128>}, {transform_indices = @transform_1, window_bounds = array<i64: 128, 384>}, {transform_indices = @transform_2, window_bounds = array<i64: 1, 384>}, {transform_indices = @transform_3, window_bounds = array<i64: 32, 384>}]} {
    %c0_i32 = arith.constant 0 : i32
    %0 = arith.cmpi eq, %arg2, %c0_i32 : i32
    %1 = arith.extui %0 : i1 to i32
    %c0_i32_0 = arith.constant 0 : i32
    %2 = arith.cmpi ne, %1, %c0_i32_0 : i32
    scf.if %2 {
      %cst_16 = arith.constant 0.000000e+00 : f32
      %34 = vector.broadcast %cst_16 : f32 to vector<32x384xf32>
      %c0_17 = arith.constant 0 : index
      %c0_18 = arith.constant 0 : index
      %35 = vector.load %arg7[%c0_17, %c0_18] : memref<32x384xf32, #tpu.memory_space<vmem>>, vector<32x384xf32>
      tpu.vector_store %arg7[%c0_17, %c0_18], %34 {strides = array<i32>} : memref<32x384xf32, #tpu.memory_space<vmem>>, vector<32x384xf32>,
    } else {
    }
    %c0 = arith.constant 0 : index
    %c0_1 = arith.constant 0 : index
    %3 = vector.load %arg3[%c0, %c0_1] : memref<32x128xbf16, #tpu.memory_space<vmem>>, vector<32x128xbf16>
    %4 = arith.extf %3 : vector<32x128xbf16> to vector<32x128xf32>
    %cst = arith.constant dense<0.000000e+00> : vector<32xf32>
    %5 = vector.multi_reduction <add>, %4, %cst [1] : vector<32x128xf32> to vector<32xf32>
    %6 = vector.shape_cast %5 : vector<32xf32> to vector<32x1xf32>
    %cst_2 = arith.constant 1.280000e+02 : f32
    %7 = vector.broadcast %cst_2 : f32 to vector<32x1xf32>
    %8 = arith.divf %6, %7 : vector<32x1xf32>
    %9 = arith.mulf %4, %4 : vector<32x128xf32>
    %cst_3 = arith.constant dense<0.000000e+00> : vector<32xf32>
    %10 = vector.multi_reduction <add>, %9, %cst_3 [1] : vector<32x128xf32> to vector<32xf32>
    %11 = vector.shape_cast %10 : vector<32xf32> to vector<32x1xf32>
    %cst_4 = arith.constant 1.280000e+02 : f32
    %12 = vector.broadcast %cst_4 : f32 to vector<32x1xf32>
    %13 = arith.divf %11, %12 : vector<32x1xf32>
    %14 = arith.mulf %8, %8 : vector<32x1xf32>
    %15 = arith.subf %13, %14 : vector<32x1xf32>
    %cst_5 = arith.constant 0.000000e+00 : f32
    %16 = vector.broadcast %cst_5 : f32 to vector<32x1xf32>
    %17 = arith.maximumf %15, %16 : vector<32x1xf32>
    %18 = vector.broadcast %8 : vector<32x1xf32> to vector<32x128xf32>
    %19 = arith.subf %4, %18 : vector<32x128xf32>
    %cst_6 = arith.constant 9.99999997E-7 : f32
    %20 = vector.broadcast %cst_6 : f32 to vector<32x1xf32>
    %21 = arith.addf %17, %20 : vector<32x1xf32>
    %22 = math.rsqrt %21 : vector<32x1xf32>
    %23 = vector.broadcast %22 : vector<32x1xf32> to vector<32x128xf32>
    %24 = arith.mulf %19, %23 : vector<32x128xf32>
    %25 = arith.truncf %24 : vector<32x128xf32> to vector<32x128xbf16>
    %c0_7 = arith.constant 0 : index
    %c0_8 = arith.constant 0 : index
    %26 = vector.load %arg7[%c0_7, %c0_8] : memref<32x384xf32, #tpu.memory_space<vmem>>, vector<32x384xf32>
    %c0_9 = arith.constant 0 : index
    %c0_10 = arith.constant 0 : index
    %27 = vector.load %arg4[%c0_9, %c0_10] : memref<128x384xbf16, #tpu.memory_space<vmem>>, vector<128x384xbf16>
    %cst_11 = arith.constant dense<0.000000e+00> : vector<32x384xf32>
    %28 = tpu.matmul %25, %27, %cst_11 {dimension_numbers = #tpu.dot_dimension_numbers<[1], [0], [0], [1], [0, 0, 1, 1], [], []>} : vector<32x128xbf16>, vector<128x384xbf16>, vector<32x384xf32> -> vector<32x384xf32>
    %29 = arith.addf %26, %28 : vector<32x384xf32>
    %c0_12 = arith.constant 0 : index
    %c0_13 = arith.constant 0 : index
    %30 = vector.load %arg7[%c0_12, %c0_13] : memref<32x384xf32, #tpu.memory_space<vmem>>, vector<32x384xf32>
    tpu.vector_store %arg7[%c0_12, %c0_13], %29 {strides = array<i32>} : memref<32x384xf32, #tpu.memory_space<vmem>>, vector<32x384xf32>,
    %c0_i32_14 = arith.constant 0 : i32
    %31 = arith.cmpi eq, %arg2, %c0_i32_14 : i32
    %32 = arith.extui %31 : i1 to i32
    %c0_i32_15 = arith.constant 0 : i32
    %33 = arith.cmpi ne, %32, %c0_i32_15 : i32
    scf.if %33 {
      %c0_16 = arith.constant 0 : index
      %c0_17 = arith.constant 0 : index
      %34 = vector.load %arg7[%c0_16, %c0_17] : memref<32x384xf32, #tpu.memory_space<vmem>>, vector<32x384xf32>
      %c0_18 = arith.constant 0 : index
      %c0_19 = arith.constant 0 : index
      %35 = vector.load %arg5[%c0_18, %c0_19] : memref<1x384xf32, #tpu.memory_space<vmem>>, vector<1x384xf32>
      %36 = vector.broadcast %35 : vector<1x384xf32> to vector<32x384xf32>
      %37 = arith.addf %34, %36 : vector<32x384xf32>
      %38 = arith.truncf %37 : vector<32x384xf32> to vector<32x384xbf16>
      %c0_20 = arith.constant 0 : index
      %c0_21 = arith.constant 0 : index
      %39 = vector.load %arg6[%c0_20, %c0_21] : memref<32x384xbf16, #tpu.memory_space<vmem>>, vector<32x384xbf16>
      tpu.vector_store %arg6[%c0_20, %c0_21], %38 {strides = array<i32>} : memref<32x384xbf16, #tpu.memory_space<vmem>>, vector<32x384xbf16>,
    } else {
    }
    return
  }
  func.func @transform_0(%arg0: i32, %arg1: i32, %arg2: i32) -> (i32, i32) {
    %c0_i32 = arith.constant 0 : i32
    return %arg0, %arg2 : i32, i32
  }
  func.func @transform_1(%arg0: i32, %arg1: i32, %arg2: i32) -> (i32, i32) {
    %c0_i32 = arith.constant 0 : i32
    return %arg2, %arg1 : i32, i32
  }
  func.func @transform_2(%arg0: i32, %arg1: i32, %arg2: i32) -> (i32, i32) {
    %c0_i32 = arith.constant 0 : i32
    %c0_i32_0 = arith.constant 0 : i32
    return %c0_i32, %arg1 : i32, i32
  }
  func.func @transform_3(%arg0: i32, %arg1: i32, %arg2: i32) -> (i32, i32) {
    %c0_i32 = arith.constant 0 : i32
    return %arg0, %arg1 : i32, i32
  }
}

module attributes {stable_mosaic.version = 11 : i64} {
  func.func @_attn_kernel(%arg0: i32, %arg1: memref<16x384xbf16, #tpu.memory_space<vmem>>, %arg2: memref<16x128xbf16, #tpu.memory_space<vmem>>) attributes {dimension_semantics = [#tpu.dimension_semantics<parallel>], iteration_bounds = array<i64: 2>, scalar_prefetch = 0 : i64, scratch_operands = 0 : i64, tpu.core_type = #tpu.core_type<tc>, window_params = [{transform_indices = @transform_0, window_bounds = array<i64: 16, 384>}, {transform_indices = @transform_1, window_bounds = array<i64: 16, 128>}]} {
    %c0 = arith.constant 0 : index
    %c0_0 = arith.constant 0 : index
    %0 = vector.load %arg1[%c0, %c0_0] : memref<16x384xbf16, #tpu.memory_space<vmem>>, vector<16x384xbf16>
    %1 = vector.extract_strided_slice %0 {offsets = [0, 0], sizes = [16, 32], strides = [1, 1]} : vector<16x384xbf16> to vector<16x32xbf16>
    %2 = arith.extf %1 : vector<16x32xbf16> to vector<16x32xf32>
    %cst = arith.constant 0.176776692 : f32
    %3 = vector.broadcast %cst : f32 to vector<16x32xf32>
    %4 = arith.mulf %2, %3 : vector<16x32xf32>
    %5 = arith.truncf %4 : vector<16x32xf32> to vector<16x32xbf16>
    %6 = vector.extract_strided_slice %0 {offsets = [0, 128], sizes = [16, 32], strides = [1, 1]} : vector<16x384xbf16> to vector<16x32xbf16>
    %7 = vector.extract_strided_slice %0 {offsets = [0, 256], sizes = [16, 32], strides = [1, 1]} : vector<16x384xbf16> to vector<16x32xbf16>
    %cst_1 = arith.constant dense<0.000000e+00> : vector<16x16xf32>
    %8 = tpu.matmul %5, %6, %cst_1 {dimension_numbers = #tpu.dot_dimension_numbers<[1], [1], [0], [0], [0, 0, 1, 0], [], []>} : vector<16x32xbf16>, vector<16x32xbf16>, vector<16x16xf32> -> vector<16x16xf32>
    %cst_2 = arith.constant dense<0xFF800000> : vector<16xf32>
    %9 = vector.multi_reduction <maximumf>, %8, %cst_2 [1] : vector<16x16xf32> to vector<16xf32>
    %10 = vector.shape_cast %9 : vector<16xf32> to vector<16x1xf32>
    %11 = vector.broadcast %10 : vector<16x1xf32> to vector<16x16xf32>
    %12 = arith.subf %8, %11 : vector<16x16xf32>
    %13 = math.exp %12 : vector<16x16xf32>
    %cst_3 = arith.constant dense<0.000000e+00> : vector<16xf32>
    %14 = vector.multi_reduction <add>, %13, %cst_3 [1] : vector<16x16xf32> to vector<16xf32>
    %15 = vector.shape_cast %14 : vector<16xf32> to vector<16x1xf32>
    %16 = tpu.reciprocal %15 {approx = true} : vector<16x1xf32> -> vector<16x1xf32>
    %17 = vector.broadcast %16 : vector<16x1xf32> to vector<16x16xf32>
    %18 = arith.mulf %13, %17 : vector<16x16xf32>
    %19 = arith.truncf %18 : vector<16x16xf32> to vector<16x16xbf16>
    %cst_4 = arith.constant dense<0.000000e+00> : vector<16x32xf32>
    %20 = tpu.matmul %19, %7, %cst_4 {dimension_numbers = #tpu.dot_dimension_numbers<[1], [0], [0], [1], [0, 0, 1, 1], [], []>} : vector<16x16xbf16>, vector<16x32xbf16>, vector<16x32xf32> -> vector<16x32xf32>
    %21 = vector.extract_strided_slice %0 {offsets = [0, 32], sizes = [16, 32], strides = [1, 1]} : vector<16x384xbf16> to vector<16x32xbf16>
    %22 = arith.extf %21 : vector<16x32xbf16> to vector<16x32xf32>
    %cst_5 = arith.constant 0.176776692 : f32
    %23 = vector.broadcast %cst_5 : f32 to vector<16x32xf32>
    %24 = arith.mulf %22, %23 : vector<16x32xf32>
    %25 = arith.truncf %24 : vector<16x32xf32> to vector<16x32xbf16>
    %26 = vector.extract_strided_slice %0 {offsets = [0, 160], sizes = [16, 32], strides = [1, 1]} : vector<16x384xbf16> to vector<16x32xbf16>
    %27 = vector.extract_strided_slice %0 {offsets = [0, 288], sizes = [16, 32], strides = [1, 1]} : vector<16x384xbf16> to vector<16x32xbf16>
    %cst_6 = arith.constant dense<0.000000e+00> : vector<16x16xf32>
    %28 = tpu.matmul %25, %26, %cst_6 {dimension_numbers = #tpu.dot_dimension_numbers<[1], [1], [0], [0], [0, 0, 1, 0], [], []>} : vector<16x32xbf16>, vector<16x32xbf16>, vector<16x16xf32> -> vector<16x16xf32>
    %cst_7 = arith.constant dense<0xFF800000> : vector<16xf32>
    %29 = vector.multi_reduction <maximumf>, %28, %cst_7 [1] : vector<16x16xf32> to vector<16xf32>
    %30 = vector.shape_cast %29 : vector<16xf32> to vector<16x1xf32>
    %31 = vector.broadcast %30 : vector<16x1xf32> to vector<16x16xf32>
    %32 = arith.subf %28, %31 : vector<16x16xf32>
    %33 = math.exp %32 : vector<16x16xf32>
    %cst_8 = arith.constant dense<0.000000e+00> : vector<16xf32>
    %34 = vector.multi_reduction <add>, %33, %cst_8 [1] : vector<16x16xf32> to vector<16xf32>
    %35 = vector.shape_cast %34 : vector<16xf32> to vector<16x1xf32>
    %36 = tpu.reciprocal %35 {approx = true} : vector<16x1xf32> -> vector<16x1xf32>
    %37 = vector.broadcast %36 : vector<16x1xf32> to vector<16x16xf32>
    %38 = arith.mulf %33, %37 : vector<16x16xf32>
    %39 = arith.truncf %38 : vector<16x16xf32> to vector<16x16xbf16>
    %cst_9 = arith.constant dense<0.000000e+00> : vector<16x32xf32>
    %40 = tpu.matmul %39, %27, %cst_9 {dimension_numbers = #tpu.dot_dimension_numbers<[1], [0], [0], [1], [0, 0, 1, 1], [], []>} : vector<16x16xbf16>, vector<16x32xbf16>, vector<16x32xf32> -> vector<16x32xf32>
    %41 = vector.extract_strided_slice %0 {offsets = [0, 64], sizes = [16, 32], strides = [1, 1]} : vector<16x384xbf16> to vector<16x32xbf16>
    %42 = arith.extf %41 : vector<16x32xbf16> to vector<16x32xf32>
    %cst_10 = arith.constant 0.176776692 : f32
    %43 = vector.broadcast %cst_10 : f32 to vector<16x32xf32>
    %44 = arith.mulf %42, %43 : vector<16x32xf32>
    %45 = arith.truncf %44 : vector<16x32xf32> to vector<16x32xbf16>
    %46 = vector.extract_strided_slice %0 {offsets = [0, 192], sizes = [16, 32], strides = [1, 1]} : vector<16x384xbf16> to vector<16x32xbf16>
    %47 = vector.extract_strided_slice %0 {offsets = [0, 320], sizes = [16, 32], strides = [1, 1]} : vector<16x384xbf16> to vector<16x32xbf16>
    %cst_11 = arith.constant dense<0.000000e+00> : vector<16x16xf32>
    %48 = tpu.matmul %45, %46, %cst_11 {dimension_numbers = #tpu.dot_dimension_numbers<[1], [1], [0], [0], [0, 0, 1, 0], [], []>} : vector<16x32xbf16>, vector<16x32xbf16>, vector<16x16xf32> -> vector<16x16xf32>
    %cst_12 = arith.constant dense<0xFF800000> : vector<16xf32>
    %49 = vector.multi_reduction <maximumf>, %48, %cst_12 [1] : vector<16x16xf32> to vector<16xf32>
    %50 = vector.shape_cast %49 : vector<16xf32> to vector<16x1xf32>
    %51 = vector.broadcast %50 : vector<16x1xf32> to vector<16x16xf32>
    %52 = arith.subf %48, %51 : vector<16x16xf32>
    %53 = math.exp %52 : vector<16x16xf32>
    %cst_13 = arith.constant dense<0.000000e+00> : vector<16xf32>
    %54 = vector.multi_reduction <add>, %53, %cst_13 [1] : vector<16x16xf32> to vector<16xf32>
    %55 = vector.shape_cast %54 : vector<16xf32> to vector<16x1xf32>
    %56 = tpu.reciprocal %55 {approx = true} : vector<16x1xf32> -> vector<16x1xf32>
    %57 = vector.broadcast %56 : vector<16x1xf32> to vector<16x16xf32>
    %58 = arith.mulf %53, %57 : vector<16x16xf32>
    %59 = arith.truncf %58 : vector<16x16xf32> to vector<16x16xbf16>
    %cst_14 = arith.constant dense<0.000000e+00> : vector<16x32xf32>
    %60 = tpu.matmul %59, %47, %cst_14 {dimension_numbers = #tpu.dot_dimension_numbers<[1], [0], [0], [1], [0, 0, 1, 1], [], []>} : vector<16x16xbf16>, vector<16x32xbf16>, vector<16x32xf32> -> vector<16x32xf32>
    %61 = vector.extract_strided_slice %0 {offsets = [0, 96], sizes = [16, 32], strides = [1, 1]} : vector<16x384xbf16> to vector<16x32xbf16>
    %62 = arith.extf %61 : vector<16x32xbf16> to vector<16x32xf32>
    %cst_15 = arith.constant 0.176776692 : f32
    %63 = vector.broadcast %cst_15 : f32 to vector<16x32xf32>
    %64 = arith.mulf %62, %63 : vector<16x32xf32>
    %65 = arith.truncf %64 : vector<16x32xf32> to vector<16x32xbf16>
    %66 = vector.extract_strided_slice %0 {offsets = [0, 224], sizes = [16, 32], strides = [1, 1]} : vector<16x384xbf16> to vector<16x32xbf16>
    %67 = vector.extract_strided_slice %0 {offsets = [0, 352], sizes = [16, 32], strides = [1, 1]} : vector<16x384xbf16> to vector<16x32xbf16>
    %cst_16 = arith.constant dense<0.000000e+00> : vector<16x16xf32>
    %68 = tpu.matmul %65, %66, %cst_16 {dimension_numbers = #tpu.dot_dimension_numbers<[1], [1], [0], [0], [0, 0, 1, 0], [], []>} : vector<16x32xbf16>, vector<16x32xbf16>, vector<16x16xf32> -> vector<16x16xf32>
    %cst_17 = arith.constant dense<0xFF800000> : vector<16xf32>
    %69 = vector.multi_reduction <maximumf>, %68, %cst_17 [1] : vector<16x16xf32> to vector<16xf32>
    %70 = vector.shape_cast %69 : vector<16xf32> to vector<16x1xf32>
    %71 = vector.broadcast %70 : vector<16x1xf32> to vector<16x16xf32>
    %72 = arith.subf %68, %71 : vector<16x16xf32>
    %73 = math.exp %72 : vector<16x16xf32>
    %cst_18 = arith.constant dense<0.000000e+00> : vector<16xf32>
    %74 = vector.multi_reduction <add>, %73, %cst_18 [1] : vector<16x16xf32> to vector<16xf32>
    %75 = vector.shape_cast %74 : vector<16xf32> to vector<16x1xf32>
    %76 = tpu.reciprocal %75 {approx = true} : vector<16x1xf32> -> vector<16x1xf32>
    %77 = vector.broadcast %76 : vector<16x1xf32> to vector<16x16xf32>
    %78 = arith.mulf %73, %77 : vector<16x16xf32>
    %79 = arith.truncf %78 : vector<16x16xf32> to vector<16x16xbf16>
    %cst_19 = arith.constant dense<0.000000e+00> : vector<16x32xf32>
    %80 = tpu.matmul %79, %67, %cst_19 {dimension_numbers = #tpu.dot_dimension_numbers<[1], [0], [0], [1], [0, 0, 1, 1], [], []>} : vector<16x16xbf16>, vector<16x32xbf16>, vector<16x32xf32> -> vector<16x32xf32>
    %81 = tpu.concatenate %20, %40, %60, %80 in 1 : vector<16x32xf32>, vector<16x32xf32>, vector<16x32xf32>, vector<16x32xf32> -> vector<16x128xf32>
    %82 = arith.truncf %81 : vector<16x128xf32> to vector<16x128xbf16>
    %c0_20 = arith.constant 0 : index
    %c0_21 = arith.constant 0 : index
    %83 = vector.load %arg2[%c0_20, %c0_21] : memref<16x128xbf16, #tpu.memory_space<vmem>>, vector<16x128xbf16>
    tpu.vector_store %arg2[%c0_20, %c0_21], %82 {strides = array<i32>} : memref<16x128xbf16, #tpu.memory_space<vmem>>, vector<16x128xbf16>,
    return
  }
  func.func @transform_0(%arg0: i32) -> (i32, i32) {
    %c0_i32 = arith.constant 0 : i32
    %c0_i32_0 = arith.constant 0 : i32
    return %arg0, %c0_i32 : i32, i32
  }
  func.func @transform_1(%arg0: i32) -> (i32, i32) {
    %c0_i32 = arith.constant 0 : i32
    %c0_i32_0 = arith.constant 0 : i32
    return %arg0, %c0_i32 : i32, i32
  }
}

module attributes {stable_mosaic.version = 11 : i64} {
  func.func @_matmul_kernel(%arg0: i32, %arg1: i32, %arg2: i32, %arg3: memref<32x128xbf16, #tpu.memory_space<vmem>>, %arg4: memref<128x512xbf16, #tpu.memory_space<vmem>>, %arg5: memref<1x512xf32, #tpu.memory_space<vmem>>, %arg6: memref<32x512xbf16, #tpu.memory_space<vmem>>, %arg7: memref<32x512xf32, #tpu.memory_space<vmem>>) attributes {dimension_semantics = [#tpu.dimension_semantics<parallel>, #tpu.dimension_semantics<parallel>, #tpu.dimension_semantics<arbitrary>], iteration_bounds = array<i64: 1, 1, 1>, scalar_prefetch = 0 : i64, scratch_operands = 1 : i64, tpu.core_type = #tpu.core_type<tc>, window_params = [{transform_indices = @transform_0, window_bounds = array<i64: 32, 128>}, {transform_indices = @transform_1, window_bounds = array<i64: 128, 512>}, {transform_indices = @transform_2, window_bounds = array<i64: 1, 512>}, {transform_indices = @transform_3, window_bounds = array<i64: 32, 512>}]} {
    %c0_i32 = arith.constant 0 : i32
    %0 = arith.cmpi eq, %arg2, %c0_i32 : i32
    %1 = arith.extui %0 : i1 to i32
    %c0_i32_0 = arith.constant 0 : i32
    %2 = arith.cmpi ne, %1, %c0_i32_0 : i32
    scf.if %2 {
      %cst_16 = arith.constant 0.000000e+00 : f32
      %34 = vector.broadcast %cst_16 : f32 to vector<32x512xf32>
      %c0_17 = arith.constant 0 : index
      %c0_18 = arith.constant 0 : index
      %35 = vector.load %arg7[%c0_17, %c0_18] : memref<32x512xf32, #tpu.memory_space<vmem>>, vector<32x512xf32>
      tpu.vector_store %arg7[%c0_17, %c0_18], %34 {strides = array<i32>} : memref<32x512xf32, #tpu.memory_space<vmem>>, vector<32x512xf32>,
    } else {
    }
    %c0 = arith.constant 0 : index
    %c0_1 = arith.constant 0 : index
    %3 = vector.load %arg3[%c0, %c0_1] : memref<32x128xbf16, #tpu.memory_space<vmem>>, vector<32x128xbf16>
    %4 = arith.extf %3 : vector<32x128xbf16> to vector<32x128xf32>
    %cst = arith.constant dense<0.000000e+00> : vector<32xf32>
    %5 = vector.multi_reduction <add>, %4, %cst [1] : vector<32x128xf32> to vector<32xf32>
    %6 = vector.shape_cast %5 : vector<32xf32> to vector<32x1xf32>
    %cst_2 = arith.constant 1.280000e+02 : f32
    %7 = vector.broadcast %cst_2 : f32 to vector<32x1xf32>
    %8 = arith.divf %6, %7 : vector<32x1xf32>
    %9 = arith.mulf %4, %4 : vector<32x128xf32>
    %cst_3 = arith.constant dense<0.000000e+00> : vector<32xf32>
    %10 = vector.multi_reduction <add>, %9, %cst_3 [1] : vector<32x128xf32> to vector<32xf32>
    %11 = vector.shape_cast %10 : vector<32xf32> to vector<32x1xf32>
    %cst_4 = arith.constant 1.280000e+02 : f32
    %12 = vector.broadcast %cst_4 : f32 to vector<32x1xf32>
    %13 = arith.divf %11, %12 : vector<32x1xf32>
    %14 = arith.mulf %8, %8 : vector<32x1xf32>
    %15 = arith.subf %13, %14 : vector<32x1xf32>
    %cst_5 = arith.constant 0.000000e+00 : f32
    %16 = vector.broadcast %cst_5 : f32 to vector<32x1xf32>
    %17 = arith.maximumf %15, %16 : vector<32x1xf32>
    %18 = vector.broadcast %8 : vector<32x1xf32> to vector<32x128xf32>
    %19 = arith.subf %4, %18 : vector<32x128xf32>
    %cst_6 = arith.constant 9.99999997E-7 : f32
    %20 = vector.broadcast %cst_6 : f32 to vector<32x1xf32>
    %21 = arith.addf %17, %20 : vector<32x1xf32>
    %22 = math.rsqrt %21 : vector<32x1xf32>
    %23 = vector.broadcast %22 : vector<32x1xf32> to vector<32x128xf32>
    %24 = arith.mulf %19, %23 : vector<32x128xf32>
    %25 = arith.truncf %24 : vector<32x128xf32> to vector<32x128xbf16>
    %c0_7 = arith.constant 0 : index
    %c0_8 = arith.constant 0 : index
    %26 = vector.load %arg7[%c0_7, %c0_8] : memref<32x512xf32, #tpu.memory_space<vmem>>, vector<32x512xf32>
    %c0_9 = arith.constant 0 : index
    %c0_10 = arith.constant 0 : index
    %27 = vector.load %arg4[%c0_9, %c0_10] : memref<128x512xbf16, #tpu.memory_space<vmem>>, vector<128x512xbf16>
    %cst_11 = arith.constant dense<0.000000e+00> : vector<32x512xf32>
    %28 = tpu.matmul %25, %27, %cst_11 {dimension_numbers = #tpu.dot_dimension_numbers<[1], [0], [0], [1], [0, 0, 1, 1], [], []>} : vector<32x128xbf16>, vector<128x512xbf16>, vector<32x512xf32> -> vector<32x512xf32>
    %29 = arith.addf %26, %28 : vector<32x512xf32>
    %c0_12 = arith.constant 0 : index
    %c0_13 = arith.constant 0 : index
    %30 = vector.load %arg7[%c0_12, %c0_13] : memref<32x512xf32, #tpu.memory_space<vmem>>, vector<32x512xf32>
    tpu.vector_store %arg7[%c0_12, %c0_13], %29 {strides = array<i32>} : memref<32x512xf32, #tpu.memory_space<vmem>>, vector<32x512xf32>,
    %c0_i32_14 = arith.constant 0 : i32
    %31 = arith.cmpi eq, %arg2, %c0_i32_14 : i32
    %32 = arith.extui %31 : i1 to i32
    %c0_i32_15 = arith.constant 0 : i32
    %33 = arith.cmpi ne, %32, %c0_i32_15 : i32
    scf.if %33 {
      %c0_16 = arith.constant 0 : index
      %c0_17 = arith.constant 0 : index
      %34 = vector.load %arg7[%c0_16, %c0_17] : memref<32x512xf32, #tpu.memory_space<vmem>>, vector<32x512xf32>
      %c0_18 = arith.constant 0 : index
      %c0_19 = arith.constant 0 : index
      %35 = vector.load %arg5[%c0_18, %c0_19] : memref<1x512xf32, #tpu.memory_space<vmem>>, vector<1x512xf32>
      %36 = vector.broadcast %35 : vector<1x512xf32> to vector<32x512xf32>
      %37 = arith.addf %34, %36 : vector<32x512xf32>
      %cst_20 = arith.constant 5.000000e-01 : f32
      %38 = vector.broadcast %cst_20 : f32 to vector<32x512xf32>
      %39 = arith.mulf %38, %37 : vector<32x512xf32>
      %cst_21 = arith.constant 4.471500e-02 : f32
      %40 = vector.broadcast %cst_21 : f32 to vector<32x512xf32>
      %41 = arith.mulf %40, %37 : vector<32x512xf32>
      %42 = arith.mulf %41, %37 : vector<32x512xf32>
      %43 = arith.mulf %42, %37 : vector<32x512xf32>
      %44 = arith.addf %37, %43 : vector<32x512xf32>
      %cst_22 = arith.constant 0.797884583 : f32
      %45 = vector.broadcast %cst_22 : f32 to vector<32x512xf32>
      %46 = arith.mulf %45, %44 : vector<32x512xf32>
      %47 = math.tanh %46 : vector<32x512xf32>
      %cst_23 = arith.constant 1.000000e+00 : f32
      %48 = vector.broadcast %cst_23 : f32 to vector<32x512xf32>
      %49 = arith.addf %48, %47 : vector<32x512xf32>
      %50 = arith.mulf %39, %49 : vector<32x512xf32>
      %51 = arith.truncf %50 : vector<32x512xf32> to vector<32x512xbf16>
      %c0_24 = arith.constant 0 : index
      %c0_25 = arith.constant 0 : index
      %52 = vector.load %arg6[%c0_24, %c0_25] : memref<32x512xbf16, #tpu.memory_space<vmem>>, vector<32x512xbf16>
      tpu.vector_store %arg6[%c0_24, %c0_25], %51 {strides = array<i32>} : memref<32x512xbf16, #tpu.memory_space<vmem>>, vector<32x512xbf16>,
    } else {
    }
    return
  }
  func.func @transform_0(%arg0: i32, %arg1: i32, %arg2: i32) -> (i32, i32) {
    %c0_i32 = arith.constant 0 : i32
    return %arg0, %arg2 : i32, i32
  }
  func.func @transform_1(%arg0: i32, %arg1: i32, %arg2: i32) -> (i32, i32) {
    %c0_i32 = arith.constant 0 : i32
    return %arg2, %arg1 : i32, i32
  }
  func.func @transform_2(%arg0: i32, %arg1: i32, %arg2: i32) -> (i32, i32) {
    %c0_i32 = arith.constant 0 : i32
    %c0_i32_0 = arith.constant 0 : i32
    return %c0_i32, %arg1 : i32, i32
  }
  func.func @transform_3(%arg0: i32, %arg1: i32, %arg2: i32) -> (i32, i32) {
    %c0_i32 = arith.constant 0 : i32
    return %arg0, %arg1 : i32, i32
  }
}

module attributes {stable_mosaic.version = 11 : i64} {
  func.func @_matmul_kernel(%arg0: i32, %arg1: i32, %arg2: i32, %arg3: memref<32x128xbf16, #tpu.memory_space<vmem>>, %arg4: memref<128x128xbf16, #tpu.memory_space<vmem>>, %arg5: memref<1x128xf32, #tpu.memory_space<vmem>>, %arg6: memref<32x128xbf16, #tpu.memory_space<vmem>>, %arg7: memref<32x128xbf16, #tpu.memory_space<vmem>>, %arg8: memref<32x128xf32, #tpu.memory_space<vmem>>) attributes {dimension_semantics = [#tpu.dimension_semantics<parallel>, #tpu.dimension_semantics<parallel>, #tpu.dimension_semantics<arbitrary>], iteration_bounds = array<i64: 1, 1, 1>, scalar_prefetch = 0 : i64, scratch_operands = 1 : i64, tpu.core_type = #tpu.core_type<tc>, window_params = [{transform_indices = @transform_0, window_bounds = array<i64: 32, 128>}, {transform_indices = @transform_1, window_bounds = array<i64: 128, 128>}, {transform_indices = @transform_2, window_bounds = array<i64: 1, 128>}, {transform_indices = @transform_3, window_bounds = array<i64: 32, 128>}, {transform_indices = @transform_4, window_bounds = array<i64: 32, 128>}]} {
    %c0_i32 = arith.constant 0 : i32
    %0 = arith.cmpi eq, %arg2, %c0_i32 : i32
    %1 = arith.extui %0 : i1 to i32
    %c0_i32_0 = arith.constant 0 : i32
    %2 = arith.cmpi ne, %1, %c0_i32_0 : i32
    scf.if %2 {
      %cst_10 = arith.constant 0.000000e+00 : f32
      %12 = vector.broadcast %cst_10 : f32 to vector<32x128xf32>
      %c0_11 = arith.constant 0 : index
      %c0_12 = arith.constant 0 : index
      %13 = vector.load %arg8[%c0_11, %c0_12] : memref<32x128xf32, #tpu.memory_space<vmem>>, vector<32x128xf32>
      tpu.vector_store %arg8[%c0_11, %c0_12], %12 {strides = array<i32>} : memref<32x128xf32, #tpu.memory_space<vmem>>, vector<32x128xf32>,
    } else {
    }
    %c0 = arith.constant 0 : index
    %c0_1 = arith.constant 0 : index
    %3 = vector.load %arg3[%c0, %c0_1] : memref<32x128xbf16, #tpu.memory_space<vmem>>, vector<32x128xbf16>
    %c0_2 = arith.constant 0 : index
    %c0_3 = arith.constant 0 : index
    %4 = vector.load %arg8[%c0_2, %c0_3] : memref<32x128xf32, #tpu.memory_space<vmem>>, vector<32x128xf32>
    %c0_4 = arith.constant 0 : index
    %c0_5 = arith.constant 0 : index
    %5 = vector.load %arg4[%c0_4, %c0_5] : memref<128x128xbf16, #tpu.memory_space<vmem>>, vector<128x128xbf16>
    %cst = arith.constant dense<0.000000e+00> : vector<32x128xf32>
    %6 = tpu.matmul %3, %5, %cst {dimension_numbers = #tpu.dot_dimension_numbers<[1], [0], [0], [1], [0, 0, 1, 1], [], []>} : vector<32x128xbf16>, vector<128x128xbf16>, vector<32x128xf32> -> vector<32x128xf32>
    %7 = arith.addf %4, %6 : vector<32x128xf32>
    %c0_6 = arith.constant 0 : index
    %c0_7 = arith.constant 0 : index
    %8 = vector.load %arg8[%c0_6, %c0_7] : memref<32x128xf32, #tpu.memory_space<vmem>>, vector<32x128xf32>
    tpu.vector_store %arg8[%c0_6, %c0_7], %7 {strides = array<i32>} : memref<32x128xf32, #tpu.memory_space<vmem>>, vector<32x128xf32>,
    %c0_i32_8 = arith.constant 0 : i32
    %9 = arith.cmpi eq, %arg2, %c0_i32_8 : i32
    %10 = arith.extui %9 : i1 to i32
    %c0_i32_9 = arith.constant 0 : i32
    %11 = arith.cmpi ne, %10, %c0_i32_9 : i32
    scf.if %11 {
      %c0_10 = arith.constant 0 : index
      %c0_11 = arith.constant 0 : index
      %12 = vector.load %arg8[%c0_10, %c0_11] : memref<32x128xf32, #tpu.memory_space<vmem>>, vector<32x128xf32>
      %c0_12 = arith.constant 0 : index
      %c0_13 = arith.constant 0 : index
      %13 = vector.load %arg5[%c0_12, %c0_13] : memref<1x128xf32, #tpu.memory_space<vmem>>, vector<1x128xf32>
      %14 = vector.broadcast %13 : vector<1x128xf32> to vector<32x128xf32>
      %15 = arith.addf %12, %14 : vector<32x128xf32>
      %c0_14 = arith.constant 0 : index
      %c0_15 = arith.constant 0 : index
      %16 = vector.load %arg6[%c0_14, %c0_15] : memref<32x128xbf16, #tpu.memory_space<vmem>>, vector<32x128xbf16>
      %17 = arith.extf %16 : vector<32x128xbf16> to vector<32x128xf32>
      %18 = arith.addf %15, %17 : vector<32x128xf32>
      %19 = arith.truncf %18 : vector<32x128xf32> to vector<32x128xbf16>
      %c0_16 = arith.constant 0 : index
      %c0_17 = arith.constant 0 : index
      %20 = vector.load %arg7[%c0_16, %c0_17] : memref<32x128xbf16, #tpu.memory_space<vmem>>, vector<32x128xbf16>
      tpu.vector_store %arg7[%c0_16, %c0_17], %19 {strides = array<i32>} : memref<32x128xbf16, #tpu.memory_space<vmem>>, vector<32x128xbf16>,
    } else {
    }
    return
  }
  func.func @transform_0(%arg0: i32, %arg1: i32, %arg2: i32) -> (i32, i32) {
    %c0_i32 = arith.constant 0 : i32
    return %arg0, %arg2 : i32, i32
  }
  func.func @transform_1(%arg0: i32, %arg1: i32, %arg2: i32) -> (i32, i32) {
    %c0_i32 = arith.constant 0 : i32
    return %arg2, %arg1 : i32, i32
  }
  func.func @transform_2(%arg0: i32, %arg1: i32, %arg2: i32) -> (i32, i32) {
    %c0_i32 = arith.constant 0 : i32
    %c0_i32_0 = arith.constant 0 : i32
    return %c0_i32, %arg1 : i32, i32
  }
  func.func @transform_3(%arg0: i32, %arg1: i32, %arg2: i32) -> (i32, i32) {
    %c0_i32 = arith.constant 0 : i32
    return %arg0, %arg1 : i32, i32
  }
  func.func @transform_4(%arg0: i32, %arg1: i32, %arg2: i32) -> (i32, i32) {
    %c0_i32 = arith.constant 0 : i32
    return %arg0, %arg1 : i32, i32
  }
}

module attributes {stable_mosaic.version = 11 : i64} {
  func.func @_matmul_kernel(%arg0: i32, %arg1: i32, %arg2: i32, %arg3: memref<32x512xbf16, #tpu.memory_space<vmem>>, %arg4: memref<512x128xbf16, #tpu.memory_space<vmem>>, %arg5: memref<1x128xf32, #tpu.memory_space<vmem>>, %arg6: memref<32x128xbf16, #tpu.memory_space<vmem>>, %arg7: memref<32x128xbf16, #tpu.memory_space<vmem>>, %arg8: memref<32x128xf32, #tpu.memory_space<vmem>>) attributes {dimension_semantics = [#tpu.dimension_semantics<parallel>, #tpu.dimension_semantics<parallel>, #tpu.dimension_semantics<arbitrary>], iteration_bounds = array<i64: 1, 1, 1>, scalar_prefetch = 0 : i64, scratch_operands = 1 : i64, tpu.core_type = #tpu.core_type<tc>, window_params = [{transform_indices = @transform_0, window_bounds = array<i64: 32, 512>}, {transform_indices = @transform_1, window_bounds = array<i64: 512, 128>}, {transform_indices = @transform_2, window_bounds = array<i64: 1, 128>}, {transform_indices = @transform_3, window_bounds = array<i64: 32, 128>}, {transform_indices = @transform_4, window_bounds = array<i64: 32, 128>}]} {
    %c0_i32 = arith.constant 0 : i32
    %0 = arith.cmpi eq, %arg2, %c0_i32 : i32
    %1 = arith.extui %0 : i1 to i32
    %c0_i32_0 = arith.constant 0 : i32
    %2 = arith.cmpi ne, %1, %c0_i32_0 : i32
    scf.if %2 {
      %cst_10 = arith.constant 0.000000e+00 : f32
      %12 = vector.broadcast %cst_10 : f32 to vector<32x128xf32>
      %c0_11 = arith.constant 0 : index
      %c0_12 = arith.constant 0 : index
      %13 = vector.load %arg8[%c0_11, %c0_12] : memref<32x128xf32, #tpu.memory_space<vmem>>, vector<32x128xf32>
      tpu.vector_store %arg8[%c0_11, %c0_12], %12 {strides = array<i32>} : memref<32x128xf32, #tpu.memory_space<vmem>>, vector<32x128xf32>,
    } else {
    }
    %c0 = arith.constant 0 : index
    %c0_1 = arith.constant 0 : index
    %3 = vector.load %arg3[%c0, %c0_1] : memref<32x512xbf16, #tpu.memory_space<vmem>>, vector<32x512xbf16>
    %c0_2 = arith.constant 0 : index
    %c0_3 = arith.constant 0 : index
    %4 = vector.load %arg8[%c0_2, %c0_3] : memref<32x128xf32, #tpu.memory_space<vmem>>, vector<32x128xf32>
    %c0_4 = arith.constant 0 : index
    %c0_5 = arith.constant 0 : index
    %5 = vector.load %arg4[%c0_4, %c0_5] : memref<512x128xbf16, #tpu.memory_space<vmem>>, vector<512x128xbf16>
    %cst = arith.constant dense<0.000000e+00> : vector<32x128xf32>
    %6 = tpu.matmul %3, %5, %cst {dimension_numbers = #tpu.dot_dimension_numbers<[1], [0], [0], [1], [0, 0, 1, 1], [], []>} : vector<32x512xbf16>, vector<512x128xbf16>, vector<32x128xf32> -> vector<32x128xf32>
    %7 = arith.addf %4, %6 : vector<32x128xf32>
    %c0_6 = arith.constant 0 : index
    %c0_7 = arith.constant 0 : index
    %8 = vector.load %arg8[%c0_6, %c0_7] : memref<32x128xf32, #tpu.memory_space<vmem>>, vector<32x128xf32>
    tpu.vector_store %arg8[%c0_6, %c0_7], %7 {strides = array<i32>} : memref<32x128xf32, #tpu.memory_space<vmem>>, vector<32x128xf32>,
    %c0_i32_8 = arith.constant 0 : i32
    %9 = arith.cmpi eq, %arg2, %c0_i32_8 : i32
    %10 = arith.extui %9 : i1 to i32
    %c0_i32_9 = arith.constant 0 : i32
    %11 = arith.cmpi ne, %10, %c0_i32_9 : i32
    scf.if %11 {
      %c0_10 = arith.constant 0 : index
      %c0_11 = arith.constant 0 : index
      %12 = vector.load %arg8[%c0_10, %c0_11] : memref<32x128xf32, #tpu.memory_space<vmem>>, vector<32x128xf32>
      %c0_12 = arith.constant 0 : index
      %c0_13 = arith.constant 0 : index
      %13 = vector.load %arg5[%c0_12, %c0_13] : memref<1x128xf32, #tpu.memory_space<vmem>>, vector<1x128xf32>
      %14 = vector.broadcast %13 : vector<1x128xf32> to vector<32x128xf32>
      %15 = arith.addf %12, %14 : vector<32x128xf32>
      %c0_14 = arith.constant 0 : index
      %c0_15 = arith.constant 0 : index
      %16 = vector.load %arg6[%c0_14, %c0_15] : memref<32x128xbf16, #tpu.memory_space<vmem>>, vector<32x128xbf16>
      %17 = arith.extf %16 : vector<32x128xbf16> to vector<32x128xf32>
      %18 = arith.addf %15, %17 : vector<32x128xf32>
      %19 = arith.truncf %18 : vector<32x128xf32> to vector<32x128xbf16>
      %c0_16 = arith.constant 0 : index
      %c0_17 = arith.constant 0 : index
      %20 = vector.load %arg7[%c0_16, %c0_17] : memref<32x128xbf16, #tpu.memory_space<vmem>>, vector<32x128xbf16>
      tpu.vector_store %arg7[%c0_16, %c0_17], %19 {strides = array<i32>} : memref<32x128xbf16, #tpu.memory_space<vmem>>, vector<32x128xbf16>,
    } else {
    }
    return
  }
  func.func @transform_0(%arg0: i32, %arg1: i32, %arg2: i32) -> (i32, i32) {
    %c0_i32 = arith.constant 0 : i32
    return %arg0, %arg2 : i32, i32
  }
  func.func @transform_1(%arg0: i32, %arg1: i32, %arg2: i32) -> (i32, i32) {
    %c0_i32 = arith.constant 0 : i32
    return %arg2, %arg1 : i32, i32
  }
  func.func @transform_2(%arg0: i32, %arg1: i32, %arg2: i32) -> (i32, i32) {
    %c0_i32 = arith.constant 0 : i32
    %c0_i32_0 = arith.constant 0 : i32
    return %c0_i32, %arg1 : i32, i32
  }
  func.func @transform_3(%arg0: i32, %arg1: i32, %arg2: i32) -> (i32, i32) {
    %c0_i32 = arith.constant 0 : i32
    return %arg0, %arg1 : i32, i32
  }
  func.func @transform_4(%arg0: i32, %arg1: i32, %arg2: i32) -> (i32, i32) {
    %c0_i32 = arith.constant 0 : i32
    return %arg0, %arg1 : i32, i32
  }
}

module attributes {stable_mosaic.version = 11 : i64} {
  func.func @_matmul_kernel(%arg0: i32, %arg1: i32, %arg2: i32, %arg3: memref<32x128xbf16, #tpu.memory_space<vmem>>, %arg4: memref<128x128xbf16, #tpu.memory_space<vmem>>, %arg5: memref<1x128xf32, #tpu.memory_space<vmem>>, %arg6: memref<32x128xf32, #tpu.memory_space<vmem>>, %arg7: memref<32x128xf32, #tpu.memory_space<vmem>>) attributes {dimension_semantics = [#tpu.dimension_semantics<parallel>, #tpu.dimension_semantics<parallel>, #tpu.dimension_semantics<arbitrary>], iteration_bounds = array<i64: 1, 1, 1>, scalar_prefetch = 0 : i64, scratch_operands = 1 : i64, tpu.core_type = #tpu.core_type<tc>, window_params = [{transform_indices = @transform_0, window_bounds = array<i64: 32, 128>}, {transform_indices = @transform_1, window_bounds = array<i64: 128, 128>}, {transform_indices = @transform_2, window_bounds = array<i64: 1, 128>}, {transform_indices = @transform_3, window_bounds = array<i64: 32, 128>}]} {
    %c0_i32 = arith.constant 0 : i32
    %0 = arith.cmpi eq, %arg2, %c0_i32 : i32
    %1 = arith.extui %0 : i1 to i32
    %c0_i32_0 = arith.constant 0 : i32
    %2 = arith.cmpi ne, %1, %c0_i32_0 : i32
    scf.if %2 {
      %cst_10 = arith.constant 0.000000e+00 : f32
      %12 = vector.broadcast %cst_10 : f32 to vector<32x128xf32>
      %c0_11 = arith.constant 0 : index
      %c0_12 = arith.constant 0 : index
      %13 = vector.load %arg7[%c0_11, %c0_12] : memref<32x128xf32, #tpu.memory_space<vmem>>, vector<32x128xf32>
      tpu.vector_store %arg7[%c0_11, %c0_12], %12 {strides = array<i32>} : memref<32x128xf32, #tpu.memory_space<vmem>>, vector<32x128xf32>,
    } else {
    }
    %c0 = arith.constant 0 : index
    %c0_1 = arith.constant 0 : index
    %3 = vector.load %arg3[%c0, %c0_1] : memref<32x128xbf16, #tpu.memory_space<vmem>>, vector<32x128xbf16>
    %c0_2 = arith.constant 0 : index
    %c0_3 = arith.constant 0 : index
    %4 = vector.load %arg7[%c0_2, %c0_3] : memref<32x128xf32, #tpu.memory_space<vmem>>, vector<32x128xf32>
    %c0_4 = arith.constant 0 : index
    %c0_5 = arith.constant 0 : index
    %5 = vector.load %arg4[%c0_4, %c0_5] : memref<128x128xbf16, #tpu.memory_space<vmem>>, vector<128x128xbf16>
    %cst = arith.constant dense<0.000000e+00> : vector<32x128xf32>
    %6 = tpu.matmul %3, %5, %cst {dimension_numbers = #tpu.dot_dimension_numbers<[1], [0], [0], [1], [0, 0, 1, 1], [], []>} : vector<32x128xbf16>, vector<128x128xbf16>, vector<32x128xf32> -> vector<32x128xf32>
    %7 = arith.addf %4, %6 : vector<32x128xf32>
    %c0_6 = arith.constant 0 : index
    %c0_7 = arith.constant 0 : index
    %8 = vector.load %arg7[%c0_6, %c0_7] : memref<32x128xf32, #tpu.memory_space<vmem>>, vector<32x128xf32>
    tpu.vector_store %arg7[%c0_6, %c0_7], %7 {strides = array<i32>} : memref<32x128xf32, #tpu.memory_space<vmem>>, vector<32x128xf32>,
    %c0_i32_8 = arith.constant 0 : i32
    %9 = arith.cmpi eq, %arg2, %c0_i32_8 : i32
    %10 = arith.extui %9 : i1 to i32
    %c0_i32_9 = arith.constant 0 : i32
    %11 = arith.cmpi ne, %10, %c0_i32_9 : i32
    scf.if %11 {
      %c0_10 = arith.constant 0 : index
      %c0_11 = arith.constant 0 : index
      %12 = vector.load %arg7[%c0_10, %c0_11] : memref<32x128xf32, #tpu.memory_space<vmem>>, vector<32x128xf32>
      %c0_12 = arith.constant 0 : index
      %c0_13 = arith.constant 0 : index
      %13 = vector.load %arg5[%c0_12, %c0_13] : memref<1x128xf32, #tpu.memory_space<vmem>>, vector<1x128xf32>
      %14 = vector.broadcast %13 : vector<1x128xf32> to vector<32x128xf32>
      %15 = arith.addf %12, %14 : vector<32x128xf32>
      %c0_14 = arith.constant 0 : index
      %c0_15 = arith.constant 0 : index
      %16 = vector.load %arg6[%c0_14, %c0_15] : memref<32x128xf32, #tpu.memory_space<vmem>>, vector<32x128xf32>
      tpu.vector_store %arg6[%c0_14, %c0_15], %15 {strides = array<i32>} : memref<32x128xf32, #tpu.memory_space<vmem>>, vector<32x128xf32>,
    } else {
    }
    return
  }
  func.func @transform_0(%arg0: i32, %arg1: i32, %arg2: i32) -> (i32, i32) {
    %c0_i32 = arith.constant 0 : i32
    return %arg0, %arg2 : i32, i32
  }
  func.func @transform_1(%arg0: i32, %arg1: i32, %arg2: i32) -> (i32, i32) {
    %c0_i32 = arith.constant 0 : i32
    return %arg2, %arg1 : i32, i32
  }
  func.func @transform_2(%arg0: i32, %arg1: i32, %arg2: i32) -> (i32, i32) {
    %c0_i32 = arith.constant 0 : i32
    %c0_i32_0 = arith.constant 0 : i32
    return %c0_i32, %arg1 : i32, i32
  }
  func.func @transform_3(%arg0: i32, %arg1: i32, %arg2: i32) -> (i32, i32) {
    %c0_i32 = arith.constant 0 : i32
    return %arg0, %arg1 : i32, i32
  }
}

</mosaic_0001>

<llo_original>
// kernel: decoder_forward.12
$region0: #{decoder_forward.12}
  #allocation0 [shape = 'u32[]', space=smem, size = 0x4, offset = 0x4, fixed_abs, tag = 'smem constant byte address 0x4 - core index']
  #allocation1 [shape = 'u32[72,128]{1,0:T(1,128)}', space=vmem, size = 0x9000, scoped, tag = 'internal scratch']
  %s0 = inlined_call_operand.vmem [shape: bf16[32,384], index: 0, kind: input, shape index: {}]
  %s1 = inlined_call_operand.vmem [shape: bf16[32,128], index: 1, kind: output, shape index: {}]
  %s2 = sld [smem:[#allocation0]]
  $region37: #{decoder_forward.12} parent=0
    _
  %s4 = ssub.s32 1, %s2
  %s5 = scalar_select 0, %s4, %s2
  loop: start=0, step=1, limit=4
  $region2: #{decoder_forward.12} parent=0 // loop_pre_header
    _
  $region3: #{decoder_forward.12} parent=0 // loop_header
    %s7 = sphi 0, %s11
    %p8 = scmp.ge.s32.totalorder %s7, 4
    %s17 = sphi 0, %s19
    %s20 = sphi 0, %s17
    %s21 = sphi 0, %s20
    %s37 = sphi 0, %s21
    %s43 = sphi 0, %s45
    %s46 = sphi 0, %s43
    %s47 = sphi 0, %s46
    %s63 = sphi 0, %s47
  $region4: #{decoder_forward.12} parent=0 // loop_header_branch
    %10 = sbr.rel (%p8) target = $region8
  $region5: #{decoder_forward.12} parent=0 // loop_body
    %s12 = ssub.s32 %s7, 1
    %s13 = ssub.s32 %s7, 2
    %s14 = sadd.s32 %s7, 1
    %s15 = ssub.s32 %s7, %s14
    %p16 = scmp.eq.s32.totalorder %s15, 0
    %s18 = sadd.s32 %s17, 1
    %s19 = scalar_select %p16, %s17, %s18
    %p22 = pneg %p16
    %p23 = scmp.eq.s32.totalorder %s7, 1
    %p24 = por %p22, %p23
    %p25 = scmp.ne.s32.totalorder %s17, %s20
    %p26 = scmp.eq.s32.totalorder %s7, 0
    %p27 = por %p25, %p26
    %p28 = scmp.ne.s32.totalorder %s17, %s20
    %p29 = scmp.eq.s32.totalorder %s12, 1
    %p30 = por %p28, %p29
    %p31 = scmp.ne.s32.totalorder %s20, %s21
    %p32 = scmp.eq.s32.totalorder %s12, 0
    %p33 = por %p31, %p32
    %p34 = scmp.ne.s32.totalorder %s20, %s21
    %p35 = scmp.eq.s32.totalorder %s13, 1
    %p36 = por %p34, %p35
    %p38 = scmp.ne.s32.totalorder %s21, %s37
    %p39 = scmp.eq.s32.totalorder %s13, 0
    %p40 = por %p38, %p39
    %s41 = ssub.s32 %s7, %s14
    %p42 = scmp.eq.s32.totalorder %s41, 0
    %s44 = sadd.s32 %s43, 1
    %s45 = scalar_select %p42, %s43, %s44
    %p48 = pneg %p42
    %p49 = scmp.eq.s32.totalorder %s7, 1
    %p50 = por %p48, %p49
    %p51 = scmp.ne.s32.totalorder %s43, %s46
    %p52 = scmp.eq.s32.totalorder %s7, 0
    %p53 = por %p51, %p52
    %p54 = scmp.ne.s32.totalorder %s43, %s46
    %p55 = scmp.eq.s32.totalorder %s12, 1
    %p56 = por %p54, %p55
    %p57 = scmp.ne.s32.totalorder %s46, %s47
    %p58 = scmp.eq.s32.totalorder %s12, 0
    %p59 = por %p57, %p58
    %p60 = scmp.ne.s32.totalorder %s46, %s47
    %p61 = scmp.eq.s32.totalorder %s13, 1
    %p62 = por %p60, %p61
    %p64 = scmp.ne.s32.totalorder %s47, %s63
    %p65 = scmp.eq.s32.totalorder %s13, 0
    %p66 = por %p64, %p65
    %p67 = scmp.le.s32.totalorder 1, %s7
    %p68 = scmp.lt.s32.totalorder %s7, 3
    %p69 = pnand %p67, %p68
    %p70 = pneg %p69
    // Predicated region
    $region9: #{decoder_forward.12} parent=5 // pred_check
      _
    $region10: #{decoder_forward.12} parent=5 // pred_check_branch
      %72 = sbr.rel (%p69) target = $region12
    $region11: #{decoder_forward.12} parent=5 // pred_region
      %s73 = ssub.s32 %s7, 1
    $region12: #{decoder_forward.12} parent=5 // pred_fallthru
      _
    %p74 = scmp.lt.s32.totalorder %s7, 2
    // Predicated region
    $region13: #{decoder_forward.12} parent=5 // pred_check
      %p75 = pneg %p74
    $region14: #{decoder_forward.12} parent=5 // pred_check_branch
      %77 = sbr.rel (%p75) target = $region16
    $region15: #{decoder_forward.12} parent=5 // pred_region
      // Predicated region
      $region17: #{decoder_forward.12} parent=15 // pred_check
        %p78 = pneg %p27
      $region18: #{decoder_forward.12} parent=15 // pred_check_branch
        %80 = sbr.rel (%p78) target = $region20
      $region19: #{decoder_forward.12} parent=15 // pred_region
        %s81 = smul.u32 2, %s7
        %p82 = scmp.lt.s32.totalorder %s81, 3
        %s83 = scalar_select %p82, %s81, 3
        %s84 = smul.addr %s83, 3
        %s85 = smul.addr %s84, 4
        %s86 = scalar_lea.vmem %s0, %s85
        %s87 = smul.u32 2, %s7
      $region20: #{decoder_forward.12} parent=15 // pred_fallthru
        _
    $region16: #{decoder_forward.12} parent=5 // pred_fallthru
      _
    %p88 = scmp.le.s32.totalorder 1, %s7
    %p89 = scmp.lt.s32.totalorder %s7, 3
    %p90 = pnand %p88, %p89
    %p91 = pneg %p90
    // Predicated region
    $region21: #{decoder_forward.12} parent=5 // pred_check
      _
    $region22: #{decoder_forward.12} parent=5 // pred_check_branch
      %93 = sbr.rel (%p90) target = $region24
    $region23: #{decoder_forward.12} parent=5 // pred_region
      %s94 = ssub.s32 %s7, 1
      %s95 = smul.u32 2, %s12
      %p96 = scmp.lt.s32.totalorder %s95, 3
      %s97 = scalar_select %p96, %s95, 3
      %s98 = smul.addr %s97, 3
      %s99 = smul.addr %s98, 4
      %s100 = scalar_lea.vmem %s0, %s99
      %p101 = pneg %p33
      %p102 = pneg %p30
      %p103 = pneg %p59
      %p104 = pneg %p56
      %s105 = smul.u32 2, %s12
      %p106 = scmp.lt.s32.totalorder %s105, 3
      %s107 = scalar_select %p106, %s105, 3
      %s108 = smul.addr %s107, 4
      %s109 = scalar_lea.vmem %s1, %s108
      %s110 = smul.u32 2, %s12
      %p111 = scmp.lt.s32.totalorder %s110, 3
      %s112 = scalar_select %p111, %s110, 3
      %s113 = smul.addr %s112, 3
      %s114 = smul.addr %s113, 4
      %s115 = scalar_lea.vmem %s0, %s114
      %s116 = smul.u32 2, %s12
      %s117 = smul.u32 2, %s12
      %p118 = scmp.lt.s32.totalorder %s117, 3
      %s119 = scalar_select %p118, %s117, 3
      %s120 = smul.addr %s119, 4
      %s121 = scalar_lea.vmem %s1, %s120
      %s122 = smul.u32 2, %s12
      %v124 = vld [vmem:[%s115] sm:$0xff]
      %v125 = vld [vmem:[%s115 + $0x8] sm:$0xf]
      %v126 = vld [vmem:[%s115 + $0xc] sm:$0xff]
      %v127 = vld [vmem:[%s115 + $0x14] sm:$0xf]
      %v128 = vunpack.c.l.bf16 %v124
      %v129 = vunpack.c.l.bf16 %v126
      %v130 = vmul.f32 %v128, 0.17677669
      %v131 = vmul.f32 %v129, 0.17677669
      %v132 = vpack.c.bf16 %v131, %v130
      %v135 = vunpack.c.h.b16 %v124
      %v136 = vunpack.c.h.b16 %v126
      %v137 = vpack.c.b16 %v136, %v135
      %vm138 = vcmask 261120
      %v140 = vsel %vm138, %v132, 0
      %v143 = vsel %vm138, %v137, 0
      %145 = vmatpush.bf16.xpose.msra.mxu0 0
      %146 = vmatpush.bf16.xpose.msra.mxu0 0
      %147 = vmatpush.bf16.xpose.msra.mxu0 0
      %148 = vmatpush.bf16.xpose.msra.mxu0 0
      %149 = vmatpush.bf16.xpose.msra.mxu0 0
      %150 = vmatpush.bf16.xpose.msra.mxu0 0
      %151 = vmatpush.bf16.xpose.msra.mxu0 0
      %152 = vmatpush.bf16.xpose.msra.mxu0 %v143
      %153 = vmatmul.bf16.gmra.mxu0 %v140
      %v154 = vpop.f32.mrf.mxu0
      %v155 = vadd.f32 0.0, %v154
      %v156 = vpop.f32.mrf.mxu0
      %v157 = vadd.f32 0.0, %v156
      %158 = vdwg.mxu0
      %vm159 = vcmask 130048
      %v160 = vsel %vm159, %v155, -inf
      %161 = vmax.xlane.f32.xlu0 %v160
      %v162 = vpop.xlane.xlu0 %161
      %v163 = vsel %vm159, %v157, -inf
      %164 = vmax.xlane.f32.xlu0 %v163
      %v165 = vpop.xlane.xlu0 %164
      %v166 = vsub.f32 %v155, %v162
      %v167 = vsub.f32 %v157, %v165
      %v168 = vmul.f32 %v166, 1.442695
      %v169 = vpow.pop %v168
      %v170 = vmul.f32 %v167, 1.442695
      %v171 = vpow.pop %v170
      %v172 = vsel %vm159, %v169, 0.0
      %173 = vadd.xlane.f32.xlu0 %v172
      %v174 = vpop.xlane.xlu0 %173
      %v175 = vsel %vm159, %v171, 0.0
      %176 = vadd.xlane.f32.xlu0 %v175
      %v177 = vpop.xlane.xlu0 %176
      %v178 = vrcp.pop %v174
      %v179 = vrcp.pop %v177
      %v180 = vmul.f32 %v169, %v178
      %v181 = vmul.f32 %v171, %v179
      %v182 = vpack.c.bf16 %v181, %v180
      %v185 = vunpack.c.l.b16 %v125
      %v186 = vunpack.c.l.b16 %v127
      %v187 = vpack.c.b16 %v186, %v185
      %v190 = vsel %vm159, %v182, 0
      %192 = vmatpush.bf16.msra.mxu0 0
      %193 = vmatpush.bf16.msra.mxu0 0
      %194 = vmatpush.bf16.msra.mxu0 0
      %195 = vmatpush.bf16.msra.mxu0 0
      %196 = vmatpush.bf16.msra.mxu0 0
      %197 = vmatpush.bf16.msra.mxu0 0
      %198 = vmatpush.bf16.msra.mxu0 0
      %199 = vmatpush.bf16.msra.mxu0 %v187
      %200 = vmatmul.bf16.gmra.mxu0 %v190
      %v201 = vpop.f32.mrf.mxu0
      %v202 = vadd.f32 0.0, %v201
      %v203 = vpop.f32.mrf.mxu0
      %v204 = vadd.f32 0.0, %v203
      %205 = vdwg.mxu0
      %207 = vrot.lane.b32.xlu0 %v132, 96
      %v208 = vpop.permute.xlu0 %207
      %209 = vrot.lane.b32.xlu0 %v137, 96
      %v210 = vpop.permute.xlu0 %209
      %v212 = vsel %vm138, %v208, 0
      %v215 = vsel %vm138, %v210, 0
      %217 = vmatpush.bf16.xpose.msra.mxu0 0
      %218 = vmatpush.bf16.xpose.msra.mxu0 0
      %219 = vmatpush.bf16.xpose.msra.mxu0 0
      %220 = vmatpush.bf16.xpose.msra.mxu0 0
      %221 = vmatpush.bf16.xpose.msra.mxu0 0
      %222 = vmatpush.bf16.xpose.msra.mxu0 0
      %223 = vmatpush.bf16.xpose.msra.mxu0 0
      %224 = vmatpush.bf16.xpose.msra.mxu0 %v215
      %225 = vmatmul.bf16.gmra.mxu0 %v212
      %v226 = vpop.f32.mrf.mxu0
      %v227 = vadd.f32 0.0, %v226
      %v228 = vpop.f32.mrf.mxu0
      %v229 = vadd.f32 0.0, %v228
      %230 = vdwg.mxu0
      %v231 = vsel %vm159, %v227, -inf
      %232 = vmax.xlane.f32.xlu0 %v231
      %v233 = vpop.xlane.xlu0 %232
      %v234 = vsel %vm159, %v229, -inf
      %235 = vmax.xlane.f32.xlu0 %v234
      %v236 = vpop.xlane.xlu0 %235
      %v237 = vsub.f32 %v227, %v233
      %v238 = vsub.f32 %v229, %v236
      %v239 = vmul.f32 %v237, 1.442695
      %v240 = vpow.pop %v239
      %v241 = vmul.f32 %v238, 1.442695
      %v242 = vpow.pop %v241
      %v243 = vsel %vm159, %v240, 0.0
      %244 = vadd.xlane.f32.xlu0 %v243
      %v245 = vpop.xlane.xlu0 %244
      %v246 = vsel %vm159, %v242, 0.0
      %247 = vadd.xlane.f32.xlu0 %v246
      %v248 = vpop.xlane.xlu0 %247
      %v249 = vrcp.pop %v245
      %v250 = vrcp.pop %v248
      %v251 = vmul.f32 %v240, %v249
      %v252 = vmul.f32 %v242, %v250
      %v253 = vpack.c.bf16 %v252, %v251
      %254 = vrot.lane.b32.xlu0 %v187, 96
      %v255 = vpop.permute.xlu0 %254
      %v258 = vsel %vm159, %v253, 0
      %260 = vmatpush.bf16.msra.mxu0 0
      %261 = vmatpush.bf16.msra.mxu0 0
      %262 = vmatpush.bf16.msra.mxu0 0
      %263 = vmatpush.bf16.msra.mxu0 0
      %264 = vmatpush.bf16.msra.mxu0 0
      %265 = vmatpush.bf16.msra.mxu0 0
      %266 = vmatpush.bf16.msra.mxu0 0
      %267 = vmatpush.bf16.msra.mxu0 %v255
      %268 = vmatmul.bf16.gmra.mxu0 %v258
      %v269 = vpop.f32.mrf.mxu0
      %v270 = vadd.f32 0.0, %v269
      %v271 = vpop.f32.mrf.mxu0
      %v272 = vadd.f32 0.0, %v271
      %273 = vdwg.mxu0
      %274 = vrot.lane.b32.xlu0 %v132, 64
      %v275 = vpop.permute.xlu0 %274
      %276 = vrot.lane.b32.xlu0 %v137, 64
      %v277 = vpop.permute.xlu0 %276
      %v279 = vsel %vm138, %v275, 0
      %v282 = vsel %vm138, %v277, 0
      %284 = vmatpush.bf16.xpose.msra.mxu0 0
      %285 = vmatpush.bf16.xpose.msra.mxu0 0
      %286 = vmatpush.bf16.xpose.msra.mxu0 0
      %287 = vmatpush.bf16.xpose.msra.mxu0 0
      %288 = vmatpush.bf16.xpose.msra.mxu0 0
      %289 = vmatpush.bf16.xpose.msra.mxu0 0
      %290 = vmatpush.bf16.xpose.msra.mxu0 0
      %291 = vmatpush.bf16.xpose.msra.mxu0 %v282
      %292 = vmatmul.bf16.gmra.mxu0 %v279
      %v293 = vpop.f32.mrf.mxu0
      %v294 = vadd.f32 0.0, %v293
      %v295 = vpop.f32.mrf.mxu0
      %v296 = vadd.f32 0.0, %v295
      %297 = vdwg.mxu0
      %v298 = vsel %vm159, %v294, -inf
      %299 = vmax.xlane.f32.xlu0 %v298
      %v300 = vpop.xlane.xlu0 %299
      %v301 = vsel %vm159, %v296, -inf
      %302 = vmax.xlane.f32.xlu0 %v301
      %v303 = vpop.xlane.xlu0 %302
      %v304 = vsub.f32 %v294, %v300
      %v305 = vsub.f32 %v296, %v303
      %v306 = vmul.f32 %v304, 1.442695
      %v307 = vpow.pop %v306
      %v308 = vmul.f32 %v305, 1.442695
      %v309 = vpow.pop %v308
      %v310 = vsel %vm159, %v307, 0.0
      %311 = vadd.xlane.f32.xlu0 %v310
      %v312 = vpop.xlane.xlu0 %311
      %v313 = vsel %vm159, %v309, 0.0
      %314 = vadd.xlane.f32.xlu0 %v313
      %v315 = vpop.xlane.xlu0 %314
      %v316 = vrcp.pop %v312
      %v317 = vrcp.pop %v315
      %v318 = vmul.f32 %v307, %v316
      %v319 = vmul.f32 %v309, %v317
      %v320 = vpack.c.bf16 %v319, %v318
      %321 = vrot.lane.b32.xlu0 %v187, 64
      %v322 = vpop.permute.xlu0 %321
      %v325 = vsel %vm159, %v320, 0
      %327 = vmatpush.bf16.msra.mxu0 0
      %328 = vmatpush.bf16.msra.mxu0 0
      %329 = vmatpush.bf16.msra.mxu0 0
      %330 = vmatpush.bf16.msra.mxu0 0
      %331 = vmatpush.bf16.msra.mxu0 0
      %332 = vmatpush.bf16.msra.mxu0 0
      %333 = vmatpush.bf16.msra.mxu0 0
      %334 = vmatpush.bf16.msra.mxu0 %v322
      %335 = vmatmul.bf16.gmra.mxu0 %v325
      %v336 = vpop.f32.mrf.mxu0
      %v337 = vadd.f32 0.0, %v336
      %v338 = vpop.f32.mrf.mxu0
      %v339 = vadd.f32 0.0, %v338
      %340 = vdwg.mxu0
      %341 = vrot.lane.b32.xlu0 %v132, 32
      %v342 = vpop.permute.xlu0 %341
      %343 = vrot.lane.b32.xlu0 %v137, 32
      %v344 = vpop.permute.xlu0 %343
      %v346 = vsel %vm138, %v342, 0
      %v349 = vsel %vm138, %v344, 0
      %351 = vmatpush.bf16.xpose.msra.mxu0 0
      %352 = vmatpush.bf16.xpose.msra.mxu0 0
      %353 = vmatpush.bf16.xpose.msra.mxu0 0
      %354 = vmatpush.bf16.xpose.msra.mxu0 0
      %355 = vmatpush.bf16.xpose.msra.mxu0 0
      %356 = vmatpush.bf16.xpose.msra.mxu0 0
      %357 = vmatpush.bf16.xpose.msra.mxu0 0
      %358 = vmatpush.bf16.xpose.msra.mxu0 %v349
      %359 = vmatmul.bf16.gmra.mxu0 %v346
      %v360 = vpop.f32.mrf.mxu0
      %v361 = vadd.f32 0.0, %v360
      %v362 = vpop.f32.mrf.mxu0
      %v363 = vadd.f32 0.0, %v362
      %364 = vdwg.mxu0
      %v365 = vsel %vm159, %v361, -inf
      %366 = vmax.xlane.f32.xlu0 %v365
      %v367 = vpop.xlane.xlu0 %366
      %v368 = vsel %vm159, %v363, -inf
      %369 = vmax.xlane.f32.xlu0 %v368
      %v370 = vpop.xlane.xlu0 %369
      %v371 = vsub.f32 %v361, %v367
      %v372 = vsub.f32 %v363, %v370
      %v373 = vmul.f32 %v371, 1.442695
      %v374 = vpow.pop %v373
      %v375 = vmul.f32 %v372, 1.442695
      %v376 = vpow.pop %v375
      %v377 = vsel %vm159, %v374, 0.0
      %378 = vadd.xlane.f32.xlu0 %v377
      %v379 = vpop.xlane.xlu0 %378
      %v380 = vsel %vm159, %v376, 0.0
      %381 = vadd.xlane.f32.xlu0 %v380
      %v382 = vpop.xlane.xlu0 %381
      %v383 = vrcp.pop %v379
      %v384 = vrcp.pop %v382
      %v385 = vmul.f32 %v374, %v383
      %v386 = vmul.f32 %v376, %v384
      %v387 = vpack.c.bf16 %v386, %v385
      %388 = vrot.lane.b32.xlu0 %v187, 32
      %v389 = vpop.permute.xlu0 %388
      %v392 = vsel %vm159, %v387, 0
      %394 = vmatpush.bf16.msra.mxu0 0
      %395 = vmatpush.bf16.msra.mxu0 0
      %396 = vmatpush.bf16.msra.mxu0 0
      %397 = vmatpush.bf16.msra.mxu0 0
      %398 = vmatpush.bf16.msra.mxu0 0
      %399 = vmatpush.bf16.msra.mxu0 0
      %400 = vmatpush.bf16.msra.mxu0 0
      %401 = vmatpush.bf16.msra.mxu0 %v389
      %402 = vmatmul.bf16.gmra.mxu0 %v392
      %v403 = vpop.f32.mrf.mxu0
      %v404 = vadd.f32 0.0, %v403
      %v405 = vpop.f32.mrf.mxu0
      %v406 = vadd.f32 0.0, %v405
      %407 = vdwg.mxu0
      %410 = vrot.lane.b32.xlu0 %v270, 32
      %v411 = vpop.permute.xlu0 %410
      %412 = vrot.lane.b32.xlu0 %v272, 32
      %v413 = vpop.permute.xlu0 %412
      %418 = vrot.lane.b32.xlu0 %v337, 64
      %v419 = vpop.permute.xlu0 %418
      %420 = vrot.lane.b32.xlu0 %v339, 64
      %v421 = vpop.permute.xlu0 %420
      %426 = vrot.lane.b32.xlu0 %v404, 96
      %v427 = vpop.permute.xlu0 %426
      %428 = vrot.lane.b32.xlu0 %v406, 96
      %v429 = vpop.permute.xlu0 %428
      %v432 = vsel %vm138, %v202, %v411
      %v433 = vsel %vm138, %v204, %v413
      %vm434 = vcmask 523264
      %v435 = vsel %vm434, %v432, %v419
      %v436 = vsel %vm434, %v433, %v421
      %vm437 = vcmask 785408
      %v438 = vsel %vm437, %v435, %v427
      %v439 = vsel %vm437, %v436, %v429
      %v440 = vpack.c.bf16 %v438, %v438
      %v441 = vpack.c.bf16 %v439, %v439
      %442 = vst [vmem:[%s121] sm:$0xf] %v440
      %443 = vst [vmem:[%s121 + $0x4] sm:$0xf] %v441
      %s444 = smul.u32 2, %s12
      %p445 = scmp.lt.s32.totalorder %s444, 3
      %s446 = scalar_select %p445, %s444, 3
      %s447 = smul.addr %s446, 4
      %s448 = scalar_lea.vmem %s1, %s447
      // Predicated region
      $region25: #{decoder_forward.12} parent=23 // pred_check
        %p449 = pneg %p56
      $region26: #{decoder_forward.12} parent=23 // pred_check_branch
        %451 = sbr.rel (%p449) target = $region28
      $region27: #{decoder_forward.12} parent=23 // pred_region
        %s452 = smul.u32 2, %s12
      $region28: #{decoder_forward.12} parent=23 // pred_fallthru
        _
    $region24: #{decoder_forward.12} parent=5 // pred_fallthru
      _
    %p453 = scmp.le.s32.totalorder 2, %s7
    // Predicated region
    $region29: #{decoder_forward.12} parent=5 // pred_check
      %p454 = pneg %p453
    $region30: #{decoder_forward.12} parent=5 // pred_check_branch
      %456 = sbr.rel (%p454) target = $region32
    $region31: #{decoder_forward.12} parent=5 // pred_region
      %s457 = ssub.s32 %s7, 2
      // Predicated region
      $region33: #{decoder_forward.12} parent=31 // pred_check
        %p458 = pneg %p62
      $region34: #{decoder_forward.12} parent=31 // pred_check_branch
        %460 = sbr.rel (%p458) target = $region36
      $region35: #{decoder_forward.12} parent=31 // pred_region
        %s461 = smul.u32 2, %s13
        %p462 = scmp.lt.s32.totalorder %s461, 3
        %s463 = scalar_select %p462, %s461, 3
        %s464 = smul.addr %s463, 4
        %s465 = scalar_lea.vmem %s1, %s464
      $region36: #{decoder_forward.12} parent=31 // pred_fallthru
        _
    $region32: #{decoder_forward.12} parent=5 // pred_fallthru
      _
  $region6: #{decoder_forward.12} parent=0 // loop_footer
    %s11 = sadd.s32 1, %s7
  $region7: #{decoder_forward.12} parent=0 // loop_footer_branch
    %6 = sbr.rel target = $region3
  $region8: #{decoder_forward.12} parent=0 // loop_exit
    _

// kernel: decoder_forward.11
$region0: #{decoder_forward.11}
  #allocation0 [shape = 'u32[]', space=smem, size = 0x4, offset = 0x4, fixed_abs, tag = 'smem constant byte address 0x4 - core index']
  #allocation1 [shape = 'u32[72,128]{1,0:T(1,128)}', space=vmem, size = 0x9000, scoped, tag = 'internal scratch']
  #allocation2 [shape = 'f32[32,384]{1,0:T(8,128)}', space=vmem, size = 0xc000, scoped, tag = 'scratch operand']
  %s0 = inlined_call_operand.vmem [shape: bf16[32,128], index: 0, kind: input, shape index: {}]
  %s1 = inlined_call_operand.hbm [shape: bf16[128,384], index: 1, kind: input, shape index: {}]
  %s2 = inlined_call_operand.vmem [shape: f32[1,384], index: 2, kind: input, shape index: {}]
  %s3 = inlined_call_operand.vmem [shape: bf16[32,384], index: 3, kind: output, shape index: {}]
  %s4 = sld [smem:[#allocation0]]
  $region34: #{decoder_forward.11} parent=0
    _
  %s6 = ssub.s32 1, %s4
  %s7 = scalar_select 0, %s6, %s4
  $region1: #{decoder_forward.11} parent=0
    #allocation3 [shape = 'u8[98304]{0}', space=vmem, size = 0x18000, scoped, tag = 'input window, operand 1, single buffered']
    #allocation4 [shape = 's32[1]{0}', space=sflag, size = 0x4, scoped, tag = 'scoped memory for decoder_forward.11']
    %8 = vsyncpa [#allocation4], 0
    // Predicated region
    $region2: #{decoder_forward.11} parent=1 // pred_check
      _
    $region3: #{decoder_forward.11} parent=1 // pred_check_branch
      %10 = sbr.rel (0) target = $region5
    $region4: #{decoder_forward.11} parent=1 // pred_region
      _
    $region5: #{decoder_forward.11} parent=1 // pred_fallthru
      _
    // Predicated region
    $region6: #{decoder_forward.11} parent=1 // pred_check
      _
    $region7: #{decoder_forward.11} parent=1 // pred_check_branch
      %12 = sbr.rel (0) target = $region9
    $region8: #{decoder_forward.11} parent=1 // pred_region
      %14 = vsyncadd [#allocation4], 0
      %s15 = sshll.u32 %s1, 4
      %s16 = int_to_ptr.hbm [resolvable:$true] %s15
      %s17 = sshll.u32 [#allocation3], 4
      %s18 = int_to_ptr.vmem [resolvable:$true] %s17
      %23 = dma.hbm_to_vmem [thread:$0]  %s16, 3072, %s18, [#allocation4], 192, 192, 12
    $region9: #{decoder_forward.11} parent=1 // pred_fallthru
      _
    // Predicated region
    $region10: #{decoder_forward.11} parent=1 // pred_check
      _
    $region11: #{decoder_forward.11} parent=1 // pred_check_branch
      %25 = sbr.rel (0) target = $region13
    $region12: #{decoder_forward.11} parent=1 // pred_region
      _
    $region13: #{decoder_forward.11} parent=1 // pred_fallthru
      _
    // Predicated region
    $region14: #{decoder_forward.11} parent=1 // pred_check
      _
    $region15: #{decoder_forward.11} parent=1 // pred_check_branch
      %27 = sbr.rel (0) target = $region17
    $region16: #{decoder_forward.11} parent=1 // pred_region
      %29 = dma.done [#allocation4], 3072
    $region17: #{decoder_forward.11} parent=1 // pred_fallthru
      _
    %p30 = scmp.eq.s32.totalorder 0, 0
    // Predicated region
    $region18: #{decoder_forward.11} parent=1 // pred_check
      %p31 = pneg %p30
    $region19: #{decoder_forward.11} parent=1 // pred_check_branch
      %33 = sbr.rel (%p31) target = $region21
    $region20: #{decoder_forward.11} parent=1 // pred_region
      %34 = vst [vmem:[#allocation2] sm:$0xff] 0.0
      %35 = vst [vmem:[#allocation2 + $0x8] sm:$0xff] 0.0
      %36 = vst [vmem:[#allocation2 + $0x10] sm:$0xff] 0.0
      %37 = vst [vmem:[#allocation2 + $0x18] sm:$0xff] 0.0
      %38 = vst [vmem:[#allocation2 + $0x20] sm:$0xff] 0.0
      %39 = vst [vmem:[#allocation2 + $0x28] sm:$0xff] 0.0
      %40 = vst [vmem:[#allocation2 + $0x30] sm:$0xff] 0.0
      %41 = vst [vmem:[#allocation2 + $0x38] sm:$0xff] 0.0
      %42 = vst [vmem:[#allocation2 + $0x40] sm:$0xff] 0.0
      %43 = vst [vmem:[#allocation2 + $0x48] sm:$0xff] 0.0
      %44 = vst [vmem:[#allocation2 + $0x50] sm:$0xff] 0.0
      %45 = vst [vmem:[#allocation2 + $0x58] sm:$0xff] 0.0
    $region21: #{decoder_forward.11} parent=1 // pred_fallthru
      _
    %v46 = vld [vmem:[%s0] sm:$0xf]
    %v47 = vld [vmem:[%s0 + $0x4] sm:$0xf]
    %v48 = vld [vmem:[%s0 + $0x8] sm:$0xf]
    %v49 = vld [vmem:[%s0 + $0xc] sm:$0xf]
    %v50 = vunpack.c.l.bf16 %v46
    %v51 = vunpack.c.l.bf16 %v47
    %v52 = vunpack.c.l.bf16 %v48
    %v53 = vunpack.c.l.bf16 %v49
    %54 = vadd.xlane.f32.xlu0 %v50
    %v55 = vpop.xlane.xlu0 %54
    %56 = vadd.xlane.f32.xlu0 %v51
    %v57 = vpop.xlane.xlu0 %56
    %58 = vadd.xlane.f32.xlu0 %v52
    %v59 = vpop.xlane.xlu0 %58
    %60 = vadd.xlane.f32.xlu0 %v53
    %v61 = vpop.xlane.xlu0 %60
    %v62 = vrcp.pop 128.0
    %v63 = vmul.f32 128.0, %v62
    %v64 = vsub.f32 1.0, %v63
    %v65 = vmul.f32 %v62, %v64
    %v66 = vadd.f32 %v62, %v65
    %vm67 = vweird.f32 %v62
    %v68 = vsel %vm67, %v62, %v66
    %v69 = vmul.f32 %v55, %v68
    %v70 = vmul.f32 %v57, %v68
    %v71 = vmul.f32 %v59, %v68
    %v72 = vmul.f32 %v61, %v68
    %v73 = vmul.f32 %v50, %v50
    %v74 = vmul.f32 %v51, %v51
    %v75 = vmul.f32 %v52, %v52
    %v76 = vmul.f32 %v53, %v53
    %77 = vadd.xlane.f32.xlu0 %v73
    %v78 = vpop.xlane.xlu0 %77
    %79 = vadd.xlane.f32.xlu0 %v74
    %v80 = vpop.xlane.xlu0 %79
    %81 = vadd.xlane.f32.xlu0 %v75
    %v82 = vpop.xlane.xlu0 %81
    %83 = vadd.xlane.f32.xlu0 %v76
    %v84 = vpop.xlane.xlu0 %83
    %v85 = vmul.f32 %v78, %v68
    %v86 = vmul.f32 %v80, %v68
    %v87 = vmul.f32 %v82, %v68
    %v88 = vmul.f32 %v84, %v68
    %v89 = vmul.f32 %v69, %v69
    %v90 = vmul.f32 %v70, %v70
    %v91 = vmul.f32 %v71, %v71
    %v92 = vmul.f32 %v72, %v72
    %v93 = vsub.f32 %v85, %v89
    %v94 = vsub.f32 %v86, %v90
    %v95 = vsub.f32 %v87, %v91
    %v96 = vsub.f32 %v88, %v92
    %v97 = vmax.f32 %v93, 0.0
    %v98 = vmax.f32 %v94, 0.0
    %v99 = vmax.f32 %v95, 0.0
    %v100 = vmax.f32 %v96, 0.0
    %v101 = vsub.f32 %v50, %v69
    %v102 = vsub.f32 %v51, %v70
    %v103 = vsub.f32 %v52, %v71
    %v104 = vsub.f32 %v53, %v72
    %v105 = vadd.f32 %v97, 1e-06
    %v106 = vadd.f32 %v98, 1e-06
    %v107 = vadd.f32 %v99, 1e-06
    %v108 = vadd.f32 %v100, 1e-06
    %v109 = vrsqrt.pop %v105
    %v110 = vmul.f32 %v109, %v105
    %v111 = vmul.f32 %v110, %v109
    %v112 = vmul.f32 0.5, %v111
    %v113 = vsub.f32 1.5, %v112
    %v114 = vmul.f32 %v109, %v113
    %vm115 = vweird.f32 %v105
    %vm116 = vweird.f32 %v109
    %vm117 = vmor %vm115, %vm116
    %v118 = vsel %vm117, %v109, %v114
    %v119 = vrsqrt.pop %v106
    %v120 = vmul.f32 %v119, %v106
    %v121 = vmul.f32 %v120, %v119
    %v122 = vmul.f32 0.5, %v121
    %v123 = vsub.f32 1.5, %v122
    %v124 = vmul.f32 %v119, %v123
    %vm125 = vweird.f32 %v106
    %vm126 = vweird.f32 %v119
    %vm127 = vmor %vm125, %vm126
    %v128 = vsel %vm127, %v119, %v124
    %v129 = vrsqrt.pop %v107
    %v130 = vmul.f32 %v129, %v107
    %v131 = vmul.f32 %v130, %v129
    %v132 = vmul.f32 0.5, %v131
    %v133 = vsub.f32 1.5, %v132
    %v134 = vmul.f32 %v129, %v133
    %vm135 = vweird.f32 %v107
    %vm136 = vweird.f32 %v129
    %vm137 = vmor %vm135, %vm136
    %v138 = vsel %vm137, %v129, %v134
    %v139 = vrsqrt.pop %v108
    %v140 = vmul.f32 %v139, %v108
    %v141 = vmul.f32 %v140, %v139
    %v142 = vmul.f32 0.5, %v141
    %v143 = vsub.f32 1.5, %v142
    %v144 = vmul.f32 %v139, %v143
    %vm145 = vweird.f32 %v108
    %vm146 = vweird.f32 %v139
    %vm147 = vmor %vm145, %vm146
    %v148 = vsel %vm147, %v139, %v144
    %v149 = vmul.f32 %v101, %v118
    %v150 = vmul.f32 %v102, %v128
    %v151 = vmul.f32 %v103, %v138
    %v152 = vmul.f32 %v104, %v148
    %v153 = vpack.c.bf16 %v150, %v149
    %v154 = vpack.c.bf16 %v152, %v151
    %v155 = vld [vmem:[#allocation2] sm:$0xff]
    %v156 = vld [vmem:[#allocation2 + $0x8] sm:$0xff]
    %v157 = vld [vmem:[#allocation2 + $0x10] sm:$0xff]
    %v158 = vld [vmem:[#allocation2 + $0x18] sm:$0xff]
    %v159 = vld [vmem:[#allocation2 + $0x20] sm:$0xff]
    %v160 = vld [vmem:[#allocation2 + $0x28] sm:$0xff]
    %v161 = vld [vmem:[#allocation2 + $0x30] sm:$0xff]
    %v162 = vld [vmem:[#allocation2 + $0x38] sm:$0xff]
    %v163 = vld [vmem:[#allocation2 + $0x40] sm:$0xff]
    %v164 = vld [vmem:[#allocation2 + $0x48] sm:$0xff]
    %v165 = vld [vmem:[#allocation2 + $0x50] sm:$0xff]
    %v166 = vld [vmem:[#allocation2 + $0x58] sm:$0xff]
    %v167 = vld [vmem:[#allocation3] sm:$0xff]
    %v168 = vld [vmem:[#allocation3 + $0x8] sm:$0xf]
    %v169 = vld [vmem:[#allocation3 + $0xc] sm:$0xff]
    %v170 = vld [vmem:[#allocation3 + $0x14] sm:$0xf]
    %v171 = vld [vmem:[#allocation3 + $0x18] sm:$0xff]
    %v172 = vld [vmem:[#allocation3 + $0x20] sm:$0xf]
    %v173 = vld [vmem:[#allocation3 + $0x24] sm:$0xff]
    %v174 = vld [vmem:[#allocation3 + $0x2c] sm:$0xf]
    %v175 = vld [vmem:[#allocation3 + $0x30] sm:$0xff]
    %v176 = vld [vmem:[#allocation3 + $0x38] sm:$0xf]
    %v177 = vld [vmem:[#allocation3 + $0x3c] sm:$0xff]
    %v178 = vld [vmem:[#allocation3 + $0x44] sm:$0xf]
    %v179 = vld [vmem:[#allocation3 + $0x48] sm:$0xff]
    %v180 = vld [vmem:[#allocation3 + $0x50] sm:$0xf]
    %v181 = vld [vmem:[#allocation3 + $0x54] sm:$0xff]
    %v182 = vld [vmem:[#allocation3 + $0x5c] sm:$0xf]
    %v183 = vld [vmem:[#allocation3 + $0x60] sm:$0xff]
    %v184 = vld [vmem:[#allocation3 + $0x68] sm:$0xf]
    %v185 = vld [vmem:[#allocation3 + $0x6c] sm:$0xff]
    %v186 = vld [vmem:[#allocation3 + $0x74] sm:$0xf]
    %v187 = vld [vmem:[#allocation3 + $0x78] sm:$0xff]
    %v188 = vld [vmem:[#allocation3 + $0x80] sm:$0xf]
    %v189 = vld [vmem:[#allocation3 + $0x84] sm:$0xff]
    %v190 = vld [vmem:[#allocation3 + $0x8c] sm:$0xf]
    %v191 = vld [vmem:[#allocation3 + $0x90] sm:$0xff]
    %v192 = vld [vmem:[#allocation3 + $0x98] sm:$0xf]
    %v193 = vld [vmem:[#allocation3 + $0x9c] sm:$0xff]
    %v194 = vld [vmem:[#allocation3 + $0xa4] sm:$0xf]
    %v195 = vld [vmem:[#allocation3 + $0xa8] sm:$0xff]
    %v196 = vld [vmem:[#allocation3 + $0xb0] sm:$0xf]
    %v197 = vld [vmem:[#allocation3 + $0xb4] sm:$0xff]
    %v198 = vld [vmem:[#allocation3 + $0xbc] sm:$0xf]
    %v231 = vunpack.c.l.b16 %v167
    %v232 = vunpack.c.h.b16 %v167
    %v233 = vunpack.c.l.b16 %v168
    %v234 = vunpack.c.l.b16 %v169
    %v235 = vunpack.c.h.b16 %v169
    %v236 = vunpack.c.l.b16 %v170
    %v237 = vunpack.c.l.b16 %v171
    %v238 = vunpack.c.h.b16 %v171
    %v239 = vunpack.c.l.b16 %v172
    %v240 = vunpack.c.l.b16 %v173
    %v241 = vunpack.c.h.b16 %v173
    %v242 = vunpack.c.l.b16 %v174
    %v243 = vunpack.c.l.b16 %v175
    %v244 = vunpack.c.h.b16 %v175
    %v245 = vunpack.c.l.b16 %v176
    %v246 = vunpack.c.l.b16 %v177
    %v247 = vunpack.c.h.b16 %v177
    %v248 = vunpack.c.l.b16 %v178
    %v249 = vunpack.c.l.b16 %v179
    %v250 = vunpack.c.h.b16 %v179
    %v251 = vunpack.c.l.b16 %v180
    %v252 = vunpack.c.l.b16 %v181
    %v253 = vunpack.c.h.b16 %v181
    %v254 = vunpack.c.l.b16 %v182
    %v255 = vunpack.c.l.b16 %v183
    %v256 = vunpack.c.h.b16 %v183
    %v257 = vunpack.c.l.b16 %v184
    %v258 = vunpack.c.l.b16 %v185
    %v259 = vunpack.c.h.b16 %v185
    %v260 = vunpack.c.l.b16 %v186
    %v261 = vunpack.c.l.b16 %v187
    %v262 = vunpack.c.h.b16 %v187
    %v263 = vunpack.c.l.b16 %v188
    %v264 = vunpack.c.l.b16 %v189
    %v265 = vunpack.c.h.b16 %v189
    %v266 = vunpack.c.l.b16 %v190
    %v267 = vunpack.c.l.b16 %v191
    %v268 = vunpack.c.h.b16 %v191
    %v269 = vunpack.c.l.b16 %v192
    %v270 = vunpack.c.l.b16 %v193
    %v271 = vunpack.c.h.b16 %v193
    %v272 = vunpack.c.l.b16 %v194
    %v273 = vunpack.c.l.b16 %v195
    %v274 = vunpack.c.h.b16 %v195
    %v275 = vunpack.c.l.b16 %v196
    %v276 = vunpack.c.l.b16 %v197
    %v277 = vunpack.c.h.b16 %v197
    %v278 = vunpack.c.l.b16 %v198
    %v279 = vpack.c.b16 %v234, %v231
    %v280 = vpack.c.b16 %v235, %v232
    %v281 = vpack.c.b16 %v236, %v233
    %v282 = vpack.c.b16 %v240, %v237
    %v283 = vpack.c.b16 %v241, %v238
    %v284 = vpack.c.b16 %v242, %v239
    %v285 = vpack.c.b16 %v246, %v243
    %v286 = vpack.c.b16 %v247, %v244
    %v287 = vpack.c.b16 %v248, %v245
    %v288 = vpack.c.b16 %v252, %v249
    %v289 = vpack.c.b16 %v253, %v250
    %v290 = vpack.c.b16 %v254, %v251
    %v291 = vpack.c.b16 %v258, %v255
    %v292 = vpack.c.b16 %v259, %v256
    %v293 = vpack.c.b16 %v260, %v257
    %v294 = vpack.c.b16 %v264, %v261
    %v295 = vpack.c.b16 %v265, %v262
    %v296 = vpack.c.b16 %v266, %v263
    %v297 = vpack.c.b16 %v270, %v267
    %v298 = vpack.c.b16 %v271, %v268
    %v299 = vpack.c.b16 %v272, %v269
    %v300 = vpack.c.b16 %v276, %v273
    %v301 = vpack.c.b16 %v277, %v274
    %v302 = vpack.c.b16 %v278, %v275
    %327 = vmatpush.bf16.msra.mxu0 %v300
    %328 = vmatpush.bf16.msra.mxu0 %v297
    %329 = vmatpush.bf16.msra.mxu0 %v294
    %330 = vmatpush.bf16.msra.mxu0 %v291
    %331 = vmatpush.bf16.msra.mxu0 %v288
    %332 = vmatpush.bf16.msra.mxu0 %v285
    %333 = vmatpush.bf16.msra.mxu0 %v282
    %334 = vmatpush.bf16.msra.mxu0 %v279
    %335 = vmatmul.bf16.gmra.mxu0 %v153
    %v336 = vpop.f32.mrf.mxu0
    %v337 = vadd.f32 0.0, %v336
    %v338 = vpop.f32.mrf.mxu0
    %v339 = vadd.f32 0.0, %v338
    %340 = vmatmul.bf16.gmra.mxu0 %v154
    %v341 = vpop.f32.mrf.mxu0
    %v342 = vadd.f32 0.0, %v341
    %v343 = vpop.f32.mrf.mxu0
    %v344 = vadd.f32 0.0, %v343
    %345 = vdwg.mxu0
    %346 = vmatpush.bf16.msra.mxu0 %v301
    %347 = vmatpush.bf16.msra.mxu0 %v298
    %348 = vmatpush.bf16.msra.mxu0 %v295
    %349 = vmatpush.bf16.msra.mxu0 %v292
    %350 = vmatpush.bf16.msra.mxu0 %v289
    %351 = vmatpush.bf16.msra.mxu0 %v286
    %352 = vmatpush.bf16.msra.mxu0 %v283
    %353 = vmatpush.bf16.msra.mxu0 %v280
    %354 = vmatmul.bf16.gmra.mxu0 %v153
    %v355 = vpop.f32.mrf.mxu0
    %v356 = vadd.f32 0.0, %v355
    %v357 = vpop.f32.mrf.mxu0
    %v358 = vadd.f32 0.0, %v357
    %359 = vmatmul.bf16.gmra.mxu0 %v154
    %v360 = vpop.f32.mrf.mxu0
    %v361 = vadd.f32 0.0, %v360
    %v362 = vpop.f32.mrf.mxu0
    %v363 = vadd.f32 0.0, %v362
    %364 = vdwg.mxu0
    %365 = vmatpush.bf16.msra.mxu0 %v302
    %366 = vmatpush.bf16.msra.mxu0 %v299
    %367 = vmatpush.bf16.msra.mxu0 %v296
    %368 = vmatpush.bf16.msra.mxu0 %v293
    %369 = vmatpush.bf16.msra.mxu0 %v290
    %370 = vmatpush.bf16.msra.mxu0 %v287
    %371 = vmatpush.bf16.msra.mxu0 %v284
    %372 = vmatpush.bf16.msra.mxu0 %v281
    %373 = vmatmul.bf16.gmra.mxu0 %v153
    %v374 = vpop.f32.mrf.mxu0
    %v375 = vadd.f32 0.0, %v374
    %v376 = vpop.f32.mrf.mxu0
    %v377 = vadd.f32 0.0, %v376
    %378 = vmatmul.bf16.gmra.mxu0 %v154
    %v379 = vpop.f32.mrf.mxu0
    %v380 = vadd.f32 0.0, %v379
    %v381 = vpop.f32.mrf.mxu0
    %v382 = vadd.f32 0.0, %v381
    %383 = vdwg.mxu0
    %v384 = vadd.f32 %v155, %v337
    %v385 = vadd.f32 %v156, %v356
    %v386 = vadd.f32 %v157, %v375
    %v387 = vadd.f32 %v158, %v339
    %v388 = vadd.f32 %v159, %v358
    %v389 = vadd.f32 %v160, %v377
    %v390 = vadd.f32 %v161, %v342
    %v391 = vadd.f32 %v162, %v361
    %v392 = vadd.f32 %v163, %v380
    %v393 = vadd.f32 %v164, %v344
    %v394 = vadd.f32 %v165, %v363
    %v395 = vadd.f32 %v166, %v382
    %396 = vst [vmem:[#allocation2] sm:$0xff] %v384
    %397 = vst [vmem:[#allocation2 + $0x8] sm:$0xff] %v385
    %398 = vst [vmem:[#allocation2 + $0x10] sm:$0xff] %v386
    %399 = vst [vmem:[#allocation2 + $0x18] sm:$0xff] %v387
    %400 = vst [vmem:[#allocation2 + $0x20] sm:$0xff] %v388
    %401 = vst [vmem:[#allocation2 + $0x28] sm:$0xff] %v389
    %402 = vst [vmem:[#allocation2 + $0x30] sm:$0xff] %v390
    %403 = vst [vmem:[#allocation2 + $0x38] sm:$0xff] %v391
    %404 = vst [vmem:[#allocation2 + $0x40] sm:$0xff] %v392
    %405 = vst [vmem:[#allocation2 + $0x48] sm:$0xff] %v393
    %406 = vst [vmem:[#allocation2 + $0x50] sm:$0xff] %v394
    %407 = vst [vmem:[#allocation2 + $0x58] sm:$0xff] %v395
    // Predicated region
    $region22: #{decoder_forward.11} parent=1 // pred_check
      %p408 = pneg %p30
    $region23: #{decoder_forward.11} parent=1 // pred_check_branch
      %410 = sbr.rel (%p408) target = $region25
    $region24: #{decoder_forward.11} parent=1 // pred_region
      %v411 = vld [vmem:[#allocation2] sm:$0xff]
      %v412 = vld [vmem:[#allocation2 + $0x8] sm:$0xff]
      %v413 = vld [vmem:[#allocation2 + $0x10] sm:$0xff]
      %v414 = vld [vmem:[#allocation2 + $0x18] sm:$0xff]
      %v415 = vld [vmem:[#allocation2 + $0x20] sm:$0xff]
      %v416 = vld [vmem:[#allocation2 + $0x28] sm:$0xff]
      %v417 = vld [vmem:[#allocation2 + $0x30] sm:$0xff]
      %v418 = vld [vmem:[#allocation2 + $0x38] sm:$0xff]
      %v419 = vld [vmem:[#allocation2 + $0x40] sm:$0xff]
      %v420 = vld [vmem:[#allocation2 + $0x48] sm:$0xff]
      %v421 = vld [vmem:[#allocation2 + $0x50] sm:$0xff]
      %v422 = vld [vmem:[#allocation2 + $0x58] sm:$0xff]
      %v423 = vld [vmem:[%s2] sm:$0x7]
      %v425 = vperm.slane %v423, 0
      %v426 = vperm.slane %v423, 1
      %v427 = vperm.slane %v423, 2
      %v431 = vadd.f32 %v411, %v425
      %v432 = vadd.f32 %v412, %v426
      %v433 = vadd.f32 %v413, %v427
      %v434 = vadd.f32 %v414, %v425
      %v435 = vadd.f32 %v415, %v426
      %v436 = vadd.f32 %v416, %v427
      %v437 = vadd.f32 %v417, %v425
      %v438 = vadd.f32 %v418, %v426
      %v439 = vadd.f32 %v419, %v427
      %v440 = vadd.f32 %v420, %v425
      %v441 = vadd.f32 %v421, %v426
      %v442 = vadd.f32 %v422, %v427
      %v443 = vpack.c.bf16 %v432, %v431
      %v444 = vpack.c.bf16 %v433, %v433
      %v445 = vpack.c.bf16 %v435, %v434
      %v446 = vpack.c.bf16 %v436, %v436
      %v447 = vpack.c.bf16 %v438, %v437
      %v448 = vpack.c.bf16 %v439, %v439
      %v449 = vpack.c.bf16 %v441, %v440
      %v450 = vpack.c.bf16 %v442, %v442
      %451 = vst [vmem:[%s3] sm:$0xff] %v443
      %452 = vst [vmem:[%s3 + $0x8] sm:$0xf] %v444
      %453 = vst [vmem:[%s3 + $0xc] sm:$0xff] %v445
      %454 = vst [vmem:[%s3 + $0x14] sm:$0xf] %v446
      %455 = vst [vmem:[%s3 + $0x18] sm:$0xff] %v447
      %456 = vst [vmem:[%s3 + $0x20] sm:$0xf] %v448
      %457 = vst [vmem:[%s3 + $0x24] sm:$0xff] %v449
      %458 = vst [vmem:[%s3 + $0x2c] sm:$0xf] %v450
    $region25: #{decoder_forward.11} parent=1 // pred_fallthru
      _
    // Predicated region
    $region26: #{decoder_forward.11} parent=1 // pred_check
      _
    $region27: #{decoder_forward.11} parent=1 // pred_check_branch
      %460 = sbr.rel (0) target = $region29
    $region28: #{decoder_forward.11} parent=1 // pred_region
      _
    $region29: #{decoder_forward.11} parent=1 // pred_fallthru
      _
    // Predicated region
    $region30: #{decoder_forward.11} parent=1 // pred_check
      _
    $region31: #{decoder_forward.11} parent=1 // pred_check_branch
      %462 = sbr.rel (0) target = $region33
    $region32: #{decoder_forward.11} parent=1 // pred_region
      _
    $region33: #{decoder_forward.11} parent=1 // pred_fallthru
      _
    %463 = vsyncpa [#allocation4], 1

// kernel: decoder_forward.13
$region0: #{decoder_forward.13}
  #allocation0 [shape = 'u32[]', space=smem, size = 0x4, offset = 0x4, fixed_abs, tag = 'smem constant byte address 0x4 - core index']
  #allocation1 [shape = 'u32[72,128]{1,0:T(1,128)}', space=vmem, size = 0x9000, scoped, tag = 'internal scratch']
  #allocation2 [shape = 'f32[32,128]{1,0:T(8,128)}', space=vmem, size = 0x4000, scoped, tag = 'scratch operand']
  %s0 = inlined_call_operand.vmem [shape: bf16[32,128], index: 0, kind: input, shape index: {}]
  %s1 = inlined_call_operand.hbm [shape: bf16[128,128], index: 1, kind: input, shape index: {}]
  %s2 = inlined_call_operand.vmem [shape: f32[1,128], index: 2, kind: input, shape index: {}]
  %s3 = inlined_call_operand.vmem [shape: bf16[32,128], index: 3, kind: input, shape index: {}]
  %s4 = inlined_call_operand.vmem [shape: bf16[32,128], index: 4, kind: output, shape index: {}]
  %s5 = sld [smem:[#allocation0]]
  $region38: #{decoder_forward.13} parent=0
    _
  %s7 = ssub.s32 1, %s5
  %s8 = scalar_select 0, %s7, %s5
  $region1: #{decoder_forward.13} parent=0
    #allocation3 [shape = 'u8[32768]{0}', space=vmem, size = 0x8000, scoped, tag = 'input window, operand 1, single buffered']
    #allocation4 [shape = 's32[1]{0}', space=sflag, size = 0x4, scoped, tag = 'scoped memory for decoder_forward.13']
    %9 = vsyncpa [#allocation4], 0
    // Predicated region
    $region2: #{decoder_forward.13} parent=1 // pred_check
      _
    $region3: #{decoder_forward.13} parent=1 // pred_check_branch
      %11 = sbr.rel (0) target = $region5
    $region4: #{decoder_forward.13} parent=1 // pred_region
      _
    $region5: #{decoder_forward.13} parent=1 // pred_fallthru
      _
    // Predicated region
    $region6: #{decoder_forward.13} parent=1 // pred_check
      _
    $region7: #{decoder_forward.13} parent=1 // pred_check_branch
      %13 = sbr.rel (0) target = $region9
    $region8: #{decoder_forward.13} parent=1 // pred_region
      %15 = vsyncadd [#allocation4], 0
      %s16 = sshll.u32 %s1, 4
      %s17 = int_to_ptr.hbm [resolvable:$true] %s16
      %s18 = sshll.u32 [#allocation3], 4
      %s19 = int_to_ptr.vmem [resolvable:$true] %s18
      %24 = dma.hbm_to_vmem [thread:$0]  %s17, 1024, %s19, [#allocation4], 64, 64, 4
    $region9: #{decoder_forward.13} parent=1 // pred_fallthru
      _
    // Predicated region
    $region10: #{decoder_forward.13} parent=1 // pred_check
      _
    $region11: #{decoder_forward.13} parent=1 // pred_check_branch
      %26 = sbr.rel (0) target = $region13
    $region12: #{decoder_forward.13} parent=1 // pred_region
      _
    $region13: #{decoder_forward.13} parent=1 // pred_fallthru
      _
    // Predicated region
    $region14: #{decoder_forward.13} parent=1 // pred_check
      _
    $region15: #{decoder_forward.13} parent=1 // pred_check_branch
      %28 = sbr.rel (0) target = $region17
    $region16: #{decoder_forward.13} parent=1 // pred_region
      _
    $region17: #{decoder_forward.13} parent=1 // pred_fallthru
      _
    // Predicated region
    $region18: #{decoder_forward.13} parent=1 // pred_check
      _
    $region19: #{decoder_forward.13} parent=1 // pred_check_branch
      %30 = sbr.rel (0) target = $region21
    $region20: #{decoder_forward.13} parent=1 // pred_region
      %32 = dma.done [#allocation4], 1024
    $region21: #{decoder_forward.13} parent=1 // pred_fallthru
      _
    %p33 = scmp.eq.s32.totalorder 0, 0
    // Predicated region
    $region22: #{decoder_forward.13} parent=1 // pred_check
      %p34 = pneg %p33
    $region23: #{decoder_forward.13} parent=1 // pred_check_branch
      %36 = sbr.rel (%p34) target = $region25
    $region24: #{decoder_forward.13} parent=1 // pred_region
      %37 = vst [vmem:[#allocation2] sm:$0xff] 0.0
      %38 = vst [vmem:[#allocation2 + $0x8] sm:$0xff] 0.0
      %39 = vst [vmem:[#allocation2 + $0x10] sm:$0xff] 0.0
      %40 = vst [vmem:[#allocation2 + $0x18] sm:$0xff] 0.0
    $region25: #{decoder_forward.13} parent=1 // pred_fallthru
      _
    %v41 = vld [vmem:[%s0] sm:$0xf]
    %v42 = vld [vmem:[%s0 + $0x4] sm:$0xf]
    %v43 = vld [vmem:[%s0 + $0x8] sm:$0xf]
    %v44 = vld [vmem:[%s0 + $0xc] sm:$0xf]
    %v45 = vld [vmem:[#allocation2] sm:$0xff]
    %v46 = vld [vmem:[#allocation2 + $0x8] sm:$0xff]
    %v47 = vld [vmem:[#allocation2 + $0x10] sm:$0xff]
    %v48 = vld [vmem:[#allocation2 + $0x18] sm:$0xff]
    %v49 = vld [vmem:[#allocation3] sm:$0xf]
    %v50 = vld [vmem:[#allocation3 + $0x4] sm:$0xf]
    %v51 = vld [vmem:[#allocation3 + $0x8] sm:$0xf]
    %v52 = vld [vmem:[#allocation3 + $0xc] sm:$0xf]
    %v53 = vld [vmem:[#allocation3 + $0x10] sm:$0xf]
    %v54 = vld [vmem:[#allocation3 + $0x14] sm:$0xf]
    %v55 = vld [vmem:[#allocation3 + $0x18] sm:$0xf]
    %v56 = vld [vmem:[#allocation3 + $0x1c] sm:$0xf]
    %v57 = vld [vmem:[#allocation3 + $0x20] sm:$0xf]
    %v58 = vld [vmem:[#allocation3 + $0x24] sm:$0xf]
    %v59 = vld [vmem:[#allocation3 + $0x28] sm:$0xf]
    %v60 = vld [vmem:[#allocation3 + $0x2c] sm:$0xf]
    %v61 = vld [vmem:[#allocation3 + $0x30] sm:$0xf]
    %v62 = vld [vmem:[#allocation3 + $0x34] sm:$0xf]
    %v63 = vld [vmem:[#allocation3 + $0x38] sm:$0xf]
    %v64 = vld [vmem:[#allocation3 + $0x3c] sm:$0xf]
    %v69 = vunpack.c.l.b16 %v41
    %v70 = vunpack.c.l.b16 %v42
    %v71 = vunpack.c.l.b16 %v43
    %v72 = vunpack.c.l.b16 %v44
    %v73 = vpack.c.b16 %v70, %v69
    %v74 = vpack.c.b16 %v72, %v71
    %v93 = vunpack.c.l.b16 %v49
    %v94 = vunpack.c.l.b16 %v50
    %v95 = vunpack.c.l.b16 %v51
    %v96 = vunpack.c.l.b16 %v52
    %v97 = vunpack.c.l.b16 %v53
    %v98 = vunpack.c.l.b16 %v54
    %v99 = vunpack.c.l.b16 %v55
    %v100 = vunpack.c.l.b16 %v56
    %v101 = vunpack.c.l.b16 %v57
    %v102 = vunpack.c.l.b16 %v58
    %v103 = vunpack.c.l.b16 %v59
    %v104 = vunpack.c.l.b16 %v60
    %v105 = vunpack.c.l.b16 %v61
    %v106 = vunpack.c.l.b16 %v62
    %v107 = vunpack.c.l.b16 %v63
    %v108 = vunpack.c.l.b16 %v64
    %v109 = vpack.c.b16 %v94, %v93
    %v110 = vpack.c.b16 %v96, %v95
    %v111 = vpack.c.b16 %v98, %v97
    %v112 = vpack.c.b16 %v100, %v99
    %v113 = vpack.c.b16 %v102, %v101
    %v114 = vpack.c.b16 %v104, %v103
    %v115 = vpack.c.b16 %v106, %v105
    %v116 = vpack.c.b16 %v108, %v107
    %125 = vmatpush.bf16.msra.mxu0 %v116
    %126 = vmatpush.bf16.msra.mxu0 %v115
    %127 = vmatpush.bf16.msra.mxu0 %v114
    %128 = vmatpush.bf16.msra.mxu0 %v113
    %129 = vmatpush.bf16.msra.mxu0 %v112
    %130 = vmatpush.bf16.msra.mxu0 %v111
    %131 = vmatpush.bf16.msra.mxu0 %v110
    %132 = vmatpush.bf16.msra.mxu0 %v109
    %133 = vmatmul.bf16.gmra.mxu0 %v73
    %v134 = vpop.f32.mrf.mxu0
    %v135 = vadd.f32 0.0, %v134
    %v136 = vpop.f32.mrf.mxu0
    %v137 = vadd.f32 0.0, %v136
    %138 = vmatmul.bf16.gmra.mxu0 %v74
    %v139 = vpop.f32.mrf.mxu0
    %v140 = vadd.f32 0.0, %v139
    %v141 = vpop.f32.mrf.mxu0
    %v142 = vadd.f32 0.0, %v141
    %143 = vdwg.mxu0
    %v144 = vadd.f32 %v45, %v135
    %v145 = vadd.f32 %v46, %v137
    %v146 = vadd.f32 %v47, %v140
    %v147 = vadd.f32 %v48, %v142
    %148 = vst [vmem:[#allocation2] sm:$0xff] %v144
    %149 = vst [vmem:[#allocation2 + $0x8] sm:$0xff] %v145
    %150 = vst [vmem:[#allocation2 + $0x10] sm:$0xff] %v146
    %151 = vst [vmem:[#allocation2 + $0x18] sm:$0xff] %v147
    // Predicated region
    $region26: #{decoder_forward.13} parent=1 // pred_check
      %p152 = pneg %p33
    $region27: #{decoder_forward.13} parent=1 // pred_check_branch
      %154 = sbr.rel (%p152) target = $region29
    $region28: #{decoder_forward.13} parent=1 // pred_region
      %v155 = vld [vmem:[#allocation2] sm:$0xff]
      %v156 = vld [vmem:[#allocation2 + $0x8] sm:$0xff]
      %v157 = vld [vmem:[#allocation2 + $0x10] sm:$0xff]
      %v158 = vld [vmem:[#allocation2 + $0x18] sm:$0xff]
      %v159 = vld [vmem:[%s2] sm:$0x1]
      %v161 = vperm.slane %v159, 0
      %v163 = vadd.f32 %v155, %v161
      %v164 = vadd.f32 %v156, %v161
      %v165 = vadd.f32 %v157, %v161
      %v166 = vadd.f32 %v158, %v161
      %v167 = vld [vmem:[%s3] sm:$0xf]
      %v168 = vld [vmem:[%s3 + $0x4] sm:$0xf]
      %v169 = vld [vmem:[%s3 + $0x8] sm:$0xf]
      %v170 = vld [vmem:[%s3 + $0xc] sm:$0xf]
      %v171 = vunpack.c.l.bf16 %v167
      %v172 = vunpack.c.l.bf16 %v168
      %v173 = vunpack.c.l.bf16 %v169
      %v174 = vunpack.c.l.bf16 %v170
      %v175 = vadd.f32 %v163, %v171
      %v176 = vadd.f32 %v164, %v172
      %v177 = vadd.f32 %v165, %v173
      %v178 = vadd.f32 %v166, %v174
      %v179 = vpack.c.bf16 %v175, %v175
      %v180 = vpack.c.bf16 %v176, %v176
      %v181 = vpack.c.bf16 %v177, %v177
      %v182 = vpack.c.bf16 %v178, %v178
      %183 = vst [vmem:[%s4] sm:$0xf] %v179
      %184 = vst [vmem:[%s4 + $0x4] sm:$0xf] %v180
      %185 = vst [vmem:[%s4 + $0x8] sm:$0xf] %v181
      %186 = vst [vmem:[%s4 + $0xc] sm:$0xf] %v182
    $region29: #{decoder_forward.13} parent=1 // pred_fallthru
      _
    // Predicated region
    $region30: #{decoder_forward.13} parent=1 // pred_check
      _
    $region31: #{decoder_forward.13} parent=1 // pred_check_branch
      %188 = sbr.rel (0) target = $region33
    $region32: #{decoder_forward.13} parent=1 // pred_region
      _
    $region33: #{decoder_forward.13} parent=1 // pred_fallthru
      _
    // Predicated region
    $region34: #{decoder_forward.13} parent=1 // pred_check
      _
    $region35: #{decoder_forward.13} parent=1 // pred_check_branch
      %190 = sbr.rel (0) target = $region37
    $region36: #{decoder_forward.13} parent=1 // pred_region
      _
    $region37: #{decoder_forward.13} parent=1 // pred_fallthru
      _
    %191 = vsyncpa [#allocation4], 1

// kernel: decoder_forward.14
$region0: #{decoder_forward.14}
  #allocation0 [shape = 'u32[]', space=smem, size = 0x4, offset = 0x4, fixed_abs, tag = 'smem constant byte address 0x4 - core index']
  #allocation1 [shape = 'u32[72,128]{1,0:T(1,128)}', space=vmem, size = 0x9000, scoped, tag = 'internal scratch']
  #allocation2 [shape = 'f32[32,512]{1,0:T(8,128)}', space=vmem, size = 0x10000, scoped, tag = 'scratch operand']
  %s0 = inlined_call_operand.vmem [shape: bf16[32,128], index: 0, kind: input, shape index: {}]
  %s1 = inlined_call_operand.hbm [shape: bf16[128,512], index: 1, kind: input, shape index: {}]
  %s2 = inlined_call_operand.vmem [shape: f32[1,512], index: 2, kind: input, shape index: {}]
  %s3 = inlined_call_operand.vmem [shape: bf16[32,512], index: 3, kind: output, shape index: {}]
  %s4 = sld [smem:[#allocation0]]
  $region34: #{decoder_forward.14} parent=0
    _
  %s6 = ssub.s32 1, %s4
  %s7 = scalar_select 0, %s6, %s4
  $region1: #{decoder_forward.14} parent=0
    #allocation3 [shape = 'u8[131072]{0}', space=vmem, size = 0x20000, scoped, tag = 'input window, operand 1, single buffered']
    #allocation4 [shape = 's32[1]{0}', space=sflag, size = 0x4, scoped, tag = 'scoped memory for decoder_forward.14']
    %8 = vsyncpa [#allocation4], 0
    // Predicated region
    $region2: #{decoder_forward.14} parent=1 // pred_check
      _
    $region3: #{decoder_forward.14} parent=1 // pred_check_branch
      %10 = sbr.rel (0) target = $region5
    $region4: #{decoder_forward.14} parent=1 // pred_region
      _
    $region5: #{decoder_forward.14} parent=1 // pred_fallthru
      _
    // Predicated region
    $region6: #{decoder_forward.14} parent=1 // pred_check
      _
    $region7: #{decoder_forward.14} parent=1 // pred_check_branch
      %12 = sbr.rel (0) target = $region9
    $region8: #{decoder_forward.14} parent=1 // pred_region
      %14 = vsyncadd [#allocation4], 0
      %s15 = sshll.u32 %s1, 4
      %s16 = int_to_ptr.hbm [resolvable:$true] %s15
      %s17 = sshll.u32 [#allocation3], 4
      %s18 = int_to_ptr.vmem [resolvable:$true] %s17
      %23 = dma.hbm_to_vmem [thread:$0]  %s16, 4096, %s18, [#allocation4], 256, 256, 16
    $region9: #{decoder_forward.14} parent=1 // pred_fallthru
      _
    // Predicated region
    $region10: #{decoder_forward.14} parent=1 // pred_check
      _
    $region11: #{decoder_forward.14} parent=1 // pred_check_branch
      %25 = sbr.rel (0) target = $region13
    $region12: #{decoder_forward.14} parent=1 // pred_region
      _
    $region13: #{decoder_forward.14} parent=1 // pred_fallthru
      _
    // Predicated region
    $region14: #{decoder_forward.14} parent=1 // pred_check
      _
    $region15: #{decoder_forward.14} parent=1 // pred_check_branch
      %27 = sbr.rel (0) target = $region17
    $region16: #{decoder_forward.14} parent=1 // pred_region
      %29 = dma.done [#allocation4], 4096
    $region17: #{decoder_forward.14} parent=1 // pred_fallthru
      _
    %p30 = scmp.eq.s32.totalorder 0, 0
    // Predicated region
    $region18: #{decoder_forward.14} parent=1 // pred_check
      %p31 = pneg %p30
    $region19: #{decoder_forward.14} parent=1 // pred_check_branch
      %33 = sbr.rel (%p31) target = $region21
    $region20: #{decoder_forward.14} parent=1 // pred_region
      %34 = vst [vmem:[#allocation2] sm:$0xff] 0.0
      %35 = vst [vmem:[#allocation2 + $0x8] sm:$0xff] 0.0
      %36 = vst [vmem:[#allocation2 + $0x10] sm:$0xff] 0.0
      %37 = vst [vmem:[#allocation2 + $0x18] sm:$0xff] 0.0
      %38 = vst [vmem:[#allocation2 + $0x20] sm:$0xff] 0.0
      %39 = vst [vmem:[#allocation2 + $0x28] sm:$0xff] 0.0
      %40 = vst [vmem:[#allocation2 + $0x30] sm:$0xff] 0.0
      %41 = vst [vmem:[#allocation2 + $0x38] sm:$0xff] 0.0
      %42 = vst [vmem:[#allocation2 + $0x40] sm:$0xff] 0.0
      %43 = vst [vmem:[#allocation2 + $0x48] sm:$0xff] 0.0
      %44 = vst [vmem:[#allocation2 + $0x50] sm:$0xff] 0.0
      %45 = vst [vmem:[#allocation2 + $0x58] sm:$0xff] 0.0
      %46 = vst [vmem:[#allocation2 + $0x60] sm:$0xff] 0.0
      %47 = vst [vmem:[#allocation2 + $0x68] sm:$0xff] 0.0
      %48 = vst [vmem:[#allocation2 + $0x70] sm:$0xff] 0.0
      %49 = vst [vmem:[#allocation2 + $0x78] sm:$0xff] 0.0
    $region21: #{decoder_forward.14} parent=1 // pred_fallthru
      _
    %v50 = vld [vmem:[%s0] sm:$0xf]
    %v51 = vld [vmem:[%s0 + $0x4] sm:$0xf]
    %v52 = vld [vmem:[%s0 + $0x8] sm:$0xf]
    %v53 = vld [vmem:[%s0 + $0xc] sm:$0xf]
    %v54 = vunpack.c.l.bf16 %v50
    %v55 = vunpack.c.l.bf16 %v51
    %v56 = vunpack.c.l.bf16 %v52
    %v57 = vunpack.c.l.bf16 %v53
    %58 = vadd.xlane.f32.xlu0 %v54
    %v59 = vpop.xlane.xlu0 %58
    %60 = vadd.xlane.f32.xlu0 %v55
    %v61 = vpop.xlane.xlu0 %60
    %62 = vadd.xlane.f32.xlu0 %v56
    %v63 = vpop.xlane.xlu0 %62
    %64 = vadd.xlane.f32.xlu0 %v57
    %v65 = vpop.xlane.xlu0 %64
    %v66 = vrcp.pop 128.0
    %v67 = vmul.f32 128.0, %v66
    %v68 = vsub.f32 1.0, %v67
    %v69 = vmul.f32 %v66, %v68
    %v70 = vadd.f32 %v66, %v69
    %vm71 = vweird.f32 %v66
    %v72 = vsel %vm71, %v66, %v70
    %v73 = vmul.f32 %v59, %v72
    %v74 = vmul.f32 %v61, %v72
    %v75 = vmul.f32 %v63, %v72
    %v76 = vmul.f32 %v65, %v72
    %v77 = vmul.f32 %v54, %v54
    %v78 = vmul.f32 %v55, %v55
    %v79 = vmul.f32 %v56, %v56
    %v80 = vmul.f32 %v57, %v57
    %81 = vadd.xlane.f32.xlu0 %v77
    %v82 = vpop.xlane.xlu0 %81
    %83 = vadd.xlane.f32.xlu0 %v78
    %v84 = vpop.xlane.xlu0 %83
    %85 = vadd.xlane.f32.xlu0 %v79
    %v86 = vpop.xlane.xlu0 %85
    %87 = vadd.xlane.f32.xlu0 %v80
    %v88 = vpop.xlane.xlu0 %87
    %v89 = vmul.f32 %v82, %v72
    %v90 = vmul.f32 %v84, %v72
    %v91 = vmul.f32 %v86, %v72
    %v92 = vmul.f32 %v88, %v72
    %v93 = vmul.f32 %v73, %v73
    %v94 = vmul.f32 %v74, %v74
    %v95 = vmul.f32 %v75, %v75
    %v96 = vmul.f32 %v76, %v76
    %v97 = vsub.f32 %v89, %v93
    %v98 = vsub.f32 %v90, %v94
    %v99 = vsub.f32 %v91, %v95
    %v100 = vsub.f32 %v92, %v96
    %v101 = vmax.f32 %v97, 0.0
    %v102 = vmax.f32 %v98, 0.0
    %v103 = vmax.f32 %v99, 0.0
    %v104 = vmax.f32 %v100, 0.0
    %v105 = vsub.f32 %v54, %v73
    %v106 = vsub.f32 %v55, %v74
    %v107 = vsub.f32 %v56, %v75
    %v108 = vsub.f32 %v57, %v76
    %v109 = vadd.f32 %v101, 1e-06
    %v110 = vadd.f32 %v102, 1e-06
    %v111 = vadd.f32 %v103, 1e-06
    %v112 = vadd.f32 %v104, 1e-06
    %v113 = vrsqrt.pop %v109
    %v114 = vmul.f32 %v113, %v109
    %v115 = vmul.f32 %v114, %v113
    %v116 = vmul.f32 0.5, %v115
    %v117 = vsub.f32 1.5, %v116
    %v118 = vmul.f32 %v113, %v117
    %vm119 = vweird.f32 %v109
    %vm120 = vweird.f32 %v113
    %vm121 = vmor %vm119, %vm120
    %v122 = vsel %vm121, %v113, %v118
    %v123 = vrsqrt.pop %v110
    %v124 = vmul.f32 %v123, %v110
    %v125 = vmul.f32 %v124, %v123
    %v126 = vmul.f32 0.5, %v125
    %v127 = vsub.f32 1.5, %v126
    %v128 = vmul.f32 %v123, %v127
    %vm129 = vweird.f32 %v110
    %vm130 = vweird.f32 %v123
    %vm131 = vmor %vm129, %vm130
    %v132 = vsel %vm131, %v123, %v128
    %v133 = vrsqrt.pop %v111
    %v134 = vmul.f32 %v133, %v111
    %v135 = vmul.f32 %v134, %v133
    %v136 = vmul.f32 0.5, %v135
    %v137 = vsub.f32 1.5, %v136
    %v138 = vmul.f32 %v133, %v137
    %vm139 = vweird.f32 %v111
    %vm140 = vweird.f32 %v133
    %vm141 = vmor %vm139, %vm140
    %v142 = vsel %vm141, %v133, %v138
    %v143 = vrsqrt.pop %v112
    %v144 = vmul.f32 %v143, %v112
    %v145 = vmul.f32 %v144, %v143
    %v146 = vmul.f32 0.5, %v145
    %v147 = vsub.f32 1.5, %v146
    %v148 = vmul.f32 %v143, %v147
    %vm149 = vweird.f32 %v112
    %vm150 = vweird.f32 %v143
    %vm151 = vmor %vm149, %vm150
    %v152 = vsel %vm151, %v143, %v148
    %v153 = vmul.f32 %v105, %v122
    %v154 = vmul.f32 %v106, %v132
    %v155 = vmul.f32 %v107, %v142
    %v156 = vmul.f32 %v108, %v152
    %v157 = vpack.c.bf16 %v154, %v153
    %v158 = vpack.c.bf16 %v156, %v155
    %v159 = vld [vmem:[#allocation2] sm:$0xff]
    %v160 = vld [vmem:[#allocation2 + $0x8] sm:$0xff]
    %v161 = vld [vmem:[#allocation2 + $0x10] sm:$0xff]
    %v162 = vld [vmem:[#allocation2 + $0x18] sm:$0xff]
    %v163 = vld [vmem:[#allocation2 + $0x20] sm:$0xff]
    %v164 = vld [vmem:[#allocation2 + $0x28] sm:$0xff]
    %v165 = vld [vmem:[#allocation2 + $0x30] sm:$0xff]
    %v166 = vld [vmem:[#allocation2 + $0x38] sm:$0xff]
    %v167 = vld [vmem:[#allocation2 + $0x40] sm:$0xff]
    %v168 = vld [vmem:[#allocation2 + $0x48] sm:$0xff]
    %v169 = vld [vmem:[#allocation2 + $0x50] sm:$0xff]
    %v170 = vld [vmem:[#allocation2 + $0x58] sm:$0xff]
    %v171 = vld [vmem:[#allocation2 + $0x60] sm:$0xff]
    %v172 = vld [vmem:[#allocation2 + $0x68] sm:$0xff]
    %v173 = vld [vmem:[#allocation2 + $0x70] sm:$0xff]
    %v174 = vld [vmem:[#allocation2 + $0x78] sm:$0xff]
    %v175 = vld [vmem:[#allocation3] sm:$0xff]
    %v176 = vld [vmem:[#allocation3 + $0x8] sm:$0xff]
    %v177 = vld [vmem:[#allocation3 + $0x10] sm:$0xff]
    %v178 = vld [vmem:[#allocation3 + $0x18] sm:$0xff]
    %v179 = vld [vmem:[#allocation3 + $0x20] sm:$0xff]
    %v180 = vld [vmem:[#allocation3 + $0x28] sm:$0xff]
    %v181 = vld [vmem:[#allocation3 + $0x30] sm:$0xff]
    %v182 = vld [vmem:[#allocation3 + $0x38] sm:$0xff]
    %v183 = vld [vmem:[#allocation3 + $0x40] sm:$0xff]
    %v184 = vld [vmem:[#allocation3 + $0x48] sm:$0xff]
    %v185 = vld [vmem:[#allocation3 + $0x50] sm:$0xff]
    %v186 = vld [vmem:[#allocation3 + $0x58] sm:$0xff]
    %v187 = vld [vmem:[#allocation3 + $0x60] sm:$0xff]
    %v188 = vld [vmem:[#allocation3 + $0x68] sm:$0xff]
    %v189 = vld [vmem:[#allocation3 + $0x70] sm:$0xff]
    %v190 = vld [vmem:[#allocation3 + $0x78] sm:$0xff]
    %v191 = vld [vmem:[#allocation3 + $0x80] sm:$0xff]
    %v192 = vld [vmem:[#allocation3 + $0x88] sm:$0xff]
    %v193 = vld [vmem:[#allocation3 + $0x90] sm:$0xff]
    %v194 = vld [vmem:[#allocation3 + $0x98] sm:$0xff]
    %v195 = vld [vmem:[#allocation3 + $0xa0] sm:$0xff]
    %v196 = vld [vmem:[#allocation3 + $0xa8] sm:$0xff]
    %v197 = vld [vmem:[#allocation3 + $0xb0] sm:$0xff]
    %v198 = vld [vmem:[#allocation3 + $0xb8] sm:$0xff]
    %v199 = vld [vmem:[#allocation3 + $0xc0] sm:$0xff]
    %v200 = vld [vmem:[#allocation3 + $0xc8] sm:$0xff]
    %v201 = vld [vmem:[#allocation3 + $0xd0] sm:$0xff]
    %v202 = vld [vmem:[#allocation3 + $0xd8] sm:$0xff]
    %v203 = vld [vmem:[#allocation3 + $0xe0] sm:$0xff]
    %v204 = vld [vmem:[#allocation3 + $0xe8] sm:$0xff]
    %v205 = vld [vmem:[#allocation3 + $0xf0] sm:$0xff]
    %v206 = vld [vmem:[#allocation3 + $0xf8] sm:$0xff]
    %v239 = vunpack.c.l.b16 %v175
    %v240 = vunpack.c.h.b16 %v175
    %v241 = vunpack.c.l.b16 %v176
    %v242 = vunpack.c.h.b16 %v176
    %v243 = vunpack.c.l.b16 %v177
    %v244 = vunpack.c.h.b16 %v177
    %v245 = vunpack.c.l.b16 %v178
    %v246 = vunpack.c.h.b16 %v178
    %v247 = vunpack.c.l.b16 %v179
    %v248 = vunpack.c.h.b16 %v179
    %v249 = vunpack.c.l.b16 %v180
    %v250 = vunpack.c.h.b16 %v180
    %v251 = vunpack.c.l.b16 %v181
    %v252 = vunpack.c.h.b16 %v181
    %v253 = vunpack.c.l.b16 %v182
    %v254 = vunpack.c.h.b16 %v182
    %v255 = vunpack.c.l.b16 %v183
    %v256 = vunpack.c.h.b16 %v183
    %v257 = vunpack.c.l.b16 %v184
    %v258 = vunpack.c.h.b16 %v184
    %v259 = vunpack.c.l.b16 %v185
    %v260 = vunpack.c.h.b16 %v185
    %v261 = vunpack.c.l.b16 %v186
    %v262 = vunpack.c.h.b16 %v186
    %v263 = vunpack.c.l.b16 %v187
    %v264 = vunpack.c.h.b16 %v187
    %v265 = vunpack.c.l.b16 %v188
    %v266 = vunpack.c.h.b16 %v188
    %v267 = vunpack.c.l.b16 %v189
    %v268 = vunpack.c.h.b16 %v189
    %v269 = vunpack.c.l.b16 %v190
    %v270 = vunpack.c.h.b16 %v190
    %v271 = vunpack.c.l.b16 %v191
    %v272 = vunpack.c.h.b16 %v191
    %v273 = vunpack.c.l.b16 %v192
    %v274 = vunpack.c.h.b16 %v192
    %v275 = vunpack.c.l.b16 %v193
    %v276 = vunpack.c.h.b16 %v193
    %v277 = vunpack.c.l.b16 %v194
    %v278 = vunpack.c.h.b16 %v194
    %v279 = vunpack.c.l.b16 %v195
    %v280 = vunpack.c.h.b16 %v195
    %v281 = vunpack.c.l.b16 %v196
    %v282 = vunpack.c.h.b16 %v196
    %v283 = vunpack.c.l.b16 %v197
    %v284 = vunpack.c.h.b16 %v197
    %v285 = vunpack.c.l.b16 %v198
    %v286 = vunpack.c.h.b16 %v198
    %v287 = vunpack.c.l.b16 %v199
    %v288 = vunpack.c.h.b16 %v199
    %v289 = vunpack.c.l.b16 %v200
    %v290 = vunpack.c.h.b16 %v200
    %v291 = vunpack.c.l.b16 %v201
    %v292 = vunpack.c.h.b16 %v201
    %v293 = vunpack.c.l.b16 %v202
    %v294 = vunpack.c.h.b16 %v202
    %v295 = vunpack.c.l.b16 %v203
    %v296 = vunpack.c.h.b16 %v203
    %v297 = vunpack.c.l.b16 %v204
    %v298 = vunpack.c.h.b16 %v204
    %v299 = vunpack.c.l.b16 %v205
    %v300 = vunpack.c.h.b16 %v205
    %v301 = vunpack.c.l.b16 %v206
    %v302 = vunpack.c.h.b16 %v206
    %v303 = vpack.c.b16 %v243, %v239
    %v304 = vpack.c.b16 %v244, %v240
    %v305 = vpack.c.b16 %v245, %v241
    %v306 = vpack.c.b16 %v246, %v242
    %v307 = vpack.c.b16 %v251, %v247
    %v308 = vpack.c.b16 %v252, %v248
    %v309 = vpack.c.b16 %v253, %v249
    %v310 = vpack.c.b16 %v254, %v250
    %v311 = vpack.c.b16 %v259, %v255
    %v312 = vpack.c.b16 %v260, %v256
    %v313 = vpack.c.b16 %v261, %v257
    %v314 = vpack.c.b16 %v262, %v258
    %v315 = vpack.c.b16 %v267, %v263
    %v316 = vpack.c.b16 %v268, %v264
    %v317 = vpack.c.b16 %v269, %v265
    %v318 = vpack.c.b16 %v270, %v266
    %v319 = vpack.c.b16 %v275, %v271
    %v320 = vpack.c.b16 %v276, %v272
    %v321 = vpack.c.b16 %v277, %v273
    %v322 = vpack.c.b16 %v278, %v274
    %v323 = vpack.c.b16 %v283, %v279
    %v324 = vpack.c.b16 %v284, %v280
    %v325 = vpack.c.b16 %v285, %v281
    %v326 = vpack.c.b16 %v286, %v282
    %v327 = vpack.c.b16 %v291, %v287
    %v328 = vpack.c.b16 %v292, %v288
    %v329 = vpack.c.b16 %v293, %v289
    %v330 = vpack.c.b16 %v294, %v290
    %v331 = vpack.c.b16 %v299, %v295
    %v332 = vpack.c.b16 %v300, %v296
    %v333 = vpack.c.b16 %v301, %v297
    %v334 = vpack.c.b16 %v302, %v298
    %367 = vmatpush.bf16.msra.mxu0 %v331
    %368 = vmatpush.bf16.msra.mxu0 %v327
    %369 = vmatpush.bf16.msra.mxu0 %v323
    %370 = vmatpush.bf16.msra.mxu0 %v319
    %371 = vmatpush.bf16.msra.mxu0 %v315
    %372 = vmatpush.bf16.msra.mxu0 %v311
    %373 = vmatpush.bf16.msra.mxu0 %v307
    %374 = vmatpush.bf16.msra.mxu0 %v303
    %375 = vmatmul.bf16.gmra.mxu0 %v157
    %v376 = vpop.f32.mrf.mxu0
    %v377 = vadd.f32 0.0, %v376
    %v378 = vpop.f32.mrf.mxu0
    %v379 = vadd.f32 0.0, %v378
    %380 = vmatmul.bf16.gmra.mxu0 %v158
    %v381 = vpop.f32.mrf.mxu0
    %v382 = vadd.f32 0.0, %v381
    %v383 = vpop.f32.mrf.mxu0
    %v384 = vadd.f32 0.0, %v383
    %385 = vdwg.mxu0
    %386 = vmatpush.bf16.msra.mxu0 %v332
    %387 = vmatpush.bf16.msra.mxu0 %v328
    %388 = vmatpush.bf16.msra.mxu0 %v324
    %389 = vmatpush.bf16.msra.mxu0 %v320
    %390 = vmatpush.bf16.msra.mxu0 %v316
    %391 = vmatpush.bf16.msra.mxu0 %v312
    %392 = vmatpush.bf16.msra.mxu0 %v308
    %393 = vmatpush.bf16.msra.mxu0 %v304
    %394 = vmatmul.bf16.gmra.mxu0 %v157
    %v395 = vpop.f32.mrf.mxu0
    %v396 = vadd.f32 0.0, %v395
    %v397 = vpop.f32.mrf.mxu0
    %v398 = vadd.f32 0.0, %v397
    %399 = vmatmul.bf16.gmra.mxu0 %v158
    %v400 = vpop.f32.mrf.mxu0
    %v401 = vadd.f32 0.0, %v400
    %v402 = vpop.f32.mrf.mxu0
    %v403 = vadd.f32 0.0, %v402
    %404 = vdwg.mxu0
    %405 = vmatpush.bf16.msra.mxu0 %v333
    %406 = vmatpush.bf16.msra.mxu0 %v329
    %407 = vmatpush.bf16.msra.mxu0 %v325
    %408 = vmatpush.bf16.msra.mxu0 %v321
    %409 = vmatpush.bf16.msra.mxu0 %v317
    %410 = vmatpush.bf16.msra.mxu0 %v313
    %411 = vmatpush.bf16.msra.mxu0 %v309
    %412 = vmatpush.bf16.msra.mxu0 %v305
    %413 = vmatmul.bf16.gmra.mxu0 %v157
    %v414 = vpop.f32.mrf.mxu0
    %v415 = vadd.f32 0.0, %v414
    %v416 = vpop.f32.mrf.mxu0
    %v417 = vadd.f32 0.0, %v416
    %418 = vmatmul.bf16.gmra.mxu0 %v158
    %v419 = vpop.f32.mrf.mxu0
    %v420 = vadd.f32 0.0, %v419
    %v421 = vpop.f32.mrf.mxu0
    %v422 = vadd.f32 0.0, %v421
    %423 = vdwg.mxu0
    %424 = vmatpush.bf16.msra.mxu0 %v334
    %425 = vmatpush.bf16.msra.mxu0 %v330
    %426 = vmatpush.bf16.msra.mxu0 %v326
    %427 = vmatpush.bf16.msra.mxu0 %v322
    %428 = vmatpush.bf16.msra.mxu0 %v318
    %429 = vmatpush.bf16.msra.mxu0 %v314
    %430 = vmatpush.bf16.msra.mxu0 %v310
    %431 = vmatpush.bf16.msra.mxu0 %v306
    %432 = vmatmul.bf16.gmra.mxu0 %v157
    %v433 = vpop.f32.mrf.mxu0
    %v434 = vadd.f32 0.0, %v433
    %v435 = vpop.f32.mrf.mxu0
    %v436 = vadd.f32 0.0, %v435
    %437 = vmatmul.bf16.gmra.mxu0 %v158
    %v438 = vpop.f32.mrf.mxu0
    %v439 = vadd.f32 0.0, %v438
    %v440 = vpop.f32.mrf.mxu0
    %v441 = vadd.f32 0.0, %v440
    %442 = vdwg.mxu0
    %v443 = vadd.f32 %v159, %v377
    %v444 = vadd.f32 %v160, %v396
    %v445 = vadd.f32 %v161, %v415
    %v446 = vadd.f32 %v162, %v434
    %v447 = vadd.f32 %v163, %v379
    %v448 = vadd.f32 %v164, %v398
    %v449 = vadd.f32 %v165, %v417
    %v450 = vadd.f32 %v166, %v436
    %v451 = vadd.f32 %v167, %v382
    %v452 = vadd.f32 %v168, %v401
    %v453 = vadd.f32 %v169, %v420
    %v454 = vadd.f32 %v170, %v439
    %v455 = vadd.f32 %v171, %v384
    %v456 = vadd.f32 %v172, %v403
    %v457 = vadd.f32 %v173, %v422
    %v458 = vadd.f32 %v174, %v441
    %459 = vst [vmem:[#allocation2] sm:$0xff] %v443
    %460 = vst [vmem:[#allocation2 + $0x8] sm:$0xff] %v444
    %461 = vst [vmem:[#allocation2 + $0x10] sm:$0xff] %v445
    %462 = vst [vmem:[#allocation2 + $0x18] sm:$0xff] %v446
    %463 = vst [vmem:[#allocation2 + $0x20] sm:$0xff] %v447
    %464 = vst [vmem:[#allocation2 + $0x28] sm:$0xff] %v448
    %465 = vst [vmem:[#allocation2 + $0x30] sm:$0xff] %v449
    %466 = vst [vmem:[#allocation2 + $0x38] sm:$0xff] %v450
    %467 = vst [vmem:[#allocation2 + $0x40] sm:$0xff] %v451
    %468 = vst [vmem:[#allocation2 + $0x48] sm:$0xff] %v452
    %469 = vst [vmem:[#allocation2 + $0x50] sm:$0xff] %v453
    %470 = vst [vmem:[#allocation2 + $0x58] sm:$0xff] %v454
    %471 = vst [vmem:[#allocation2 + $0x60] sm:$0xff] %v455
    %472 = vst [vmem:[#allocation2 + $0x68] sm:$0xff] %v456
    %473 = vst [vmem:[#allocation2 + $0x70] sm:$0xff] %v457
    %474 = vst [vmem:[#allocation2 + $0x78] sm:$0xff] %v458
    // Predicated region
    $region22: #{decoder_forward.14} parent=1 // pred_check
      %p475 = pneg %p30
    $region23: #{decoder_forward.14} parent=1 // pred_check_branch
      %477 = sbr.rel (%p475) target = $region25
    $region24: #{decoder_forward.14} parent=1 // pred_region
      %v478 = vld [vmem:[#allocation2] sm:$0xff]
      %v479 = vld [vmem:[#allocation2 + $0x8] sm:$0xff]
      %v480 = vld [vmem:[#allocation2 + $0x10] sm:$0xff]
      %v481 = vld [vmem:[#allocation2 + $0x18] sm:$0xff]
      %v482 = vld [vmem:[#allocation2 + $0x20] sm:$0xff]
      %v483 = vld [vmem:[#allocation2 + $0x28] sm:$0xff]
      %v484 = vld [vmem:[#allocation2 + $0x30] sm:$0xff]
      %v485 = vld [vmem:[#allocation2 + $0x38] sm:$0xff]
      %v486 = vld [vmem:[#allocation2 + $0x40] sm:$0xff]
      %v487 = vld [vmem:[#allocation2 + $0x48] sm:$0xff]
      %v488 = vld [vmem:[#allocation2 + $0x50] sm:$0xff]
      %v489 = vld [vmem:[#allocation2 + $0x58] sm:$0xff]
      %v490 = vld [vmem:[#allocation2 + $0x60] sm:$0xff]
      %v491 = vld [vmem:[#allocation2 + $0x68] sm:$0xff]
      %v492 = vld [vmem:[#allocation2 + $0x70] sm:$0xff]
      %v493 = vld [vmem:[#allocation2 + $0x78] sm:$0xff]
      %v494 = vld [vmem:[%s2] sm:$0xf]
      %v496 = vperm.slane %v494, 0
      %v497 = vperm.slane %v494, 1
      %v498 = vperm.slane %v494, 2
      %v499 = vperm.slane %v494, 3
      %v504 = vadd.f32 %v478, %v496
      %v505 = vadd.f32 %v479, %v497
      %v506 = vadd.f32 %v480, %v498
      %v507 = vadd.f32 %v481, %v499
      %v508 = vadd.f32 %v482, %v496
      %v509 = vadd.f32 %v483, %v497
      %v510 = vadd.f32 %v484, %v498
      %v511 = vadd.f32 %v485, %v499
      %v512 = vadd.f32 %v486, %v496
      %v513 = vadd.f32 %v487, %v497
      %v514 = vadd.f32 %v488, %v498
      %v515 = vadd.f32 %v489, %v499
      %v516 = vadd.f32 %v490, %v496
      %v517 = vadd.f32 %v491, %v497
      %v518 = vadd.f32 %v492, %v498
      %v519 = vadd.f32 %v493, %v499
      %v520 = vmul.f32 %v504, 0.5
      %v521 = vmul.f32 %v505, 0.5
      %v522 = vmul.f32 %v506, 0.5
      %v523 = vmul.f32 %v507, 0.5
      %v524 = vmul.f32 %v508, 0.5
      %v525 = vmul.f32 %v509, 0.5
      %v526 = vmul.f32 %v510, 0.5
      %v527 = vmul.f32 %v511, 0.5
      %v528 = vmul.f32 %v512, 0.5
      %v529 = vmul.f32 %v513, 0.5
      %v530 = vmul.f32 %v514, 0.5
      %v531 = vmul.f32 %v515, 0.5
      %v532 = vmul.f32 %v516, 0.5
      %v533 = vmul.f32 %v517, 0.5
      %v534 = vmul.f32 %v518, 0.5
      %v535 = vmul.f32 %v519, 0.5
      %v536 = vmul.f32 %v504, 0.044715
      %v537 = vmul.f32 %v505, 0.044715
      %v538 = vmul.f32 %v506, 0.044715
      %v539 = vmul.f32 %v507, 0.044715
      %v540 = vmul.f32 %v508, 0.044715
      %v541 = vmul.f32 %v509, 0.044715
      %v542 = vmul.f32 %v510, 0.044715
      %v543 = vmul.f32 %v511, 0.044715
      %v544 = vmul.f32 %v512, 0.044715
      %v545 = vmul.f32 %v513, 0.044715
      %v546 = vmul.f32 %v514, 0.044715
      %v547 = vmul.f32 %v515, 0.044715
      %v548 = vmul.f32 %v516, 0.044715
      %v549 = vmul.f32 %v517, 0.044715
      %v550 = vmul.f32 %v518, 0.044715
      %v551 = vmul.f32 %v519, 0.044715
      %v552 = vmul.f32 %v536, %v504
      %v553 = vmul.f32 %v537, %v505
      %v554 = vmul.f32 %v538, %v506
      %v555 = vmul.f32 %v539, %v507
      %v556 = vmul.f32 %v540, %v508
      %v557 = vmul.f32 %v541, %v509
      %v558 = vmul.f32 %v542, %v510
      %v559 = vmul.f32 %v543, %v511
      %v560 = vmul.f32 %v544, %v512
      %v561 = vmul.f32 %v545, %v513
      %v562 = vmul.f32 %v546, %v514
      %v563 = vmul.f32 %v547, %v515
      %v564 = vmul.f32 %v548, %v516
      %v565 = vmul.f32 %v549, %v517
      %v566 = vmul.f32 %v550, %v518
      %v567 = vmul.f32 %v551, %v519
      %v568 = vmul.f32 %v552, %v504
      %v569 = vmul.f32 %v553, %v505
      %v570 = vmul.f32 %v554, %v506
      %v571 = vmul.f32 %v555, %v507
      %v572 = vmul.f32 %v556, %v508
      %v573 = vmul.f32 %v557, %v509
      %v574 = vmul.f32 %v558, %v510
      %v575 = vmul.f32 %v559, %v511
      %v576 = vmul.f32 %v560, %v512
      %v577 = vmul.f32 %v561, %v513
      %v578 = vmul.f32 %v562, %v514
      %v579 = vmul.f32 %v563, %v515
      %v580 = vmul.f32 %v564, %v516
      %v581 = vmul.f32 %v565, %v517
      %v582 = vmul.f32 %v566, %v518
      %v583 = vmul.f32 %v567, %v519
      %v584 = vadd.f32 %v504, %v568
      %v585 = vadd.f32 %v505, %v569
      %v586 = vadd.f32 %v506, %v570
      %v587 = vadd.f32 %v507, %v571
      %v588 = vadd.f32 %v508, %v572
      %v589 = vadd.f32 %v509, %v573
      %v590 = vadd.f32 %v510, %v574
      %v591 = vadd.f32 %v511, %v575
      %v592 = vadd.f32 %v512, %v576
      %v593 = vadd.f32 %v513, %v577
      %v594 = vadd.f32 %v514, %v578
      %v595 = vadd.f32 %v515, %v579
      %v596 = vadd.f32 %v516, %v580
      %v597 = vadd.f32 %v517, %v581
      %v598 = vadd.f32 %v518, %v582
      %v599 = vadd.f32 %v519, %v583
      %v600 = vmul.f32 %v584, 0.7978846
      %v601 = vmul.f32 %v585, 0.7978846
      %v602 = vmul.f32 %v586, 0.7978846
      %v603 = vmul.f32 %v587, 0.7978846
      %v604 = vmul.f32 %v588, 0.7978846
      %v605 = vmul.f32 %v589, 0.7978846
      %v606 = vmul.f32 %v590, 0.7978846
      %v607 = vmul.f32 %v591, 0.7978846
      %v608 = vmul.f32 %v592, 0.7978846
      %v609 = vmul.f32 %v593, 0.7978846
      %v610 = vmul.f32 %v594, 0.7978846
      %v611 = vmul.f32 %v595, 0.7978846
      %v612 = vmul.f32 %v596, 0.7978846
      %v613 = vmul.f32 %v597, 0.7978846
      %v614 = vmul.f32 %v598, 0.7978846
      %v615 = vmul.f32 %v599, 0.7978846
      %v616 = vtanh.pop %v600
      %v617 = vtanh.pop %v601
      %v618 = vtanh.pop %v602
      %v619 = vtanh.pop %v603
      %v620 = vtanh.pop %v604
      %v621 = vtanh.pop %v605
      %v622 = vtanh.pop %v606
      %v623 = vtanh.pop %v607
      %v624 = vtanh.pop %v608
      %v625 = vtanh.pop %v609
      %v626 = vtanh.pop %v610
      %v627 = vtanh.pop %v611
      %v628 = vtanh.pop %v612
      %v629 = vtanh.pop %v613
      %v630 = vtanh.pop %v614
      %v631 = vtanh.pop %v615
      %v632 = vadd.f32 %v616, 1.0
      %v633 = vadd.f32 %v617, 1.0
      %v634 = vadd.f32 %v618, 1.0
      %v635 = vadd.f32 %v619, 1.0
      %v636 = vadd.f32 %v620, 1.0
      %v637 = vadd.f32 %v621, 1.0
      %v638 = vadd.f32 %v622, 1.0
      %v639 = vadd.f32 %v623, 1.0
      %v640 = vadd.f32 %v624, 1.0
      %v641 = vadd.f32 %v625, 1.0
      %v642 = vadd.f32 %v626, 1.0
      %v643 = vadd.f32 %v627, 1.0
      %v644 = vadd.f32 %v628, 1.0
      %v645 = vadd.f32 %v629, 1.0
      %v646 = vadd.f32 %v630, 1.0
      %v647 = vadd.f32 %v631, 1.0
      %v648 = vmul.f32 %v520, %v632
      %v649 = vmul.f32 %v521, %v633
      %v650 = vmul.f32 %v522, %v634
      %v651 = vmul.f32 %v523, %v635
      %v652 = vmul.f32 %v524, %v636
      %v653 = vmul.f32 %v525, %v637
      %v654 = vmul.f32 %v526, %v638
      %v655 = vmul.f32 %v527, %v639
      %v656 = vmul.f32 %v528, %v640
      %v657 = vmul.f32 %v529, %v641
      %v658 = vmul.f32 %v530, %v642
      %v659 = vmul.f32 %v531, %v643
      %v660 = vmul.f32 %v532, %v644
      %v661 = vmul.f32 %v533, %v645
      %v662 = vmul.f32 %v534, %v646
      %v663 = vmul.f32 %v535, %v647
      %v664 = vpack.c.bf16 %v649, %v648
      %v665 = vpack.c.bf16 %v651, %v650
      %v666 = vpack.c.bf16 %v653, %v652
      %v667 = vpack.c.bf16 %v655, %v654
      %v668 = vpack.c.bf16 %v657, %v656
      %v669 = vpack.c.bf16 %v659, %v658
      %v670 = vpack.c.bf16 %v661, %v660
      %v671 = vpack.c.bf16 %v663, %v662
      %672 = vst [vmem:[%s3] sm:$0xff] %v664
      %673 = vst [vmem:[%s3 + $0x8] sm:$0xff] %v665
      %674 = vst [vmem:[%s3 + $0x10] sm:$0xff] %v666
      %675 = vst [vmem:[%s3 + $0x18] sm:$0xff] %v667
      %676 = vst [vmem:[%s3 + $0x20] sm:$0xff] %v668
      %677 = vst [vmem:[%s3 + $0x28] sm:$0xff] %v669
      %678 = vst [vmem:[%s3 + $0x30] sm:$0xff] %v670
      %679 = vst [vmem:[%s3 + $0x38] sm:$0xff] %v671
    $region25: #{decoder_forward.14} parent=1 // pred_fallthru
      _
    // Predicated region
    $region26: #{decoder_forward.14} parent=1 // pred_check
      _
    $region27: #{decoder_forward.14} parent=1 // pred_check_branch
      %681 = sbr.rel (0) target = $region29
    $region28: #{decoder_forward.14} parent=1 // pred_region
      _
    $region29: #{decoder_forward.14} parent=1 // pred_fallthru
      _
    // Predicated region
    $region30: #{decoder_forward.14} parent=1 // pred_check
      _
    $region31: #{decoder_forward.14} parent=1 // pred_check_branch
      %683 = sbr.rel (0) target = $region33
    $region32: #{decoder_forward.14} parent=1 // pred_region
      _
    $region33: #{decoder_forward.14} parent=1 // pred_fallthru
      _
    %684 = vsyncpa [#allocation4], 1

// kernel: decoder_forward.21
$region0: #{decoder_forward.21}
  #allocation0 [shape = 'u32[]', space=smem, size = 0x4, offset = 0x4, fixed_abs, tag = 'smem constant byte address 0x4 - core index']
  #allocation1 [shape = 'u32[72,128]{1,0:T(1,128)}', space=vmem, size = 0x9000, scoped, tag = 'internal scratch']
  #allocation2 [shape = 'f32[32,128]{1,0:T(8,128)}', space=vmem, size = 0x4000, scoped, tag = 'scratch operand']
  %s0 = inlined_call_operand.vmem [shape: bf16[32,128], index: 0, kind: input, shape index: {}]
  %s1 = inlined_call_operand.vmem [shape: bf16[128,128], index: 1, kind: input, shape index: {}]
  %s2 = inlined_call_operand.vmem [shape: f32[1,128], index: 2, kind: input, shape index: {}]
  %s3 = inlined_call_operand.vmem [shape: f32[32,128], index: 3, kind: output, shape index: {}]
  %s4 = sld [smem:[#allocation0]]
  $region30: #{decoder_forward.21} parent=0
    _
  %s6 = ssub.s32 1, %s4
  %s7 = scalar_select 0, %s6, %s4
  // Predicated region
  $region2: #{decoder_forward.21} parent=0 // pred_check
    _
  $region3: #{decoder_forward.21} parent=0 // pred_check_branch
    %9 = sbr.rel (0) target = $region5
  $region4: #{decoder_forward.21} parent=0 // pred_region
    _
  $region5: #{decoder_forward.21} parent=0 // pred_fallthru
    _
  // Predicated region
  $region6: #{decoder_forward.21} parent=0 // pred_check
    _
  $region7: #{decoder_forward.21} parent=0 // pred_check_branch
    %11 = sbr.rel (0) target = $region9
  $region8: #{decoder_forward.21} parent=0 // pred_region
    _
  $region9: #{decoder_forward.21} parent=0 // pred_fallthru
    _
  // Predicated region
  $region10: #{decoder_forward.21} parent=0 // pred_check
    _
  $region11: #{decoder_forward.21} parent=0 // pred_check_branch
    %13 = sbr.rel (0) target = $region13
  $region12: #{decoder_forward.21} parent=0 // pred_region
    _
  $region13: #{decoder_forward.21} parent=0 // pred_fallthru
    _
  %p14 = scmp.eq.s32.totalorder 0, 0
  // Predicated region
  $region14: #{decoder_forward.21} parent=0 // pred_check
    %p15 = pneg %p14
  $region15: #{decoder_forward.21} parent=0 // pred_check_branch
    %17 = sbr.rel (%p15) target = $region17
  $region16: #{decoder_forward.21} parent=0 // pred_region
    %18 = vst [vmem:[#allocation2] sm:$0xff] 0.0
    %19 = vst [vmem:[#allocation2 + $0x8] sm:$0xff] 0.0
    %20 = vst [vmem:[#allocation2 + $0x10] sm:$0xff] 0.0
    %21 = vst [vmem:[#allocation2 + $0x18] sm:$0xff] 0.0
  $region17: #{decoder_forward.21} parent=0 // pred_fallthru
    _
  %v22 = vld [vmem:[%s0] sm:$0xf]
  %v23 = vld [vmem:[%s0 + $0x4] sm:$0xf]
  %v24 = vld [vmem:[%s0 + $0x8] sm:$0xf]
  %v25 = vld [vmem:[%s0 + $0xc] sm:$0xf]
  %v26 = vld [vmem:[#allocation2] sm:$0xff]
  %v27 = vld [vmem:[#allocation2 + $0x8] sm:$0xff]
  %v28 = vld [vmem:[#allocation2 + $0x10] sm:$0xff]
  %v29 = vld [vmem:[#allocation2 + $0x18] sm:$0xff]
  %v30 = vld [vmem:[%s1] sm:$0xf]
  %v31 = vld [vmem:[%s1 + $0x4] sm:$0xf]
  %v32 = vld [vmem:[%s1 + $0x8] sm:$0xf]
  %v33 = vld [vmem:[%s1 + $0xc] sm:$0xf]
  %v34 = vld [vmem:[%s1 + $0x10] sm:$0xf]
  %v35 = vld [vmem:[%s1 + $0x14] sm:$0xf]
  %v36 = vld [vmem:[%s1 + $0x18] sm:$0xf]
  %v37 = vld [vmem:[%s1 + $0x1c] sm:$0xf]
  %v38 = vld [vmem:[%s1 + $0x20] sm:$0xf]
  %v39 = vld [vmem:[%s1 + $0x24] sm:$0xf]
  %v40 = vld [vmem:[%s1 + $0x28] sm:$0xf]
  %v41 = vld [vmem:[%s1 + $0x2c] sm:$0xf]
  %v42 = vld [vmem:[%s1 + $0x30] sm:$0xf]
  %v43 = vld [vmem:[%s1 + $0x34] sm:$0xf]
  %v44 = vld [vmem:[%s1 + $0x38] sm:$0xf]
  %v45 = vld [vmem:[%s1 + $0x3c] sm:$0xf]
  %v50 = vunpack.c.l.b16 %v22
  %v51 = vunpack.c.l.b16 %v23
  %v52 = vunpack.c.l.b16 %v24
  %v53 = vunpack.c.l.b16 %v25
  %v54 = vpack.c.b16 %v51, %v50
  %v55 = vpack.c.b16 %v53, %v52
  %v74 = vunpack.c.l.b16 %v30
  %v75 = vunpack.c.l.b16 %v31
  %v76 = vunpack.c.l.b16 %v32
  %v77 = vunpack.c.l.b16 %v33
  %v78 = vunpack.c.l.b16 %v34
  %v79 = vunpack.c.l.b16 %v35
  %v80 = vunpack.c.l.b16 %v36
  %v81 = vunpack.c.l.b16 %v37
  %v82 = vunpack.c.l.b16 %v38
  %v83 = vunpack.c.l.b16 %v39
  %v84 = vunpack.c.l.b16 %v40
  %v85 = vunpack.c.l.b16 %v41
  %v86 = vunpack.c.l.b16 %v42
  %v87 = vunpack.c.l.b16 %v43
  %v88 = vunpack.c.l.b16 %v44
  %v89 = vunpack.c.l.b16 %v45
  %v90 = vpack.c.b16 %v75, %v74
  %v91 = vpack.c.b16 %v77, %v76
  %v92 = vpack.c.b16 %v79, %v78
  %v93 = vpack.c.b16 %v81, %v80
  %v94 = vpack.c.b16 %v83, %v82
  %v95 = vpack.c.b16 %v85, %v84
  %v96 = vpack.c.b16 %v87, %v86
  %v97 = vpack.c.b16 %v89, %v88
  %106 = vmatpush.bf16.msra.mxu0 %v97
  %107 = vmatpush.bf16.msra.mxu0 %v96
  %108 = vmatpush.bf16.msra.mxu0 %v95
  %109 = vmatpush.bf16.msra.mxu0 %v94
  %110 = vmatpush.bf16.msra.mxu0 %v93
  %111 = vmatpush.bf16.msra.mxu0 %v92
  %112 = vmatpush.bf16.msra.mxu0 %v91
  %113 = vmatpush.bf16.msra.mxu0 %v90
  %114 = vmatmul.bf16.gmra.mxu0 %v54
  %v115 = vpop.f32.mrf.mxu0
  %v116 = vadd.f32 0.0, %v115
  %v117 = vpop.f32.mrf.mxu0
  %v118 = vadd.f32 0.0, %v117
  %119 = vmatmul.bf16.gmra.mxu0 %v55
  %v120 = vpop.f32.mrf.mxu0
  %v121 = vadd.f32 0.0, %v120
  %v122 = vpop.f32.mrf.mxu0
  %v123 = vadd.f32 0.0, %v122
  %124 = vdwg.mxu0
  %v125 = vadd.f32 %v26, %v116
  %v126 = vadd.f32 %v27, %v118
  %v127 = vadd.f32 %v28, %v121
  %v128 = vadd.f32 %v29, %v123
  %129 = vst [vmem:[#allocation2] sm:$0xff] %v125
  %130 = vst [vmem:[#allocation2 + $0x8] sm:$0xff] %v126
  %131 = vst [vmem:[#allocation2 + $0x10] sm:$0xff] %v127
  %132 = vst [vmem:[#allocation2 + $0x18] sm:$0xff] %v128
  // Predicated region
  $region18: #{decoder_forward.21} parent=0 // pred_check
    %p133 = pneg %p14
  $region19: #{decoder_forward.21} parent=0 // pred_check_branch
    %135 = sbr.rel (%p133) target = $region21
  $region20: #{decoder_forward.21} parent=0 // pred_region
    %v136 = vld [vmem:[#allocation2] sm:$0xff]
    %v137 = vld [vmem:[#allocation2 + $0x8] sm:$0xff]
    %v138 = vld [vmem:[#allocation2 + $0x10] sm:$0xff]
    %v139 = vld [vmem:[#allocation2 + $0x18] sm:$0xff]
    %v140 = vld [vmem:[%s2] sm:$0x1]
    %v142 = vperm.slane %v140, 0
    %v144 = vadd.f32 %v136, %v142
    %v145 = vadd.f32 %v137, %v142
    %v146 = vadd.f32 %v138, %v142
    %v147 = vadd.f32 %v139, %v142
    %148 = vst [vmem:[%s3] sm:$0xff] %v144
    %149 = vst [vmem:[%s3 + $0x8] sm:$0xff] %v145
    %150 = vst [vmem:[%s3 + $0x10] sm:$0xff] %v146
    %151 = vst [vmem:[%s3 + $0x18] sm:$0xff] %v147
  $region21: #{decoder_forward.21} parent=0 // pred_fallthru
    _
  // Predicated region
  $region22: #{decoder_forward.21} parent=0 // pred_check
    _
  $region23: #{decoder_forward.21} parent=0 // pred_check_branch
    %153 = sbr.rel (0) target = $region25
  $region24: #{decoder_forward.21} parent=0 // pred_region
    _
  $region25: #{decoder_forward.21} parent=0 // pred_fallthru
    _
  // Predicated region
  $region26: #{decoder_forward.21} parent=0 // pred_check
    _
  $region27: #{decoder_forward.21} parent=0 // pred_check_branch
    %155 = sbr.rel (0) target = $region29
  $region28: #{decoder_forward.21} parent=0 // pred_region
    _
  $region29: #{decoder_forward.21} parent=0 // pred_fallthru
    _

// kernel: decoder_forward.15
$region0: #{decoder_forward.15}
  #allocation0 [shape = 'u32[]', space=smem, size = 0x4, offset = 0x4, fixed_abs, tag = 'smem constant byte address 0x4 - core index']
  #allocation1 [shape = 'u32[72,128]{1,0:T(1,128)}', space=vmem, size = 0x9000, scoped, tag = 'internal scratch']
  #allocation2 [shape = 'f32[32,128]{1,0:T(8,128)}', space=vmem, size = 0x4000, scoped, tag = 'scratch operand']
  %s0 = inlined_call_operand.vmem [shape: bf16[32,512], index: 0, kind: input, shape index: {}]
  %s1 = inlined_call_operand.hbm [shape: bf16[512,128], index: 1, kind: input, shape index: {}]
  %s2 = inlined_call_operand.vmem [shape: f32[1,128], index: 2, kind: input, shape index: {}]
  %s3 = inlined_call_operand.vmem [shape: bf16[32,128], index: 3, kind: input, shape index: {}]
  %s4 = inlined_call_operand.vmem [shape: bf16[32,128], index: 4, kind: output, shape index: {}]
  %s5 = sld [smem:[#allocation0]]
  $region38: #{decoder_forward.15} parent=0
    _
  %s7 = ssub.s32 1, %s5
  %s8 = scalar_select 0, %s7, %s5
  $region1: #{decoder_forward.15} parent=0
    #allocation3 [shape = 'u8[131072]{0}', space=vmem, size = 0x20000, scoped, tag = 'input window, operand 1, single buffered']
    #allocation4 [shape = 's32[1]{0}', space=sflag, size = 0x4, scoped, tag = 'scoped memory for decoder_forward.15']
    %9 = vsyncpa [#allocation4], 0
    // Predicated region
    $region2: #{decoder_forward.15} parent=1 // pred_check
      _
    $region3: #{decoder_forward.15} parent=1 // pred_check_branch
      %11 = sbr.rel (0) target = $region5
    $region4: #{decoder_forward.15} parent=1 // pred_region
      _
    $region5: #{decoder_forward.15} parent=1 // pred_fallthru
      _
    // Predicated region
    $region6: #{decoder_forward.15} parent=1 // pred_check
      _
    $region7: #{decoder_forward.15} parent=1 // pred_check_branch
      %13 = sbr.rel (0) target = $region9
    $region8: #{decoder_forward.15} parent=1 // pred_region
      %15 = vsyncadd [#allocation4], 0
      %s16 = sshll.u32 %s1, 4
      %s17 = int_to_ptr.hbm [resolvable:$true] %s16
      %s18 = sshll.u32 [#allocation3], 4
      %s19 = int_to_ptr.vmem [resolvable:$true] %s18
      %24 = dma.hbm_to_vmem [thread:$0]  %s17, 4096, %s19, [#allocation4], 64, 64, 4
    $region9: #{decoder_forward.15} parent=1 // pred_fallthru
      _
    // Predicated region
    $region10: #{decoder_forward.15} parent=1 // pred_check
      _
    $region11: #{decoder_forward.15} parent=1 // pred_check_branch
      %26 = sbr.rel (0) target = $region13
    $region12: #{decoder_forward.15} parent=1 // pred_region
      _
    $region13: #{decoder_forward.15} parent=1 // pred_fallthru
      _
    // Predicated region
    $region14: #{decoder_forward.15} parent=1 // pred_check
      _
    $region15: #{decoder_forward.15} parent=1 // pred_check_branch
      %28 = sbr.rel (0) target = $region17
    $region16: #{decoder_forward.15} parent=1 // pred_region
      _
    $region17: #{decoder_forward.15} parent=1 // pred_fallthru
      _
    // Predicated region
    $region18: #{decoder_forward.15} parent=1 // pred_check
      _
    $region19: #{decoder_forward.15} parent=1 // pred_check_branch
      %30 = sbr.rel (0) target = $region21
    $region20: #{decoder_forward.15} parent=1 // pred_region
      %32 = dma.done [#allocation4], 4096
    $region21: #{decoder_forward.15} parent=1 // pred_fallthru
      _
    %p33 = scmp.eq.s32.totalorder 0, 0
    // Predicated region
    $region22: #{decoder_forward.15} parent=1 // pred_check
      %p34 = pneg %p33
    $region23: #{decoder_forward.15} parent=1 // pred_check_branch
      %36 = sbr.rel (%p34) target = $region25
    $region24: #{decoder_forward.15} parent=1 // pred_region
      %37 = vst [vmem:[#allocation2] sm:$0xff] 0.0
      %38 = vst [vmem:[#allocation2 + $0x8] sm:$0xff] 0.0
      %39 = vst [vmem:[#allocation2 + $0x10] sm:$0xff] 0.0
      %40 = vst [vmem:[#allocation2 + $0x18] sm:$0xff] 0.0
    $region25: #{decoder_forward.15} parent=1 // pred_fallthru
      _
    %v41 = vld [vmem:[%s0] sm:$0xff]
    %v42 = vld [vmem:[%s0 + $0x8] sm:$0xff]
    %v43 = vld [vmem:[%s0 + $0x10] sm:$0xff]
    %v44 = vld [vmem:[%s0 + $0x18] sm:$0xff]
    %v45 = vld [vmem:[%s0 + $0x20] sm:$0xff]
    %v46 = vld [vmem:[%s0 + $0x28] sm:$0xff]
    %v47 = vld [vmem:[%s0 + $0x30] sm:$0xff]
    %v48 = vld [vmem:[%s0 + $0x38] sm:$0xff]
    %v49 = vld [vmem:[#allocation2] sm:$0xff]
    %v50 = vld [vmem:[#allocation2 + $0x8] sm:$0xff]
    %v51 = vld [vmem:[#allocation2 + $0x10] sm:$0xff]
    %v52 = vld [vmem:[#allocation2 + $0x18] sm:$0xff]
    %v53 = vld [vmem:[#allocation3] sm:$0xf]
    %v54 = vld [vmem:[#allocation3 + $0x4] sm:$0xf]
    %v55 = vld [vmem:[#allocation3 + $0x8] sm:$0xf]
    %v56 = vld [vmem:[#allocation3 + $0xc] sm:$0xf]
    %v57 = vld [vmem:[#allocation3 + $0x10] sm:$0xf]
    %v58 = vld [vmem:[#allocation3 + $0x14] sm:$0xf]
    %v59 = vld [vmem:[#allocation3 + $0x18] sm:$0xf]
    %v60 = vld [vmem:[#allocation3 + $0x1c] sm:$0xf]
    %v61 = vld [vmem:[#allocation3 + $0x20] sm:$0xf]
    %v62 = vld [vmem:[#allocation3 + $0x24] sm:$0xf]
    %v63 = vld [vmem:[#allocation3 + $0x28] sm:$0xf]
    %v64 = vld [vmem:[#allocation3 + $0x2c] sm:$0xf]
    %v65 = vld [vmem:[#allocation3 + $0x30] sm:$0xf]
    %v66 = vld [vmem:[#allocation3 + $0x34] sm:$0xf]
    %v67 = vld [vmem:[#allocation3 + $0x38] sm:$0xf]
    %v68 = vld [vmem:[#allocation3 + $0x3c] sm:$0xf]
    %v69 = vld [vmem:[#allocation3 + $0x40] sm:$0xf]
    %v70 = vld [vmem:[#allocation3 + $0x44] sm:$0xf]
    %v71 = vld [vmem:[#allocation3 + $0x48] sm:$0xf]
    %v72 = vld [vmem:[#allocation3 + $0x4c] sm:$0xf]
    %v73 = vld [vmem:[#allocation3 + $0x50] sm:$0xf]
    %v74 = vld [vmem:[#allocation3 + $0x54] sm:$0xf]
    %v75 = vld [vmem:[#allocation3 + $0x58] sm:$0xf]
    %v76 = vld [vmem:[#allocation3 + $0x5c] sm:$0xf]
    %v77 = vld [vmem:[#allocation3 + $0x60] sm:$0xf]
    %v78 = vld [vmem:[#allocation3 + $0x64] sm:$0xf]
    %v79 = vld [vmem:[#allocation3 + $0x68] sm:$0xf]
    %v80 = vld [vmem:[#allocation3 + $0x6c] sm:$0xf]
    %v81 = vld [vmem:[#allocation3 + $0x70] sm:$0xf]
    %v82 = vld [vmem:[#allocation3 + $0x74] sm:$0xf]
    %v83 = vld [vmem:[#allocation3 + $0x78] sm:$0xf]
    %v84 = vld [vmem:[#allocation3 + $0x7c] sm:$0xf]
    %v85 = vld [vmem:[#allocation3 + $0x80] sm:$0xf]
    %v86 = vld [vmem:[#allocation3 + $0x84] sm:$0xf]
    %v87 = vld [vmem:[#allocation3 + $0x88] sm:$0xf]
    %v88 = vld [vmem:[#allocation3 + $0x8c] sm:$0xf]
    %v89 = vld [vmem:[#allocation3 + $0x90] sm:$0xf]
    %v90 = vld [vmem:[#allocation3 + $0x94] sm:$0xf]
    %v91 = vld [vmem:[#allocation3 + $0x98] sm:$0xf]
    %v92 = vld [vmem:[#allocation3 + $0x9c] sm:$0xf]
    %v93 = vld [vmem:[#allocation3 + $0xa0] sm:$0xf]
    %v94 = vld [vmem:[#allocation3 + $0xa4] sm:$0xf]
    %v95 = vld [vmem:[#allocation3 + $0xa8] sm:$0xf]
    %v96 = vld [vmem:[#allocation3 + $0xac] sm:$0xf]
    %v97 = vld [vmem:[#allocation3 + $0xb0] sm:$0xf]
    %v98 = vld [vmem:[#allocation3 + $0xb4] sm:$0xf]
    %v99 = vld [vmem:[#allocation3 + $0xb8] sm:$0xf]
    %v100 = vld [vmem:[#allocation3 + $0xbc] sm:$0xf]
    %v101 = vld [vmem:[#allocation3 + $0xc0] sm:$0xf]
    %v102 = vld [vmem:[#allocation3 + $0xc4] sm:$0xf]
    %v103 = vld [vmem:[#allocation3 + $0xc8] sm:$0xf]
    %v104 = vld [vmem:[#allocation3 + $0xcc] sm:$0xf]
    %v105 = vld [vmem:[#allocation3 + $0xd0] sm:$0xf]
    %v106 = vld [vmem:[#allocation3 + $0xd4] sm:$0xf]
    %v107 = vld [vmem:[#allocation3 + $0xd8] sm:$0xf]
    %v108 = vld [vmem:[#allocation3 + $0xdc] sm:$0xf]
    %v109 = vld [vmem:[#allocation3 + $0xe0] sm:$0xf]
    %v110 = vld [vmem:[#allocation3 + $0xe4] sm:$0xf]
    %v111 = vld [vmem:[#allocation3 + $0xe8] sm:$0xf]
    %v112 = vld [vmem:[#allocation3 + $0xec] sm:$0xf]
    %v113 = vld [vmem:[#allocation3 + $0xf0] sm:$0xf]
    %v114 = vld [vmem:[#allocation3 + $0xf4] sm:$0xf]
    %v115 = vld [vmem:[#allocation3 + $0xf8] sm:$0xf]
    %v116 = vld [vmem:[#allocation3 + $0xfc] sm:$0xf]
    %v125 = vunpack.c.l.b16 %v41
    %v126 = vunpack.c.h.b16 %v41
    %v127 = vunpack.c.l.b16 %v42
    %v128 = vunpack.c.h.b16 %v42
    %v129 = vunpack.c.l.b16 %v43
    %v130 = vunpack.c.h.b16 %v43
    %v131 = vunpack.c.l.b16 %v44
    %v132 = vunpack.c.h.b16 %v44
    %v133 = vunpack.c.l.b16 %v45
    %v134 = vunpack.c.h.b16 %v45
    %v135 = vunpack.c.l.b16 %v46
    %v136 = vunpack.c.h.b16 %v46
    %v137 = vunpack.c.l.b16 %v47
    %v138 = vunpack.c.h.b16 %v47
    %v139 = vunpack.c.l.b16 %v48
    %v140 = vunpack.c.h.b16 %v48
    %v141 = vpack.c.b16 %v129, %v125
    %v142 = vpack.c.b16 %v130, %v126
    %v143 = vpack.c.b16 %v131, %v127
    %v144 = vpack.c.b16 %v132, %v128
    %v145 = vpack.c.b16 %v137, %v133
    %v146 = vpack.c.b16 %v138, %v134
    %v147 = vpack.c.b16 %v139, %v135
    %v148 = vpack.c.b16 %v140, %v136
    %v221 = vunpack.c.l.b16 %v53
    %v222 = vunpack.c.l.b16 %v54
    %v223 = vunpack.c.l.b16 %v55
    %v224 = vunpack.c.l.b16 %v56
    %v225 = vunpack.c.l.b16 %v57
    %v226 = vunpack.c.l.b16 %v58
    %v227 = vunpack.c.l.b16 %v59
    %v228 = vunpack.c.l.b16 %v60
    %v229 = vunpack.c.l.b16 %v61
    %v230 = vunpack.c.l.b16 %v62
    %v231 = vunpack.c.l.b16 %v63
    %v232 = vunpack.c.l.b16 %v64
    %v233 = vunpack.c.l.b16 %v65
    %v234 = vunpack.c.l.b16 %v66
    %v235 = vunpack.c.l.b16 %v67
    %v236 = vunpack.c.l.b16 %v68
    %v237 = vunpack.c.l.b16 %v69
    %v238 = vunpack.c.l.b16 %v70
    %v239 = vunpack.c.l.b16 %v71
    %v240 = vunpack.c.l.b16 %v72
    %v241 = vunpack.c.l.b16 %v73
    %v242 = vunpack.c.l.b16 %v74
    %v243 = vunpack.c.l.b16 %v75
    %v244 = vunpack.c.l.b16 %v76
    %v245 = vunpack.c.l.b16 %v77
    %v246 = vunpack.c.l.b16 %v78
    %v247 = vunpack.c.l.b16 %v79
    %v248 = vunpack.c.l.b16 %v80
    %v249 = vunpack.c.l.b16 %v81
    %v250 = vunpack.c.l.b16 %v82
    %v251 = vunpack.c.l.b16 %v83
    %v252 = vunpack.c.l.b16 %v84
    %v253 = vunpack.c.l.b16 %v85
    %v254 = vunpack.c.l.b16 %v86
    %v255 = vunpack.c.l.b16 %v87
    %v256 = vunpack.c.l.b16 %v88
    %v257 = vunpack.c.l.b16 %v89
    %v258 = vunpack.c.l.b16 %v90
    %v259 = vunpack.c.l.b16 %v91
    %v260 = vunpack.c.l.b16 %v92
    %v261 = vunpack.c.l.b16 %v93
    %v262 = vunpack.c.l.b16 %v94
    %v263 = vunpack.c.l.b16 %v95
    %v264 = vunpack.c.l.b16 %v96
    %v265 = vunpack.c.l.b16 %v97
    %v266 = vunpack.c.l.b16 %v98
    %v267 = vunpack.c.l.b16 %v99
    %v268 = vunpack.c.l.b16 %v100
    %v269 = vunpack.c.l.b16 %v101
    %v270 = vunpack.c.l.b16 %v102
    %v271 = vunpack.c.l.b16 %v103
    %v272 = vunpack.c.l.b16 %v104
    %v273 = vunpack.c.l.b16 %v105
    %v274 = vunpack.c.l.b16 %v106
    %v275 = vunpack.c.l.b16 %v107
    %v276 = vunpack.c.l.b16 %v108
    %v277 = vunpack.c.l.b16 %v109
    %v278 = vunpack.c.l.b16 %v110
    %v279 = vunpack.c.l.b16 %v111
    %v280 = vunpack.c.l.b16 %v112
    %v281 = vunpack.c.l.b16 %v113
    %v282 = vunpack.c.l.b16 %v114
    %v283 = vunpack.c.l.b16 %v115
    %v284 = vunpack.c.l.b16 %v116
    %v285 = vpack.c.b16 %v222, %v221
    %v286 = vpack.c.b16 %v224, %v223
    %v287 = vpack.c.b16 %v226, %v225
    %v288 = vpack.c.b16 %v228, %v227
    %v289 = vpack.c.b16 %v230, %v229
    %v290 = vpack.c.b16 %v232, %v231
    %v291 = vpack.c.b16 %v234, %v233
    %v292 = vpack.c.b16 %v236, %v235
    %v293 = vpack.c.b16 %v238, %v237
    %v294 = vpack.c.b16 %v240, %v239
    %v295 = vpack.c.b16 %v242, %v241
    %v296 = vpack.c.b16 %v244, %v243
    %v297 = vpack.c.b16 %v246, %v245
    %v298 = vpack.c.b16 %v248, %v247
    %v299 = vpack.c.b16 %v250, %v249
    %v300 = vpack.c.b16 %v252, %v251
    %v301 = vpack.c.b16 %v254, %v253
    %v302 = vpack.c.b16 %v256, %v255
    %v303 = vpack.c.b16 %v258, %v257
    %v304 = vpack.c.b16 %v260, %v259
    %v305 = vpack.c.b16 %v262, %v261
    %v306 = vpack.c.b16 %v264, %v263
    %v307 = vpack.c.b16 %v266, %v265
    %v308 = vpack.c.b16 %v268, %v267
    %v309 = vpack.c.b16 %v270, %v269
    %v310 = vpack.c.b16 %v272, %v271
    %v311 = vpack.c.b16 %v274, %v273
    %v312 = vpack.c.b16 %v276, %v275
    %v313 = vpack.c.b16 %v278, %v277
    %v314 = vpack.c.b16 %v280, %v279
    %v315 = vpack.c.b16 %v282, %v281
    %v316 = vpack.c.b16 %v284, %v283
    %349 = vmatpush.bf16.msra.mxu0 %v292
    %350 = vmatpush.bf16.msra.mxu0 %v291
    %351 = vmatpush.bf16.msra.mxu0 %v290
    %352 = vmatpush.bf16.msra.mxu0 %v289
    %353 = vmatpush.bf16.msra.mxu0 %v288
    %354 = vmatpush.bf16.msra.mxu0 %v287
    %355 = vmatpush.bf16.msra.mxu0 %v286
    %356 = vmatpush.bf16.msra.mxu0 %v285
    %357 = vmatmul.bf16.gmra.mxu0 %v141
    %v358 = vpop.f32.mrf.mxu0
    %v359 = vadd.f32 0.0, %v358
    %v360 = vpop.f32.mrf.mxu0
    %v361 = vadd.f32 0.0, %v360
    %362 = vmatmul.bf16.gmra.mxu0 %v145
    %v363 = vpop.f32.mrf.mxu0
    %v364 = vadd.f32 0.0, %v363
    %v365 = vpop.f32.mrf.mxu0
    %v366 = vadd.f32 0.0, %v365
    %367 = vdwg.mxu0
    %368 = vmatpush.bf16.msra.mxu0 %v300
    %369 = vmatpush.bf16.msra.mxu0 %v299
    %370 = vmatpush.bf16.msra.mxu0 %v298
    %371 = vmatpush.bf16.msra.mxu0 %v297
    %372 = vmatpush.bf16.msra.mxu0 %v296
    %373 = vmatpush.bf16.msra.mxu0 %v295
    %374 = vmatpush.bf16.msra.mxu0 %v294
    %375 = vmatpush.bf16.msra.mxu0 %v293
    %376 = vmatmul.bf16.gmra.mxu0 %v142
    %v377 = vpop.f32.mrf.mxu0
    %v378 = vadd.f32 %v359, %v377
    %v379 = vpop.f32.mrf.mxu0
    %v380 = vadd.f32 %v361, %v379
    %381 = vmatmul.bf16.gmra.mxu0 %v146
    %v382 = vpop.f32.mrf.mxu0
    %v383 = vadd.f32 %v364, %v382
    %v384 = vpop.f32.mrf.mxu0
    %v385 = vadd.f32 %v366, %v384
    %386 = vdwg.mxu0
    %387 = vmatpush.bf16.msra.mxu0 %v308
    %388 = vmatpush.bf16.msra.mxu0 %v307
    %389 = vmatpush.bf16.msra.mxu0 %v306
    %390 = vmatpush.bf16.msra.mxu0 %v305
    %391 = vmatpush.bf16.msra.mxu0 %v304
    %392 = vmatpush.bf16.msra.mxu0 %v303
    %393 = vmatpush.bf16.msra.mxu0 %v302
    %394 = vmatpush.bf16.msra.mxu0 %v301
    %395 = vmatmul.bf16.gmra.mxu0 %v143
    %v396 = vpop.f32.mrf.mxu0
    %v397 = vadd.f32 %v378, %v396
    %v398 = vpop.f32.mrf.mxu0
    %v399 = vadd.f32 %v380, %v398
    %400 = vmatmul.bf16.gmra.mxu0 %v147
    %v401 = vpop.f32.mrf.mxu0
    %v402 = vadd.f32 %v383, %v401
    %v403 = vpop.f32.mrf.mxu0
    %v404 = vadd.f32 %v385, %v403
    %405 = vdwg.mxu0
    %406 = vmatpush.bf16.msra.mxu0 %v316
    %407 = vmatpush.bf16.msra.mxu0 %v315
    %408 = vmatpush.bf16.msra.mxu0 %v314
    %409 = vmatpush.bf16.msra.mxu0 %v313
    %410 = vmatpush.bf16.msra.mxu0 %v312
    %411 = vmatpush.bf16.msra.mxu0 %v311
    %412 = vmatpush.bf16.msra.mxu0 %v310
    %413 = vmatpush.bf16.msra.mxu0 %v309
    %414 = vmatmul.bf16.gmra.mxu0 %v144
    %v415 = vpop.f32.mrf.mxu0
    %v416 = vadd.f32 %v397, %v415
    %v417 = vpop.f32.mrf.mxu0
    %v418 = vadd.f32 %v399, %v417
    %419 = vmatmul.bf16.gmra.mxu0 %v148
    %v420 = vpop.f32.mrf.mxu0
    %v421 = vadd.f32 %v402, %v420
    %v422 = vpop.f32.mrf.mxu0
    %v423 = vadd.f32 %v404, %v422
    %424 = vdwg.mxu0
    %v425 = vadd.f32 %v49, %v416
    %v426 = vadd.f32 %v50, %v418
    %v427 = vadd.f32 %v51, %v421
    %v428 = vadd.f32 %v52, %v423
    %429 = vst [vmem:[#allocation2] sm:$0xff] %v425
    %430 = vst [vmem:[#allocation2 + $0x8] sm:$0xff] %v426
    %431 = vst [vmem:[#allocation2 + $0x10] sm:$0xff] %v427
    %432 = vst [vmem:[#allocation2 + $0x18] sm:$0xff] %v428
    // Predicated region
    $region26: #{decoder_forward.15} parent=1 // pred_check
      %p433 = pneg %p33
    $region27: #{decoder_forward.15} parent=1 // pred_check_branch
      %435 = sbr.rel (%p433) target = $region29
    $region28: #{decoder_forward.15} parent=1 // pred_region
      %v436 = vld [vmem:[#allocation2] sm:$0xff]
      %v437 = vld [vmem:[#allocation2 + $0x8] sm:$0xff]
      %v438 = vld [vmem:[#allocation2 + $0x10] sm:$0xff]
      %v439 = vld [vmem:[#allocation2 + $0x18] sm:$0xff]
      %v440 = vld [vmem:[%s2] sm:$0x1]
      %v442 = vperm.slane %v440, 0
      %v444 = vadd.f32 %v436, %v442
      %v445 = vadd.f32 %v437, %v442
      %v446 = vadd.f32 %v438, %v442
      %v447 = vadd.f32 %v439, %v442
      %v448 = vld [vmem:[%s3] sm:$0xf]
      %v449 = vld [vmem:[%s3 + $0x4] sm:$0xf]
      %v450 = vld [vmem:[%s3 + $0x8] sm:$0xf]
      %v451 = vld [vmem:[%s3 + $0xc] sm:$0xf]
      %v452 = vunpack.c.l.bf16 %v448
      %v453 = vunpack.c.l.bf16 %v449
      %v454 = vunpack.c.l.bf16 %v450
      %v455 = vunpack.c.l.bf16 %v451
      %v456 = vadd.f32 %v444, %v452
      %v457 = vadd.f32 %v445, %v453
      %v458 = vadd.f32 %v446, %v454
      %v459 = vadd.f32 %v447, %v455
      %v460 = vpack.c.bf16 %v456, %v456
      %v461 = vpack.c.bf16 %v457, %v457
      %v462 = vpack.c.bf16 %v458, %v458
      %v463 = vpack.c.bf16 %v459, %v459
      %464 = vst [vmem:[%s4] sm:$0xf] %v460
      %465 = vst [vmem:[%s4 + $0x4] sm:$0xf] %v461
      %466 = vst [vmem:[%s4 + $0x8] sm:$0xf] %v462
      %467 = vst [vmem:[%s4 + $0xc] sm:$0xf] %v463
    $region29: #{decoder_forward.15} parent=1 // pred_fallthru
      _
    // Predicated region
    $region30: #{decoder_forward.15} parent=1 // pred_check
      _
    $region31: #{decoder_forward.15} parent=1 // pred_check_branch
      %469 = sbr.rel (0) target = $region33
    $region32: #{decoder_forward.15} parent=1 // pred_region
      _
    $region33: #{decoder_forward.15} parent=1 // pred_fallthru
      _
    // Predicated region
    $region34: #{decoder_forward.15} parent=1 // pred_check
      _
    $region35: #{decoder_forward.15} parent=1 // pred_check_branch
      %471 = sbr.rel (0) target = $region37
    $region36: #{decoder_forward.15} parent=1 // pred_region
      _
    $region37: #{decoder_forward.15} parent=1 // pred_fallthru
      _
    %472 = vsyncpa [#allocation4], 1

</llo_original>
